<compile_context>
chip_gen: v6e
topology: v6e:2x2x1
jax: 0.10.0
libtpu: 0.0.40
codegen_flags: <defaults>
</compile_context>

<pallas_src>
import functools

import jax
import jax.numpy as jnp
from jax.experimental import pallas as pl
from jax.experimental.pallas import tpu as pltpu


# ---------------------------------------------------------------------------
# Fused kernel: conv1+bn1+relu -> conv2(3x3)+bn2+relu -> conv3+bn3+res+relu
# ---------------------------------------------------------------------------
def _bottleneck_kernel(x_ref, w1_ref, w2_ref, w3_ref, bn12_ref, bn3_ref,
                       o_ref, y1p_ref, *, wp):
    """One (batch, row-tile) step of the fused bottleneck.

    x_ref   : (1, H, W, Cin)            bf16 -- full image, resident across r
    w1_ref  : (Cin, planes)             bf16
    w2_ref  : (3, 3, planes, planes)    bf16
    w3_ref  : (planes, Cout)            bf16
    bn12_ref: (4, planes)  f32 -- rows [s1, b1, s2, b2] (folded BN)
    bn3_ref : (2, Cout)    f32 -- rows [s3, b3]
    o_ref   : (1, TH, W, Cout)          bf16
    y1p_ref : ((TH+3)*wp, planes) bf16 scratch -- zero-padded conv1 output,
              flattened row-major with padded width `wp` (multiple of 8).
    """
    r = pl.program_id(1)
    nr = pl.num_programs(1)
    th = o_ref.shape[1]
    w = o_ref.shape[2]
    cin = x_ref.shape[3]
    planes = w1_ref.shape[1]
    row0 = pl.multiple_of(r * th, th)

    # Folded BN scale/bias, read once into locals (conv1 closure runs 3x).
    s1 = bn12_ref[0:1, :]
    b1 = bn12_ref[1:2, :]
    s2 = bn12_ref[2:3, :]
    b2 = bn12_ref[3:4, :]
    s3 = bn3_ref[0:1, :]
    b3 = bn3_ref[1:2, :]

    def conv1(x2d):  # (m, Cin) bf16 -> (m, planes) bf16 after bn1+relu
        y = jnp.dot(x2d, w1_ref[...], preferred_element_type=jnp.float32)
        return jnp.maximum(y * s1 + b1, 0.0).astype(y1p_ref.dtype)

    # ---- stage 0: establish the zero padding the 3x3 stencil reads ---------
    # No full memset: interiors are overwritten below.  Zero only the pad
    # columns -- one contiguous (wp-w, planes) slab per padded row covers the
    # right pad column, the alignment-junk columns and the next row's left pad
    # column -- plus row 0's left pad column.  Junk that stays uninitialized
    # only ever feeds accumulator rows that are never stored.
    zslab = jnp.zeros((wp - w, planes), y1p_ref.dtype)
    y1p_ref[0:1, :] = jnp.zeros((1, planes), y1p_ref.dtype)       # row 0, col 0
    for k in range(th + 2):
        s = k * wp + w + 1
        y1p_ref[s:s + (wp - w), :] = zslab

    # ---- stage 1: 1x1 conv + bn1 + relu into the padded bf16 scratch -------
    xm = x_ref[0, pl.ds(row0, th), :, :].reshape(th * w, cin)
    y1m = conv1(xm)                                   # (th*w, planes) bf16
    for hh in range(th):
        dst = (hh + 1) * wp + 1
        y1p_ref[dst:dst + w, :] = y1m[hh * w:(hh + 1) * w, :]

    # Top / bottom halo rows: recomputed from the neighbouring image rows, or
    # explicitly zeroed at the image boundary (the scratch persists across
    # grid steps, so boundary halo rows would otherwise hold stale data).
    @pl.when(r == 0)
    def _zero_top_halo():
        y1p_ref[1:1 + w, :] = jnp.zeros((w, planes), y1p_ref.dtype)

    @pl.when(r > 0)
    def _top_halo():
        xt = x_ref[0, pl.ds(row0 - 1, 1), :, :].reshape(w, cin)
        y1p_ref[1:1 + w, :] = conv1(xt)

    bot = (th + 1) * wp + 1

    @pl.when(r == nr - 1)
    def _zero_bottom_halo():
        y1p_ref[bot:bot + w, :] = jnp.zeros((w, planes), y1p_ref.dtype)

    @pl.when(r < nr - 1)
    def _bottom_halo():
        xb = x_ref[0, pl.ds(row0 + th, 1), :, :].reshape(w, cin)
        y1p_ref[bot:bot + w, :] = conv1(xb)

    # ---- stage 2: 3x3 conv (f32 accumulation over 9 taps) ------------------
    # Each tap (dh, dw) is a contiguous slice of the flattened padded scratch
    # at offset dh*wp + dw; padded columns contribute only to junk rows of acc
    # that stage 3 never touches.
    thwp = th * wp
    acc = jnp.zeros((thwp, planes), jnp.float32)
    for dh in range(3):
        for dw in range(3):
            off = dh * wp + dw
            acc = acc + jnp.dot(y1p_ref[off:off + thwp, :], w2_ref[dh, dw],
                                preferred_element_type=jnp.float32)

    # ---- stage 3: per-row bn2+relu -> conv3 -> bn3 + residual + relu -------
    # Row slices of acc start at hh*wp (a multiple of 8) -> aligned sublane
    # selection, no compaction relayout; the padded-column drop is fused into
    # the lane-dense (W, Cout) store; the residual row is re-read from x_ref
    # here instead of being kept live across stages 1-2.
    for hh in range(th):
        accr = acc[hh * wp:hh * wp + w, :]
        y2r = jnp.maximum(accr * s2 + b2, 0.0).astype(jnp.bfloat16)
        y3r = jnp.dot(y2r, w3_ref[...], preferred_element_type=jnp.float32)
        resid = x_ref[0, pl.ds(row0 + hh, 1), :, :].reshape(w, cin)
        outr = jnp.maximum(y3r * s3 + b3 + resid.astype(jnp.float32), 0.0)
        o_ref[0, hh, :, :] = outr.astype(o_ref.dtype)


# ---------------------------------------------------------------------------
# Wrapper
# ---------------------------------------------------------------------------
def bottleneck_forward(x, p, *, tile_h=8):
    """Fused Bottleneck forward. x: (N, H, W, inplanes) NHWC bf16."""
    n, h, w, cin = x.shape
    planes = p["w1"].shape[3]
    cout = p["w3"].shape[3]
    assert cout == cin, "downsample=None requires inplanes == planes*expansion"
    assert h % tile_h == 0, "H must be divisible by tile_h for this demo"

    # Padded conv2 width rounded to a sublane multiple so the flattened-scratch
    # taps and per-row slices stay aligned.  For narrow demo widths this wastes
    # ~wp/w extra conv2 rows; shrink toward w+2 only if profiling shows
    # MXU-bound (mainly a v5e concern).
    wp = ((w + 2 + 7) // 8) * 8

    w1 = p["w1"].reshape(cin, planes)      # 1x1 convs as channel matmuls
    w3 = p["w3"].reshape(planes, cout)
    bn12 = jnp.stack([p["s1"], p["b1"], p["s2"], p["b2"]], axis=0)  # (4,planes)
    bn3 = jnp.stack([p["s3"], p["b3"]], axis=0)                     # (2,cout)

    kernel = functools.partial(_bottleneck_kernel, wp=wp)
    return pl.pallas_call(
        kernel,
        out_shape=jax.ShapeDtypeStruct((n, h, w, cout), jnp.bfloat16),
        grid=(n, h // tile_h),
        in_specs=[
            # Full image resident per batch element (block index constant in r
            # -> fetched from HBM exactly once per image).  Fine at demo size;
            # see TODO(synk) about halo-row DMA before scaling on v7x.
            pl.BlockSpec((1, h, w, cin), lambda b, r: (b, 0, 0, 0)),
            pl.BlockSpec((cin, planes), lambda b, r: (0, 0)),
            pl.BlockSpec((3, 3, planes, planes), lambda b, r: (0, 0, 0, 0)),
            pl.BlockSpec((planes, cout), lambda b, r: (0, 0)),
            pl.BlockSpec((4, planes), lambda b, r: (0, 0)),
            pl.BlockSpec((2, cout), lambda b, r: (0, 0)),
        ],
        out_specs=pl.BlockSpec((1, tile_h, w, cout), lambda b, r: (b, r, 0, 0)),
        scratch_shapes=[pltpu.VMEM(((tile_h + 3) * wp, planes), jnp.bfloat16)],
        compiler_params=pltpu.CompilerParams(
            dimension_semantics=("parallel", "parallel"),
            # Live VMEM at demo size is well under 1 MiB; 32 MiB fits every
            # generation's scoped default (re-derive tile sizes per generation
            # before scaling to real image sizes).
            vmem_limit_bytes=32 * 1024 * 1024),
    )(x, w1, p["w2"], w3, bn12, bn3)


# ---------------------------------------------------------------------------
# Pure-JAX reference (same mixed precision: bf16 inputs, f32 accumulation,
# bf16 rounding of intermediate activations) -- correctness check only.
# ---------------------------------------------------------------------------
def bottleneck_ref(x, p):
    dn = ("NHWC", "HWIO", "NHWC")
    f32 = jnp.float32
    y = jax.lax.conv_general_dilated(x, p["w1"], (1, 1), "VALID",
                                     dimension_numbers=dn,
                                     preferred_element_type=f32)
    y = jnp.maximum(y * p["s1"] + p["b1"], 0.0).astype(jnp.bfloat16)
    y = jax.lax.conv_general_dilated(y, p["w2"], (1, 1), ((1, 1), (1, 1)),
                                     dimension_numbers=dn,
                                     preferred_element_type=f32)
    y = jnp.maximum(y * p["s2"] + p["b2"], 0.0).astype(jnp.bfloat16)
    y = jax.lax.conv_general_dilated(y, p["w3"], (1, 1), "VALID",
                                     dimension_numbers=dn,
                                     preferred_element_type=f32)
    y = y * p["s3"] + p["b3"] + x.astype(f32)
    return jnp.maximum(y, 0.0)


# ---------------------------------------------------------------------------
# Deterministic parameter construction (inference BN folded to scale/bias)
# ---------------------------------------------------------------------------
def _folded_bn(keys, c):
    kg, kb, km, kv = keys
    gamma = 1.0 + 0.1 * jax.random.normal(kg, (c,), jnp.float32)
    beta = 0.1 * jax.random.normal(kb, (c,), jnp.float32)
    mean = 0.1 * jax.random.normal(km, (c,), jnp.float32)
    var = jax.random.uniform(kv, (c,), jnp.float32, minval=0.5, maxval=1.5)
    scale = gamma / jnp.sqrt(var + 1e-5)
    bias = beta - mean * scale
    return scale, bias


def make_params(key, inplanes, planes, expansion=4):
    ks = jax.random.split(key, 15)
    bf = jnp.bfloat16
    w1 = (0.1 * jax.random.normal(ks[0], (1, 1, inplanes, planes),
                                  jnp.float32)).astype(bf)
    w2 = (0.1 * jax.random.normal(ks[1], (3, 3, planes, planes),
                                  jnp.float32)).astype(bf)
    w3 = (0.1 * jax.random.normal(ks[2], (1, 1, planes, planes * expansion),
                                  jnp.float32)).astype(bf)
    s1, b1 = _folded_bn(ks[3:7], planes)
    s2, b2 = _folded_bn(ks[7:11], planes)
    s3, b3 = _folded_bn(ks[11:15], planes * expansion)
    return {"w1": w1, "w2": w2, "w3": w3,
            "s1": s1, "b1": b1, "s2": s2, "b2": b2, "s3": s3, "b3": b3}


# ---------------------------------------------------------------------------
if __name__ == "__main__":
    key = jax.random.PRNGKey(0)
    k_x, k_p = jax.random.split(key)

    N, H, W = 2, 16, 16
    planes = 64                      # HRNet stage-1 Bottleneck uses planes=64
    inplanes = planes * 4            # expansion=4 -> identity residual

    x = jax.random.normal(k_x, (N, H, W, inplanes),
                          jnp.float32).astype(jnp.bfloat16)
    params = make_params(k_p, inplanes, planes)

    # tile_h=8 (two row tiles per image) exercises the halo-recompute and
    # boundary-zeroing paths; raise tile_h on v5e/v6e for real image heights.
    out = jax.block_until_ready(bottleneck_forward(x, params, tile_h=8))
    ref = jax.block_until_ready(bottleneck_ref(x, params))

    assert out.shape == (N, H, W, inplanes)
    assert out.dtype == jnp.bfloat16
    err = float(jnp.max(jnp.abs(out.astype(jnp.float32) - ref)))
    # 2e-2 tolerance absorbs the final bf16 rounding of the kernel output.
    assert jnp.allclose(out.astype(jnp.float32), ref, atol=2e-2, rtol=2e-2), err

    print("KERNEL_OK")
</pallas_src>

<mosaic_0001>
module attributes {stable_mosaic.version = 11 : i64} {
  func.func @_bottleneck_kernel(%arg0: i32, %arg1: i32, %arg2: memref<1x16x16x256xbf16, #tpu.memory_space<vmem>>, %arg3: memref<256x64xbf16, #tpu.memory_space<vmem>>, %arg4: memref<3x3x64x64xbf16, #tpu.memory_space<vmem>>, %arg5: memref<64x256xbf16, #tpu.memory_space<vmem>>, %arg6: memref<4x64xf32, #tpu.memory_space<vmem>>, %arg7: memref<2x256xf32, #tpu.memory_space<vmem>>, %arg8: memref<1x8x16x256xbf16, #tpu.memory_space<vmem>>, %arg9: memref<264x64xbf16, #tpu.memory_space<vmem>>) attributes {dimension_semantics = [#tpu.dimension_semantics<parallel>, #tpu.dimension_semantics<parallel>], iteration_bounds = array<i64: 2, 2>, scalar_prefetch = 0 : i64, scratch_operands = 1 : i64, tpu.core_type = #tpu.core_type<tc>, window_params = [{transform_indices = @transform_0, window_bounds = array<i64: 1, 16, 16, 256>}, {pipeline_mode = #tpu.pipeline_mode<synchronous>, transform_indices = @transform_1, window_bounds = array<i64: 256, 64>}, {pipeline_mode = #tpu.pipeline_mode<synchronous>, transform_indices = @transform_2, window_bounds = array<i64: 3, 3, 64, 64>}, {pipeline_mode = #tpu.pipeline_mode<synchronous>, transform_indices = @transform_3, window_bounds = array<i64: 64, 256>}, {pipeline_mode = #tpu.pipeline_mode<synchronous>, transform_indices = @transform_4, window_bounds = array<i64: 4, 64>}, {pipeline_mode = #tpu.pipeline_mode<synchronous>, transform_indices = @transform_5, window_bounds = array<i64: 2, 256>}, {transform_indices = @transform_6, window_bounds = array<i64: 1, 8, 16, 256>}]} {
    %c8_i32 = arith.constant 8 : i32
    %0 = arith.muli %arg1, %c8_i32 : i32
    %1 = tpu.assume_multiple %0, 8 : i32
    %c0 = arith.constant 0 : index
    %c0_0 = arith.constant 0 : index
    %2 = vector.load %arg6[%c0, %c0_0] : memref<4x64xf32, #tpu.memory_space<vmem>>, vector<1x64xf32>
    %c1 = arith.constant 1 : index
    %c0_1 = arith.constant 0 : index
    %3 = vector.load %arg6[%c1, %c0_1] : memref<4x64xf32, #tpu.memory_space<vmem>>, vector<1x64xf32>
    %c2 = arith.constant 2 : index
    %c0_2 = arith.constant 0 : index
    %4 = vector.load %arg6[%c2, %c0_2] : memref<4x64xf32, #tpu.memory_space<vmem>>, vector<1x64xf32>
    %c3 = arith.constant 3 : index
    %c0_3 = arith.constant 0 : index
    %5 = vector.load %arg6[%c3, %c0_3] : memref<4x64xf32, #tpu.memory_space<vmem>>, vector<1x64xf32>
    %c0_4 = arith.constant 0 : index
    %c0_5 = arith.constant 0 : index
    %6 = vector.load %arg7[%c0_4, %c0_5] : memref<2x256xf32, #tpu.memory_space<vmem>>, vector<1x256xf32>
    %c1_6 = arith.constant 1 : index
    %c0_7 = arith.constant 0 : index
    %7 = vector.load %arg7[%c1_6, %c0_7] : memref<2x256xf32, #tpu.memory_space<vmem>>, vector<1x256xf32>
    %cst = arith.constant 0.000000e+00 : bf16
    %8 = vector.broadcast %cst : bf16 to vector<8x64xbf16>
    %cst_8 = arith.constant 0.000000e+00 : bf16
    %9 = vector.broadcast %cst_8 : bf16 to vector<1x64xbf16>
    %c0_9 = arith.constant 0 : index
    %c0_10 = arith.constant 0 : index
    %10 = vector.load %arg9[%c0_9, %c0_10] : memref<264x64xbf16, #tpu.memory_space<vmem>>, vector<1x64xbf16>
    tpu.vector_store %arg9[%c0_9, %c0_10], %9 {strides = array<i32>} : memref<264x64xbf16, #tpu.memory_space<vmem>>, vector<1x64xbf16>,
    %c17 = arith.constant 17 : index
    %c0_11 = arith.constant 0 : index
    %11 = vector.load %arg9[%c17, %c0_11] : memref<264x64xbf16, #tpu.memory_space<vmem>>, vector<8x64xbf16>
    tpu.vector_store %arg9[%c17, %c0_11], %8 {strides = array<i32>} : memref<264x64xbf16, #tpu.memory_space<vmem>>, vector<8x64xbf16>,
    %c41 = arith.constant 41 : index
    %c0_12 = arith.constant 0 : index
    %12 = vector.load %arg9[%c41, %c0_12] : memref<264x64xbf16, #tpu.memory_space<vmem>>, vector<8x64xbf16>
    tpu.vector_store %arg9[%c41, %c0_12], %8 {strides = array<i32>} : memref<264x64xbf16, #tpu.memory_space<vmem>>, vector<8x64xbf16>,
    %c65 = arith.constant 65 : index
    %c0_13 = arith.constant 0 : index
    %13 = vector.load %arg9[%c65, %c0_13] : memref<264x64xbf16, #tpu.memory_space<vmem>>, vector<8x64xbf16>
    tpu.vector_store %arg9[%c65, %c0_13], %8 {strides = array<i32>} : memref<264x64xbf16, #tpu.memory_space<vmem>>, vector<8x64xbf16>,
    %c89 = arith.constant 89 : index
    %c0_14 = arith.constant 0 : index
    %14 = vector.load %arg9[%c89, %c0_14] : memref<264x64xbf16, #tpu.memory_space<vmem>>, vector<8x64xbf16>
    tpu.vector_store %arg9[%c89, %c0_14], %8 {strides = array<i32>} : memref<264x64xbf16, #tpu.memory_space<vmem>>, vector<8x64xbf16>,
    %c113 = arith.constant 113 : index
    %c0_15 = arith.constant 0 : index
    %15 = vector.load %arg9[%c113, %c0_15] : memref<264x64xbf16, #tpu.memory_space<vmem>>, vector<8x64xbf16>
    tpu.vector_store %arg9[%c113, %c0_15], %8 {strides = array<i32>} : memref<264x64xbf16, #tpu.memory_space<vmem>>, vector<8x64xbf16>,
    %c137 = arith.constant 137 : index
    %c0_16 = arith.constant 0 : index
    %16 = vector.load %arg9[%c137, %c0_16] : memref<264x64xbf16, #tpu.memory_space<vmem>>, vector<8x64xbf16>
    tpu.vector_store %arg9[%c137, %c0_16], %8 {strides = array<i32>} : memref<264x64xbf16, #tpu.memory_space<vmem>>, vector<8x64xbf16>,
    %c161 = arith.constant 161 : index
    %c0_17 = arith.constant 0 : index
    %17 = vector.load %arg9[%c161, %c0_17] : memref<264x64xbf16, #tpu.memory_space<vmem>>, vector<8x64xbf16>
    tpu.vector_store %arg9[%c161, %c0_17], %8 {strides = array<i32>} : memref<264x64xbf16, #tpu.memory_space<vmem>>, vector<8x64xbf16>,
    %c185 = arith.constant 185 : index
    %c0_18 = arith.constant 0 : index
    %18 = vector.load %arg9[%c185, %c0_18] : memref<264x64xbf16, #tpu.memory_space<vmem>>, vector<8x64xbf16>
    tpu.vector_store %arg9[%c185, %c0_18], %8 {strides = array<i32>} : memref<264x64xbf16, #tpu.memory_space<vmem>>, vector<8x64xbf16>,
    %c209 = arith.constant 209 : index
    %c0_19 = arith.constant 0 : index
    %19 = vector.load %arg9[%c209, %c0_19] : memref<264x64xbf16, #tpu.memory_space<vmem>>, vector<8x64xbf16>
    tpu.vector_store %arg9[%c209, %c0_19], %8 {strides = array<i32>} : memref<264x64xbf16, #tpu.memory_space<vmem>>, vector<8x64xbf16>,
    %c233 = arith.constant 233 : index
    %c0_20 = arith.constant 0 : index
    %20 = vector.load %arg9[%c233, %c0_20] : memref<264x64xbf16, #tpu.memory_space<vmem>>, vector<8x64xbf16>
    tpu.vector_store %arg9[%c233, %c0_20], %8 {strides = array<i32>} : memref<264x64xbf16, #tpu.memory_space<vmem>>, vector<8x64xbf16>,
    %c0_21 = arith.constant 0 : index
    %21 = arith.index_cast %1 : i32 to index
    %c0_22 = arith.constant 0 : index
    %c0_23 = arith.constant 0 : index
    %22 = vector.load %arg2[%c0_21, %21, %c0_22, %c0_23] : memref<1x16x16x256xbf16, #tpu.memory_space<vmem>>, vector<1x8x16x256xbf16>
    %23 = vector.shape_cast %22 : vector<1x8x16x256xbf16> to vector<8x16x256xbf16>
    %24 = vector.shape_cast %23 : vector<8x16x256xbf16> to vector<128x256xbf16>
    %c0_24 = arith.constant 0 : index
    %c0_25 = arith.constant 0 : index
    %25 = vector.load %arg3[%c0_24, %c0_25] : memref<256x64xbf16, #tpu.memory_space<vmem>>, vector<256x64xbf16>
    %cst_26 = arith.constant dense<0.000000e+00> : vector<128x64xf32>
    %26 = tpu.matmul %24, %25, %cst_26 {dimension_numbers = #tpu.dot_dimension_numbers<[1], [0], [0], [1], [0, 0, 1, 1], [], []>} : vector<128x256xbf16>, vector<256x64xbf16>, vector<128x64xf32> -> vector<128x64xf32>
    %27 = vector.broadcast %2 : vector<1x64xf32> to vector<128x64xf32>
    %28 = arith.mulf %26, %27 : vector<128x64xf32>
    %29 = vector.broadcast %3 : vector<1x64xf32> to vector<128x64xf32>
    %30 = arith.addf %28, %29 : vector<128x64xf32>
    %cst_27 = arith.constant 0.000000e+00 : f32
    %31 = vector.broadcast %cst_27 : f32 to vector<128x64xf32>
    %32 = arith.maximumf %30, %31 : vector<128x64xf32>
    %33 = arith.truncf %32 : vector<128x64xf32> to vector<128x64xbf16>
    %34 = vector.extract_strided_slice %33 {offsets = [0, 0], sizes = [16, 64], strides = [1, 1]} : vector<128x64xbf16> to vector<16x64xbf16>
    %c25 = arith.constant 25 : index
    %c0_28 = arith.constant 0 : index
    %35 = vector.load %arg9[%c25, %c0_28] : memref<264x64xbf16, #tpu.memory_space<vmem>>, vector<16x64xbf16>
    tpu.vector_store %arg9[%c25, %c0_28], %34 {strides = array<i32>} : memref<264x64xbf16, #tpu.memory_space<vmem>>, vector<16x64xbf16>,
    %36 = vector.extract_strided_slice %33 {offsets = [16, 0], sizes = [16, 64], strides = [1, 1]} : vector<128x64xbf16> to vector<16x64xbf16>
    %c49 = arith.constant 49 : index
    %c0_29 = arith.constant 0 : index
    %37 = vector.load %arg9[%c49, %c0_29] : memref<264x64xbf16, #tpu.memory_space<vmem>>, vector<16x64xbf16>
    tpu.vector_store %arg9[%c49, %c0_29], %36 {strides = array<i32>} : memref<264x64xbf16, #tpu.memory_space<vmem>>, vector<16x64xbf16>,
    %38 = vector.extract_strided_slice %33 {offsets = [32, 0], sizes = [16, 64], strides = [1, 1]} : vector<128x64xbf16> to vector<16x64xbf16>
    %c73 = arith.constant 73 : index
    %c0_30 = arith.constant 0 : index
    %39 = vector.load %arg9[%c73, %c0_30] : memref<264x64xbf16, #tpu.memory_space<vmem>>, vector<16x64xbf16>
    tpu.vector_store %arg9[%c73, %c0_30], %38 {strides = array<i32>} : memref<264x64xbf16, #tpu.memory_space<vmem>>, vector<16x64xbf16>,
    %40 = vector.extract_strided_slice %33 {offsets = [48, 0], sizes = [16, 64], strides = [1, 1]} : vector<128x64xbf16> to vector<16x64xbf16>
    %c97 = arith.constant 97 : index
    %c0_31 = arith.constant 0 : index
    %41 = vector.load %arg9[%c97, %c0_31] : memref<264x64xbf16, #tpu.memory_space<vmem>>, vector<16x64xbf16>
    tpu.vector_store %arg9[%c97, %c0_31], %40 {strides = array<i32>} : memref<264x64xbf16, #tpu.memory_space<vmem>>, vector<16x64xbf16>,
    %42 = vector.extract_strided_slice %33 {offsets = [64, 0], sizes = [16, 64], strides = [1, 1]} : vector<128x64xbf16> to vector<16x64xbf16>
    %c121 = arith.constant 121 : index
    %c0_32 = arith.constant 0 : index
    %43 = vector.load %arg9[%c121, %c0_32] : memref<264x64xbf16, #tpu.memory_space<vmem>>, vector<16x64xbf16>
    tpu.vector_store %arg9[%c121, %c0_32], %42 {strides = array<i32>} : memref<264x64xbf16, #tpu.memory_space<vmem>>, vector<16x64xbf16>,
    %44 = vector.extract_strided_slice %33 {offsets = [80, 0], sizes = [16, 64], strides = [1, 1]} : vector<128x64xbf16> to vector<16x64xbf16>
    %c145 = arith.constant 145 : index
    %c0_33 = arith.constant 0 : index
    %45 = vector.load %arg9[%c145, %c0_33] : memref<264x64xbf16, #tpu.memory_space<vmem>>, vector<16x64xbf16>
    tpu.vector_store %arg9[%c145, %c0_33], %44 {strides = array<i32>} : memref<264x64xbf16, #tpu.memory_space<vmem>>, vector<16x64xbf16>,
    %46 = vector.extract_strided_slice %33 {offsets = [96, 0], sizes = [16, 64], strides = [1, 1]} : vector<128x64xbf16> to vector<16x64xbf16>
    %c169 = arith.constant 169 : index
    %c0_34 = arith.constant 0 : index
    %47 = vector.load %arg9[%c169, %c0_34] : memref<264x64xbf16, #tpu.memory_space<vmem>>, vector<16x64xbf16>
    tpu.vector_store %arg9[%c169, %c0_34], %46 {strides = array<i32>} : memref<264x64xbf16, #tpu.memory_space<vmem>>, vector<16x64xbf16>,
    %48 = vector.extract_strided_slice %33 {offsets = [112, 0], sizes = [16, 64], strides = [1, 1]} : vector<128x64xbf16> to vector<16x64xbf16>
    %c193 = arith.constant 193 : index
    %c0_35 = arith.constant 0 : index
    %49 = vector.load %arg9[%c193, %c0_35] : memref<264x64xbf16, #tpu.memory_space<vmem>>, vector<16x64xbf16>
    tpu.vector_store %arg9[%c193, %c0_35], %48 {strides = array<i32>} : memref<264x64xbf16, #tpu.memory_space<vmem>>, vector<16x64xbf16>,
    %c0_i32 = arith.constant 0 : i32
    %50 = arith.cmpi eq, %arg1, %c0_i32 : i32
    %51 = arith.extui %50 : i1 to i32
    %c0_i32_36 = arith.constant 0 : i32
    %52 = arith.cmpi ne, %51, %c0_i32_36 : i32
    scf.if %52 {
      %cst_196 = arith.constant 0.000000e+00 : bf16
      %324 = vector.broadcast %cst_196 : bf16 to vector<16x64xbf16>
      %c1_197 = arith.constant 1 : index
      %c0_198 = arith.constant 0 : index
      %325 = vector.load %arg9[%c1_197, %c0_198] : memref<264x64xbf16, #tpu.memory_space<vmem>>, vector<16x64xbf16>
      tpu.vector_store %arg9[%c1_197, %c0_198], %324 {strides = array<i32>} : memref<264x64xbf16, #tpu.memory_space<vmem>>, vector<16x64xbf16>,
    } else {
    }
    %c0_i32_37 = arith.constant 0 : i32
    %53 = arith.cmpi sgt, %arg1, %c0_i32_37 : i32
    %54 = arith.extui %53 : i1 to i32
    %c0_i32_38 = arith.constant 0 : i32
    %55 = arith.cmpi ne, %54, %c0_i32_38 : i32
    scf.if %55 {
      %c1_i32_196 = arith.constant 1 : i32
      %324 = arith.subi %1, %c1_i32_196 : i32
      %c0_197 = arith.constant 0 : index
      %325 = arith.index_cast %324 : i32 to index
      %c0_198 = arith.constant 0 : index
      %c0_199 = arith.constant 0 : index
      %326 = vector.load %arg2[%c0_197, %325, %c0_198, %c0_199] : memref<1x16x16x256xbf16, #tpu.memory_space<vmem>>, vector<1x1x16x256xbf16>
      %327 = vector.shape_cast %326 : vector<1x1x16x256xbf16> to vector<1x16x256xbf16>
      %328 = vector.shape_cast %327 : vector<1x16x256xbf16> to vector<16x256xbf16>
      %c0_200 = arith.constant 0 : index
      %c0_201 = arith.constant 0 : index
      %329 = vector.load %arg3[%c0_200, %c0_201] : memref<256x64xbf16, #tpu.memory_space<vmem>>, vector<256x64xbf16>
      %cst_202 = arith.constant dense<0.000000e+00> : vector<16x64xf32>
      %330 = tpu.matmul %328, %329, %cst_202 {dimension_numbers = #tpu.dot_dimension_numbers<[1], [0], [0], [1], [0, 0, 1, 1], [], []>} : vector<16x256xbf16>, vector<256x64xbf16>, vector<16x64xf32> -> vector<16x64xf32>
      %331 = vector.broadcast %2 : vector<1x64xf32> to vector<16x64xf32>
      %332 = arith.mulf %330, %331 : vector<16x64xf32>
      %333 = vector.broadcast %3 : vector<1x64xf32> to vector<16x64xf32>
      %334 = arith.addf %332, %333 : vector<16x64xf32>
      %cst_203 = arith.constant 0.000000e+00 : f32
      %335 = vector.broadcast %cst_203 : f32 to vector<16x64xf32>
      %336 = arith.maximumf %334, %335 : vector<16x64xf32>
      %337 = arith.truncf %336 : vector<16x64xf32> to vector<16x64xbf16>
      %c1_204 = arith.constant 1 : index
      %c0_205 = arith.constant 0 : index
      %338 = vector.load %arg9[%c1_204, %c0_205] : memref<264x64xbf16, #tpu.memory_space<vmem>>, vector<16x64xbf16>
      tpu.vector_store %arg9[%c1_204, %c0_205], %337 {strides = array<i32>} : memref<264x64xbf16, #tpu.memory_space<vmem>>, vector<16x64xbf16>,
    } else {
    }
    %c1_i32 = arith.constant 1 : i32
    %56 = arith.cmpi eq, %arg1, %c1_i32 : i32
    %57 = arith.extui %56 : i1 to i32
    %c0_i32_39 = arith.constant 0 : i32
    %58 = arith.cmpi ne, %57, %c0_i32_39 : i32
    scf.if %58 {
      %cst_196 = arith.constant 0.000000e+00 : bf16
      %324 = vector.broadcast %cst_196 : bf16 to vector<16x64xbf16>
      %c217 = arith.constant 217 : index
      %c0_197 = arith.constant 0 : index
      %325 = vector.load %arg9[%c217, %c0_197] : memref<264x64xbf16, #tpu.memory_space<vmem>>, vector<16x64xbf16>
      tpu.vector_store %arg9[%c217, %c0_197], %324 {strides = array<i32>} : memref<264x64xbf16, #tpu.memory_space<vmem>>, vector<16x64xbf16>,
    } else {
    }
    %c1_i32_40 = arith.constant 1 : i32
    %59 = arith.cmpi slt, %arg1, %c1_i32_40 : i32
    %60 = arith.extui %59 : i1 to i32
    %c0_i32_41 = arith.constant 0 : i32
    %61 = arith.cmpi ne, %60, %c0_i32_41 : i32
    scf.if %61 {
      %c8_i32_196 = arith.constant 8 : i32
      %324 = arith.addi %1, %c8_i32_196 : i32
      %c0_197 = arith.constant 0 : index
      %325 = arith.index_cast %324 : i32 to index
      %c0_198 = arith.constant 0 : index
      %c0_199 = arith.constant 0 : index
      %326 = vector.load %arg2[%c0_197, %325, %c0_198, %c0_199] : memref<1x16x16x256xbf16, #tpu.memory_space<vmem>>, vector<1x1x16x256xbf16>
      %327 = vector.shape_cast %326 : vector<1x1x16x256xbf16> to vector<1x16x256xbf16>
      %328 = vector.shape_cast %327 : vector<1x16x256xbf16> to vector<16x256xbf16>
      %c0_200 = arith.constant 0 : index
      %c0_201 = arith.constant 0 : index
      %329 = vector.load %arg3[%c0_200, %c0_201] : memref<256x64xbf16, #tpu.memory_space<vmem>>, vector<256x64xbf16>
      %cst_202 = arith.constant dense<0.000000e+00> : vector<16x64xf32>
      %330 = tpu.matmul %328, %329, %cst_202 {dimension_numbers = #tpu.dot_dimension_numbers<[1], [0], [0], [1], [0, 0, 1, 1], [], []>} : vector<16x256xbf16>, vector<256x64xbf16>, vector<16x64xf32> -> vector<16x64xf32>
      %331 = vector.broadcast %2 : vector<1x64xf32> to vector<16x64xf32>
      %332 = arith.mulf %330, %331 : vector<16x64xf32>
      %333 = vector.broadcast %3 : vector<1x64xf32> to vector<16x64xf32>
      %334 = arith.addf %332, %333 : vector<16x64xf32>
      %cst_203 = arith.constant 0.000000e+00 : f32
      %335 = vector.broadcast %cst_203 : f32 to vector<16x64xf32>
      %336 = arith.maximumf %334, %335 : vector<16x64xf32>
      %337 = arith.truncf %336 : vector<16x64xf32> to vector<16x64xbf16>
      %c217 = arith.constant 217 : index
      %c0_204 = arith.constant 0 : index
      %338 = vector.load %arg9[%c217, %c0_204] : memref<264x64xbf16, #tpu.memory_space<vmem>>, vector<16x64xbf16>
      tpu.vector_store %arg9[%c217, %c0_204], %337 {strides = array<i32>} : memref<264x64xbf16, #tpu.memory_space<vmem>>, vector<16x64xbf16>,
    } else {
    }
    %cst_42 = arith.constant 0.000000e+00 : f32
    %62 = vector.broadcast %cst_42 : f32 to vector<192x64xf32>
    %c0_43 = arith.constant 0 : index
    %c0_44 = arith.constant 0 : index
    %63 = vector.load %arg9[%c0_43, %c0_44] : memref<264x64xbf16, #tpu.memory_space<vmem>>, vector<192x64xbf16>
    %c0_45 = arith.constant 0 : index
    %c0_46 = arith.constant 0 : index
    %c0_47 = arith.constant 0 : index
    %c0_48 = arith.constant 0 : index
    %64 = vector.load %arg4[%c0_45, %c0_46, %c0_47, %c0_48] : memref<3x3x64x64xbf16, #tpu.memory_space<vmem>>, vector<1x1x64x64xbf16>
    %65 = vector.shape_cast %64 : vector<1x1x64x64xbf16> to vector<64x64xbf16>
    %cst_49 = arith.constant dense<0.000000e+00> : vector<192x64xf32>
    %66 = tpu.matmul %63, %65, %cst_49 {dimension_numbers = #tpu.dot_dimension_numbers<[1], [0], [0], [1], [0, 0, 1, 1], [], []>} : vector<192x64xbf16>, vector<64x64xbf16>, vector<192x64xf32> -> vector<192x64xf32>
    %67 = arith.addf %62, %66 : vector<192x64xf32>
    %c1_50 = arith.constant 1 : index
    %c0_51 = arith.constant 0 : index
    %68 = vector.load %arg9[%c1_50, %c0_51] : memref<264x64xbf16, #tpu.memory_space<vmem>>, vector<192x64xbf16>
    %c0_52 = arith.constant 0 : index
    %c1_53 = arith.constant 1 : index
    %c0_54 = arith.constant 0 : index
    %c0_55 = arith.constant 0 : index
    %69 = vector.load %arg4[%c0_52, %c1_53, %c0_54, %c0_55] : memref<3x3x64x64xbf16, #tpu.memory_space<vmem>>, vector<1x1x64x64xbf16>
    %70 = vector.shape_cast %69 : vector<1x1x64x64xbf16> to vector<64x64xbf16>
    %cst_56 = arith.constant dense<0.000000e+00> : vector<192x64xf32>
    %71 = tpu.matmul %68, %70, %cst_56 {dimension_numbers = #tpu.dot_dimension_numbers<[1], [0], [0], [1], [0, 0, 1, 1], [], []>} : vector<192x64xbf16>, vector<64x64xbf16>, vector<192x64xf32> -> vector<192x64xf32>
    %72 = arith.addf %67, %71 : vector<192x64xf32>
    %c2_57 = arith.constant 2 : index
    %c0_58 = arith.constant 0 : index
    %73 = vector.load %arg9[%c2_57, %c0_58] : memref<264x64xbf16, #tpu.memory_space<vmem>>, vector<192x64xbf16>
    %c0_59 = arith.constant 0 : index
    %c2_60 = arith.constant 2 : index
    %c0_61 = arith.constant 0 : index
    %c0_62 = arith.constant 0 : index
    %74 = vector.load %arg4[%c0_59, %c2_60, %c0_61, %c0_62] : memref<3x3x64x64xbf16, #tpu.memory_space<vmem>>, vector<1x1x64x64xbf16>
    %75 = vector.shape_cast %74 : vector<1x1x64x64xbf16> to vector<64x64xbf16>
    %cst_63 = arith.constant dense<0.000000e+00> : vector<192x64xf32>
    %76 = tpu.matmul %73, %75, %cst_63 {dimension_numbers = #tpu.dot_dimension_numbers<[1], [0], [0], [1], [0, 0, 1, 1], [], []>} : vector<192x64xbf16>, vector<64x64xbf16>, vector<192x64xf32> -> vector<192x64xf32>
    %77 = arith.addf %72, %76 : vector<192x64xf32>
    %c24 = arith.constant 24 : index
    %c0_64 = arith.constant 0 : index
    %78 = vector.load %arg9[%c24, %c0_64] : memref<264x64xbf16, #tpu.memory_space<vmem>>, vector<192x64xbf16>
    %c1_65 = arith.constant 1 : index
    %c0_66 = arith.constant 0 : index
    %c0_67 = arith.constant 0 : index
    %c0_68 = arith.constant 0 : index
    %79 = vector.load %arg4[%c1_65, %c0_66, %c0_67, %c0_68] : memref<3x3x64x64xbf16, #tpu.memory_space<vmem>>, vector<1x1x64x64xbf16>
    %80 = vector.shape_cast %79 : vector<1x1x64x64xbf16> to vector<64x64xbf16>
    %cst_69 = arith.constant dense<0.000000e+00> : vector<192x64xf32>
    %81 = tpu.matmul %78, %80, %cst_69 {dimension_numbers = #tpu.dot_dimension_numbers<[1], [0], [0], [1], [0, 0, 1, 1], [], []>} : vector<192x64xbf16>, vector<64x64xbf16>, vector<192x64xf32> -> vector<192x64xf32>
    %82 = arith.addf %77, %81 : vector<192x64xf32>
    %c25_70 = arith.constant 25 : index
    %c0_71 = arith.constant 0 : index
    %83 = vector.load %arg9[%c25_70, %c0_71] : memref<264x64xbf16, #tpu.memory_space<vmem>>, vector<192x64xbf16>
    %c1_72 = arith.constant 1 : index
    %c1_73 = arith.constant 1 : index
    %c0_74 = arith.constant 0 : index
    %c0_75 = arith.constant 0 : index
    %84 = vector.load %arg4[%c1_72, %c1_73, %c0_74, %c0_75] : memref<3x3x64x64xbf16, #tpu.memory_space<vmem>>, vector<1x1x64x64xbf16>
    %85 = vector.shape_cast %84 : vector<1x1x64x64xbf16> to vector<64x64xbf16>
    %cst_76 = arith.constant dense<0.000000e+00> : vector<192x64xf32>
    %86 = tpu.matmul %83, %85, %cst_76 {dimension_numbers = #tpu.dot_dimension_numbers<[1], [0], [0], [1], [0, 0, 1, 1], [], []>} : vector<192x64xbf16>, vector<64x64xbf16>, vector<192x64xf32> -> vector<192x64xf32>
    %87 = arith.addf %82, %86 : vector<192x64xf32>
    %c26 = arith.constant 26 : index
    %c0_77 = arith.constant 0 : index
    %88 = vector.load %arg9[%c26, %c0_77] : memref<264x64xbf16, #tpu.memory_space<vmem>>, vector<192x64xbf16>
    %c1_78 = arith.constant 1 : index
    %c2_79 = arith.constant 2 : index
    %c0_80 = arith.constant 0 : index
    %c0_81 = arith.constant 0 : index
    %89 = vector.load %arg4[%c1_78, %c2_79, %c0_80, %c0_81] : memref<3x3x64x64xbf16, #tpu.memory_space<vmem>>, vector<1x1x64x64xbf16>
    %90 = vector.shape_cast %89 : vector<1x1x64x64xbf16> to vector<64x64xbf16>
    %cst_82 = arith.constant dense<0.000000e+00> : vector<192x64xf32>
    %91 = tpu.matmul %88, %90, %cst_82 {dimension_numbers = #tpu.dot_dimension_numbers<[1], [0], [0], [1], [0, 0, 1, 1], [], []>} : vector<192x64xbf16>, vector<64x64xbf16>, vector<192x64xf32> -> vector<192x64xf32>
    %92 = arith.addf %87, %91 : vector<192x64xf32>
    %c48 = arith.constant 48 : index
    %c0_83 = arith.constant 0 : index
    %93 = vector.load %arg9[%c48, %c0_83] : memref<264x64xbf16, #tpu.memory_space<vmem>>, vector<192x64xbf16>
    %c2_84 = arith.constant 2 : index
    %c0_85 = arith.constant 0 : index
    %c0_86 = arith.constant 0 : index
    %c0_87 = arith.constant 0 : index
    %94 = vector.load %arg4[%c2_84, %c0_85, %c0_86, %c0_87] : memref<3x3x64x64xbf16, #tpu.memory_space<vmem>>, vector<1x1x64x64xbf16>
    %95 = vector.shape_cast %94 : vector<1x1x64x64xbf16> to vector<64x64xbf16>
    %cst_88 = arith.constant dense<0.000000e+00> : vector<192x64xf32>
    %96 = tpu.matmul %93, %95, %cst_88 {dimension_numbers = #tpu.dot_dimension_numbers<[1], [0], [0], [1], [0, 0, 1, 1], [], []>} : vector<192x64xbf16>, vector<64x64xbf16>, vector<192x64xf32> -> vector<192x64xf32>
    %97 = arith.addf %92, %96 : vector<192x64xf32>
    %c49_89 = arith.constant 49 : index
    %c0_90 = arith.constant 0 : index
    %98 = vector.load %arg9[%c49_89, %c0_90] : memref<264x64xbf16, #tpu.memory_space<vmem>>, vector<192x64xbf16>
    %c2_91 = arith.constant 2 : index
    %c1_92 = arith.constant 1 : index
    %c0_93 = arith.constant 0 : index
    %c0_94 = arith.constant 0 : index
    %99 = vector.load %arg4[%c2_91, %c1_92, %c0_93, %c0_94] : memref<3x3x64x64xbf16, #tpu.memory_space<vmem>>, vector<1x1x64x64xbf16>
    %100 = vector.shape_cast %99 : vector<1x1x64x64xbf16> to vector<64x64xbf16>
    %cst_95 = arith.constant dense<0.000000e+00> : vector<192x64xf32>
    %101 = tpu.matmul %98, %100, %cst_95 {dimension_numbers = #tpu.dot_dimension_numbers<[1], [0], [0], [1], [0, 0, 1, 1], [], []>} : vector<192x64xbf16>, vector<64x64xbf16>, vector<192x64xf32> -> vector<192x64xf32>
    %102 = arith.addf %97, %101 : vector<192x64xf32>
    %c50 = arith.constant 50 : index
    %c0_96 = arith.constant 0 : index
    %103 = vector.load %arg9[%c50, %c0_96] : memref<264x64xbf16, #tpu.memory_space<vmem>>, vector<192x64xbf16>
    %c2_97 = arith.constant 2 : index
    %c2_98 = arith.constant 2 : index
    %c0_99 = arith.constant 0 : index
    %c0_100 = arith.constant 0 : index
    %104 = vector.load %arg4[%c2_97, %c2_98, %c0_99, %c0_100] : memref<3x3x64x64xbf16, #tpu.memory_space<vmem>>, vector<1x1x64x64xbf16>
    %105 = vector.shape_cast %104 : vector<1x1x64x64xbf16> to vector<64x64xbf16>
    %cst_101 = arith.constant dense<0.000000e+00> : vector<192x64xf32>
    %106 = tpu.matmul %103, %105, %cst_101 {dimension_numbers = #tpu.dot_dimension_numbers<[1], [0], [0], [1], [0, 0, 1, 1], [], []>} : vector<192x64xbf16>, vector<64x64xbf16>, vector<192x64xf32> -> vector<192x64xf32>
    %107 = arith.addf %102, %106 : vector<192x64xf32>
    %108 = vector.extract_strided_slice %107 {offsets = [0, 0], sizes = [16, 64], strides = [1, 1]} : vector<192x64xf32> to vector<16x64xf32>
    %109 = vector.broadcast %4 : vector<1x64xf32> to vector<16x64xf32>
    %110 = arith.mulf %108, %109 : vector<16x64xf32>
    %111 = vector.broadcast %5 : vector<1x64xf32> to vector<16x64xf32>
    %112 = arith.addf %110, %111 : vector<16x64xf32>
    %cst_102 = arith.constant 0.000000e+00 : f32
    %113 = vector.broadcast %cst_102 : f32 to vector<16x64xf32>
    %114 = arith.maximumf %112, %113 : vector<16x64xf32>
    %115 = arith.truncf %114 : vector<16x64xf32> to vector<16x64xbf16>
    %c0_103 = arith.constant 0 : index
    %c0_104 = arith.constant 0 : index
    %116 = vector.load %arg5[%c0_103, %c0_104] : memref<64x256xbf16, #tpu.memory_space<vmem>>, vector<64x256xbf16>
    %cst_105 = arith.constant dense<0.000000e+00> : vector<16x256xf32>
    %117 = tpu.matmul %115, %116, %cst_105 {dimension_numbers = #tpu.dot_dimension_numbers<[1], [0], [0], [1], [0, 0, 1, 1], [], []>} : vector<16x64xbf16>, vector<64x256xbf16>, vector<16x256xf32> -> vector<16x256xf32>
    %c0_i32_106 = arith.constant 0 : i32
    %118 = arith.addi %1, %c0_i32_106 : i32
    %c0_107 = arith.constant 0 : index
    %119 = arith.index_cast %118 : i32 to index
    %c0_108 = arith.constant 0 : index
    %c0_109 = arith.constant 0 : index
    %120 = vector.load %arg2[%c0_107, %119, %c0_108, %c0_109] : memref<1x16x16x256xbf16, #tpu.memory_space<vmem>>, vector<1x1x16x256xbf16>
    %121 = vector.shape_cast %120 : vector<1x1x16x256xbf16> to vector<1x16x256xbf16>
    %122 = vector.shape_cast %121 : vector<1x16x256xbf16> to vector<16x256xbf16>
    %123 = vector.broadcast %6 : vector<1x256xf32> to vector<16x256xf32>
    %124 = arith.mulf %117, %123 : vector<16x256xf32>
    %125 = vector.broadcast %7 : vector<1x256xf32> to vector<16x256xf32>
    %126 = arith.addf %124, %125 : vector<16x256xf32>
    %127 = arith.extf %122 : vector<16x256xbf16> to vector<16x256xf32>
    %128 = arith.addf %126, %127 : vector<16x256xf32>
    %cst_110 = arith.constant 0.000000e+00 : f32
    %129 = vector.broadcast %cst_110 : f32 to vector<16x256xf32>
    %130 = arith.maximumf %128, %129 : vector<16x256xf32>
    %131 = arith.truncf %130 : vector<16x256xf32> to vector<16x256xbf16>
    %c0_111 = arith.constant 0 : index
    %c0_112 = arith.constant 0 : index
    %c0_113 = arith.constant 0 : index
    %c0_114 = arith.constant 0 : index
    %132 = vector.load %arg8[%c0_111, %c0_112, %c0_113, %c0_114] : memref<1x8x16x256xbf16, #tpu.memory_space<vmem>>, vector<1x1x16x256xbf16>
    %133 = vector.shape_cast %132 : vector<1x1x16x256xbf16> to vector<16x256xbf16>
    %134 = vector.shape_cast %131 : vector<16x256xbf16> to vector<1x1x16x256xbf16>
    tpu.vector_store %arg8[%c0_111, %c0_112, %c0_113, %c0_114], %134 {strides = array<i32>} : memref<1x8x16x256xbf16, #tpu.memory_space<vmem>>, vector<1x1x16x256xbf16>,
    %135 = vector.extract_strided_slice %107 {offsets = [24, 0], sizes = [16, 64], strides = [1, 1]} : vector<192x64xf32> to vector<16x64xf32>
    %136 = vector.broadcast %4 : vector<1x64xf32> to vector<16x64xf32>
    %137 = arith.mulf %135, %136 : vector<16x64xf32>
    %138 = vector.broadcast %5 : vector<1x64xf32> to vector<16x64xf32>
    %139 = arith.addf %137, %138 : vector<16x64xf32>
    %cst_115 = arith.constant 0.000000e+00 : f32
    %140 = vector.broadcast %cst_115 : f32 to vector<16x64xf32>
    %141 = arith.maximumf %139, %140 : vector<16x64xf32>
    %142 = arith.truncf %141 : vector<16x64xf32> to vector<16x64xbf16>
    %c0_116 = arith.constant 0 : index
    %c0_117 = arith.constant 0 : index
    %143 = vector.load %arg5[%c0_116, %c0_117] : memref<64x256xbf16, #tpu.memory_space<vmem>>, vector<64x256xbf16>
    %cst_118 = arith.constant dense<0.000000e+00> : vector<16x256xf32>
    %144 = tpu.matmul %142, %143, %cst_118 {dimension_numbers = #tpu.dot_dimension_numbers<[1], [0], [0], [1], [0, 0, 1, 1], [], []>} : vector<16x64xbf16>, vector<64x256xbf16>, vector<16x256xf32> -> vector<16x256xf32>
    %c1_i32_119 = arith.constant 1 : i32
    %145 = arith.addi %1, %c1_i32_119 : i32
    %c0_120 = arith.constant 0 : index
    %146 = arith.index_cast %145 : i32 to index
    %c0_121 = arith.constant 0 : index
    %c0_122 = arith.constant 0 : index
    %147 = vector.load %arg2[%c0_120, %146, %c0_121, %c0_122] : memref<1x16x16x256xbf16, #tpu.memory_space<vmem>>, vector<1x1x16x256xbf16>
    %148 = vector.shape_cast %147 : vector<1x1x16x256xbf16> to vector<1x16x256xbf16>
    %149 = vector.shape_cast %148 : vector<1x16x256xbf16> to vector<16x256xbf16>
    %150 = vector.broadcast %6 : vector<1x256xf32> to vector<16x256xf32>
    %151 = arith.mulf %144, %150 : vector<16x256xf32>
    %152 = vector.broadcast %7 : vector<1x256xf32> to vector<16x256xf32>
    %153 = arith.addf %151, %152 : vector<16x256xf32>
    %154 = arith.extf %149 : vector<16x256xbf16> to vector<16x256xf32>
    %155 = arith.addf %153, %154 : vector<16x256xf32>
    %cst_123 = arith.constant 0.000000e+00 : f32
    %156 = vector.broadcast %cst_123 : f32 to vector<16x256xf32>
    %157 = arith.maximumf %155, %156 : vector<16x256xf32>
    %158 = arith.truncf %157 : vector<16x256xf32> to vector<16x256xbf16>
    %c0_124 = arith.constant 0 : index
    %c1_125 = arith.constant 1 : index
    %c0_126 = arith.constant 0 : index
    %c0_127 = arith.constant 0 : index
    %159 = vector.load %arg8[%c0_124, %c1_125, %c0_126, %c0_127] : memref<1x8x16x256xbf16, #tpu.memory_space<vmem>>, vector<1x1x16x256xbf16>
    %160 = vector.shape_cast %159 : vector<1x1x16x256xbf16> to vector<16x256xbf16>
    %161 = vector.shape_cast %158 : vector<16x256xbf16> to vector<1x1x16x256xbf16>
    tpu.vector_store %arg8[%c0_124, %c1_125, %c0_126, %c0_127], %161 {strides = array<i32>} : memref<1x8x16x256xbf16, #tpu.memory_space<vmem>>, vector<1x1x16x256xbf16>,
    %162 = vector.extract_strided_slice %107 {offsets = [48, 0], sizes = [16, 64], strides = [1, 1]} : vector<192x64xf32> to vector<16x64xf32>
    %163 = vector.broadcast %4 : vector<1x64xf32> to vector<16x64xf32>
    %164 = arith.mulf %162, %163 : vector<16x64xf32>
    %165 = vector.broadcast %5 : vector<1x64xf32> to vector<16x64xf32>
    %166 = arith.addf %164, %165 : vector<16x64xf32>
    %cst_128 = arith.constant 0.000000e+00 : f32
    %167 = vector.broadcast %cst_128 : f32 to vector<16x64xf32>
    %168 = arith.maximumf %166, %167 : vector<16x64xf32>
    %169 = arith.truncf %168 : vector<16x64xf32> to vector<16x64xbf16>
    %c0_129 = arith.constant 0 : index
    %c0_130 = arith.constant 0 : index
    %170 = vector.load %arg5[%c0_129, %c0_130] : memref<64x256xbf16, #tpu.memory_space<vmem>>, vector<64x256xbf16>
    %cst_131 = arith.constant dense<0.000000e+00> : vector<16x256xf32>
    %171 = tpu.matmul %169, %170, %cst_131 {dimension_numbers = #tpu.dot_dimension_numbers<[1], [0], [0], [1], [0, 0, 1, 1], [], []>} : vector<16x64xbf16>, vector<64x256xbf16>, vector<16x256xf32> -> vector<16x256xf32>
    %c2_i32 = arith.constant 2 : i32
    %172 = arith.addi %1, %c2_i32 : i32
    %c0_132 = arith.constant 0 : index
    %173 = arith.index_cast %172 : i32 to index
    %c0_133 = arith.constant 0 : index
    %c0_134 = arith.constant 0 : index
    %174 = vector.load %arg2[%c0_132, %173, %c0_133, %c0_134] : memref<1x16x16x256xbf16, #tpu.memory_space<vmem>>, vector<1x1x16x256xbf16>
    %175 = vector.shape_cast %174 : vector<1x1x16x256xbf16> to vector<1x16x256xbf16>
    %176 = vector.shape_cast %175 : vector<1x16x256xbf16> to vector<16x256xbf16>
    %177 = vector.broadcast %6 : vector<1x256xf32> to vector<16x256xf32>
    %178 = arith.mulf %171, %177 : vector<16x256xf32>
    %179 = vector.broadcast %7 : vector<1x256xf32> to vector<16x256xf32>
    %180 = arith.addf %178, %179 : vector<16x256xf32>
    %181 = arith.extf %176 : vector<16x256xbf16> to vector<16x256xf32>
    %182 = arith.addf %180, %181 : vector<16x256xf32>
    %cst_135 = arith.constant 0.000000e+00 : f32
    %183 = vector.broadcast %cst_135 : f32 to vector<16x256xf32>
    %184 = arith.maximumf %182, %183 : vector<16x256xf32>
    %185 = arith.truncf %184 : vector<16x256xf32> to vector<16x256xbf16>
    %c0_136 = arith.constant 0 : index
    %c2_137 = arith.constant 2 : index
    %c0_138 = arith.constant 0 : index
    %c0_139 = arith.constant 0 : index
    %186 = vector.load %arg8[%c0_136, %c2_137, %c0_138, %c0_139] : memref<1x8x16x256xbf16, #tpu.memory_space<vmem>>, vector<1x1x16x256xbf16>
    %187 = vector.shape_cast %186 : vector<1x1x16x256xbf16> to vector<16x256xbf16>
    %188 = vector.shape_cast %185 : vector<16x256xbf16> to vector<1x1x16x256xbf16>
    tpu.vector_store %arg8[%c0_136, %c2_137, %c0_138, %c0_139], %188 {strides = array<i32>} : memref<1x8x16x256xbf16, #tpu.memory_space<vmem>>, vector<1x1x16x256xbf16>,
    %189 = vector.extract_strided_slice %107 {offsets = [72, 0], sizes = [16, 64], strides = [1, 1]} : vector<192x64xf32> to vector<16x64xf32>
    %190 = vector.broadcast %4 : vector<1x64xf32> to vector<16x64xf32>
    %191 = arith.mulf %189, %190 : vector<16x64xf32>
    %192 = vector.broadcast %5 : vector<1x64xf32> to vector<16x64xf32>
    %193 = arith.addf %191, %192 : vector<16x64xf32>
    %cst_140 = arith.constant 0.000000e+00 : f32
    %194 = vector.broadcast %cst_140 : f32 to vector<16x64xf32>
    %195 = arith.maximumf %193, %194 : vector<16x64xf32>
    %196 = arith.truncf %195 : vector<16x64xf32> to vector<16x64xbf16>
    %c0_141 = arith.constant 0 : index
    %c0_142 = arith.constant 0 : index
    %197 = vector.load %arg5[%c0_141, %c0_142] : memref<64x256xbf16, #tpu.memory_space<vmem>>, vector<64x256xbf16>
    %cst_143 = arith.constant dense<0.000000e+00> : vector<16x256xf32>
    %198 = tpu.matmul %196, %197, %cst_143 {dimension_numbers = #tpu.dot_dimension_numbers<[1], [0], [0], [1], [0, 0, 1, 1], [], []>} : vector<16x64xbf16>, vector<64x256xbf16>, vector<16x256xf32> -> vector<16x256xf32>
    %c3_i32 = arith.constant 3 : i32
    %199 = arith.addi %1, %c3_i32 : i32
    %c0_144 = arith.constant 0 : index
    %200 = arith.index_cast %199 : i32 to index
    %c0_145 = arith.constant 0 : index
    %c0_146 = arith.constant 0 : index
    %201 = vector.load %arg2[%c0_144, %200, %c0_145, %c0_146] : memref<1x16x16x256xbf16, #tpu.memory_space<vmem>>, vector<1x1x16x256xbf16>
    %202 = vector.shape_cast %201 : vector<1x1x16x256xbf16> to vector<1x16x256xbf16>
    %203 = vector.shape_cast %202 : vector<1x16x256xbf16> to vector<16x256xbf16>
    %204 = vector.broadcast %6 : vector<1x256xf32> to vector<16x256xf32>
    %205 = arith.mulf %198, %204 : vector<16x256xf32>
    %206 = vector.broadcast %7 : vector<1x256xf32> to vector<16x256xf32>
    %207 = arith.addf %205, %206 : vector<16x256xf32>
    %208 = arith.extf %203 : vector<16x256xbf16> to vector<16x256xf32>
    %209 = arith.addf %207, %208 : vector<16x256xf32>
    %cst_147 = arith.constant 0.000000e+00 : f32
    %210 = vector.broadcast %cst_147 : f32 to vector<16x256xf32>
    %211 = arith.maximumf %209, %210 : vector<16x256xf32>
    %212 = arith.truncf %211 : vector<16x256xf32> to vector<16x256xbf16>
    %c0_148 = arith.constant 0 : index
    %c3_149 = arith.constant 3 : index
    %c0_150 = arith.constant 0 : index
    %c0_151 = arith.constant 0 : index
    %213 = vector.load %arg8[%c0_148, %c3_149, %c0_150, %c0_151] : memref<1x8x16x256xbf16, #tpu.memory_space<vmem>>, vector<1x1x16x256xbf16>
    %214 = vector.shape_cast %213 : vector<1x1x16x256xbf16> to vector<16x256xbf16>
    %215 = vector.shape_cast %212 : vector<16x256xbf16> to vector<1x1x16x256xbf16>
    tpu.vector_store %arg8[%c0_148, %c3_149, %c0_150, %c0_151], %215 {strides = array<i32>} : memref<1x8x16x256xbf16, #tpu.memory_space<vmem>>, vector<1x1x16x256xbf16>,
    %216 = vector.extract_strided_slice %107 {offsets = [96, 0], sizes = [16, 64], strides = [1, 1]} : vector<192x64xf32> to vector<16x64xf32>
    %217 = vector.broadcast %4 : vector<1x64xf32> to vector<16x64xf32>
    %218 = arith.mulf %216, %217 : vector<16x64xf32>
    %219 = vector.broadcast %5 : vector<1x64xf32> to vector<16x64xf32>
    %220 = arith.addf %218, %219 : vector<16x64xf32>
    %cst_152 = arith.constant 0.000000e+00 : f32
    %221 = vector.broadcast %cst_152 : f32 to vector<16x64xf32>
    %222 = arith.maximumf %220, %221 : vector<16x64xf32>
    %223 = arith.truncf %222 : vector<16x64xf32> to vector<16x64xbf16>
    %c0_153 = arith.constant 0 : index
    %c0_154 = arith.constant 0 : index
    %224 = vector.load %arg5[%c0_153, %c0_154] : memref<64x256xbf16, #tpu.memory_space<vmem>>, vector<64x256xbf16>
    %cst_155 = arith.constant dense<0.000000e+00> : vector<16x256xf32>
    %225 = tpu.matmul %223, %224, %cst_155 {dimension_numbers = #tpu.dot_dimension_numbers<[1], [0], [0], [1], [0, 0, 1, 1], [], []>} : vector<16x64xbf16>, vector<64x256xbf16>, vector<16x256xf32> -> vector<16x256xf32>
    %c4_i32 = arith.constant 4 : i32
    %226 = arith.addi %1, %c4_i32 : i32
    %c0_156 = arith.constant 0 : index
    %227 = arith.index_cast %226 : i32 to index
    %c0_157 = arith.constant 0 : index
    %c0_158 = arith.constant 0 : index
    %228 = vector.load %arg2[%c0_156, %227, %c0_157, %c0_158] : memref<1x16x16x256xbf16, #tpu.memory_space<vmem>>, vector<1x1x16x256xbf16>
    %229 = vector.shape_cast %228 : vector<1x1x16x256xbf16> to vector<1x16x256xbf16>
    %230 = vector.shape_cast %229 : vector<1x16x256xbf16> to vector<16x256xbf16>
    %231 = vector.broadcast %6 : vector<1x256xf32> to vector<16x256xf32>
    %232 = arith.mulf %225, %231 : vector<16x256xf32>
    %233 = vector.broadcast %7 : vector<1x256xf32> to vector<16x256xf32>
    %234 = arith.addf %232, %233 : vector<16x256xf32>
    %235 = arith.extf %230 : vector<16x256xbf16> to vector<16x256xf32>
    %236 = arith.addf %234, %235 : vector<16x256xf32>
    %cst_159 = arith.constant 0.000000e+00 : f32
    %237 = vector.broadcast %cst_159 : f32 to vector<16x256xf32>
    %238 = arith.maximumf %236, %237 : vector<16x256xf32>
    %239 = arith.truncf %238 : vector<16x256xf32> to vector<16x256xbf16>
    %c0_160 = arith.constant 0 : index
    %c4 = arith.constant 4 : index
    %c0_161 = arith.constant 0 : index
    %c0_162 = arith.constant 0 : index
    %240 = vector.load %arg8[%c0_160, %c4, %c0_161, %c0_162] : memref<1x8x16x256xbf16, #tpu.memory_space<vmem>>, vector<1x1x16x256xbf16>
    %241 = vector.shape_cast %240 : vector<1x1x16x256xbf16> to vector<16x256xbf16>
    %242 = vector.shape_cast %239 : vector<16x256xbf16> to vector<1x1x16x256xbf16>
    tpu.vector_store %arg8[%c0_160, %c4, %c0_161, %c0_162], %242 {strides = array<i32>} : memref<1x8x16x256xbf16, #tpu.memory_space<vmem>>, vector<1x1x16x256xbf16>,
    %243 = vector.extract_strided_slice %107 {offsets = [120, 0], sizes = [16, 64], strides = [1, 1]} : vector<192x64xf32> to vector<16x64xf32>
    %244 = vector.broadcast %4 : vector<1x64xf32> to vector<16x64xf32>
    %245 = arith.mulf %243, %244 : vector<16x64xf32>
    %246 = vector.broadcast %5 : vector<1x64xf32> to vector<16x64xf32>
    %247 = arith.addf %245, %246 : vector<16x64xf32>
    %cst_163 = arith.constant 0.000000e+00 : f32
    %248 = vector.broadcast %cst_163 : f32 to vector<16x64xf32>
    %249 = arith.maximumf %247, %248 : vector<16x64xf32>
    %250 = arith.truncf %249 : vector<16x64xf32> to vector<16x64xbf16>
    %c0_164 = arith.constant 0 : index
    %c0_165 = arith.constant 0 : index
    %251 = vector.load %arg5[%c0_164, %c0_165] : memref<64x256xbf16, #tpu.memory_space<vmem>>, vector<64x256xbf16>
    %cst_166 = arith.constant dense<0.000000e+00> : vector<16x256xf32>
    %252 = tpu.matmul %250, %251, %cst_166 {dimension_numbers = #tpu.dot_dimension_numbers<[1], [0], [0], [1], [0, 0, 1, 1], [], []>} : vector<16x64xbf16>, vector<64x256xbf16>, vector<16x256xf32> -> vector<16x256xf32>
    %c5_i32 = arith.constant 5 : i32
    %253 = arith.addi %1, %c5_i32 : i32
    %c0_167 = arith.constant 0 : index
    %254 = arith.index_cast %253 : i32 to index
    %c0_168 = arith.constant 0 : index
    %c0_169 = arith.constant 0 : index
    %255 = vector.load %arg2[%c0_167, %254, %c0_168, %c0_169] : memref<1x16x16x256xbf16, #tpu.memory_space<vmem>>, vector<1x1x16x256xbf16>
    %256 = vector.shape_cast %255 : vector<1x1x16x256xbf16> to vector<1x16x256xbf16>
    %257 = vector.shape_cast %256 : vector<1x16x256xbf16> to vector<16x256xbf16>
    %258 = vector.broadcast %6 : vector<1x256xf32> to vector<16x256xf32>
    %259 = arith.mulf %252, %258 : vector<16x256xf32>
    %260 = vector.broadcast %7 : vector<1x256xf32> to vector<16x256xf32>
    %261 = arith.addf %259, %260 : vector<16x256xf32>
    %262 = arith.extf %257 : vector<16x256xbf16> to vector<16x256xf32>
    %263 = arith.addf %261, %262 : vector<16x256xf32>
    %cst_170 = arith.constant 0.000000e+00 : f32
    %264 = vector.broadcast %cst_170 : f32 to vector<16x256xf32>
    %265 = arith.maximumf %263, %264 : vector<16x256xf32>
    %266 = arith.truncf %265 : vector<16x256xf32> to vector<16x256xbf16>
    %c0_171 = arith.constant 0 : index
    %c5 = arith.constant 5 : index
    %c0_172 = arith.constant 0 : index
    %c0_173 = arith.constant 0 : index
    %267 = vector.load %arg8[%c0_171, %c5, %c0_172, %c0_173] : memref<1x8x16x256xbf16, #tpu.memory_space<vmem>>, vector<1x1x16x256xbf16>
    %268 = vector.shape_cast %267 : vector<1x1x16x256xbf16> to vector<16x256xbf16>
    %269 = vector.shape_cast %266 : vector<16x256xbf16> to vector<1x1x16x256xbf16>
    tpu.vector_store %arg8[%c0_171, %c5, %c0_172, %c0_173], %269 {strides = array<i32>} : memref<1x8x16x256xbf16, #tpu.memory_space<vmem>>, vector<1x1x16x256xbf16>,
    %270 = vector.extract_strided_slice %107 {offsets = [144, 0], sizes = [16, 64], strides = [1, 1]} : vector<192x64xf32> to vector<16x64xf32>
    %271 = vector.broadcast %4 : vector<1x64xf32> to vector<16x64xf32>
    %272 = arith.mulf %270, %271 : vector<16x64xf32>
    %273 = vector.broadcast %5 : vector<1x64xf32> to vector<16x64xf32>
    %274 = arith.addf %272, %273 : vector<16x64xf32>
    %cst_174 = arith.constant 0.000000e+00 : f32
    %275 = vector.broadcast %cst_174 : f32 to vector<16x64xf32>
    %276 = arith.maximumf %274, %275 : vector<16x64xf32>
    %277 = arith.truncf %276 : vector<16x64xf32> to vector<16x64xbf16>
    %c0_175 = arith.constant 0 : index
    %c0_176 = arith.constant 0 : index
    %278 = vector.load %arg5[%c0_175, %c0_176] : memref<64x256xbf16, #tpu.memory_space<vmem>>, vector<64x256xbf16>
    %cst_177 = arith.constant dense<0.000000e+00> : vector<16x256xf32>
    %279 = tpu.matmul %277, %278, %cst_177 {dimension_numbers = #tpu.dot_dimension_numbers<[1], [0], [0], [1], [0, 0, 1, 1], [], []>} : vector<16x64xbf16>, vector<64x256xbf16>, vector<16x256xf32> -> vector<16x256xf32>
    %c6_i32 = arith.constant 6 : i32
    %280 = arith.addi %1, %c6_i32 : i32
    %c0_178 = arith.constant 0 : index
    %281 = arith.index_cast %280 : i32 to index
    %c0_179 = arith.constant 0 : index
    %c0_180 = arith.constant 0 : index
    %282 = vector.load %arg2[%c0_178, %281, %c0_179, %c0_180] : memref<1x16x16x256xbf16, #tpu.memory_space<vmem>>, vector<1x1x16x256xbf16>
    %283 = vector.shape_cast %282 : vector<1x1x16x256xbf16> to vector<1x16x256xbf16>
    %284 = vector.shape_cast %283 : vector<1x16x256xbf16> to vector<16x256xbf16>
    %285 = vector.broadcast %6 : vector<1x256xf32> to vector<16x256xf32>
    %286 = arith.mulf %279, %285 : vector<16x256xf32>
    %287 = vector.broadcast %7 : vector<1x256xf32> to vector<16x256xf32>
    %288 = arith.addf %286, %287 : vector<16x256xf32>
    %289 = arith.extf %284 : vector<16x256xbf16> to vector<16x256xf32>
    %290 = arith.addf %288, %289 : vector<16x256xf32>
    %cst_181 = arith.constant 0.000000e+00 : f32
    %291 = vector.broadcast %cst_181 : f32 to vector<16x256xf32>
    %292 = arith.maximumf %290, %291 : vector<16x256xf32>
    %293 = arith.truncf %292 : vector<16x256xf32> to vector<16x256xbf16>
    %c0_182 = arith.constant 0 : index
    %c6 = arith.constant 6 : index
    %c0_183 = arith.constant 0 : index
    %c0_184 = arith.constant 0 : index
    %294 = vector.load %arg8[%c0_182, %c6, %c0_183, %c0_184] : memref<1x8x16x256xbf16, #tpu.memory_space<vmem>>, vector<1x1x16x256xbf16>
    %295 = vector.shape_cast %294 : vector<1x1x16x256xbf16> to vector<16x256xbf16>
    %296 = vector.shape_cast %293 : vector<16x256xbf16> to vector<1x1x16x256xbf16>
    tpu.vector_store %arg8[%c0_182, %c6, %c0_183, %c0_184], %296 {strides = array<i32>} : memref<1x8x16x256xbf16, #tpu.memory_space<vmem>>, vector<1x1x16x256xbf16>,
    %297 = vector.extract_strided_slice %107 {offsets = [168, 0], sizes = [16, 64], strides = [1, 1]} : vector<192x64xf32> to vector<16x64xf32>
    %298 = vector.broadcast %4 : vector<1x64xf32> to vector<16x64xf32>
    %299 = arith.mulf %297, %298 : vector<16x64xf32>
    %300 = vector.broadcast %5 : vector<1x64xf32> to vector<16x64xf32>
    %301 = arith.addf %299, %300 : vector<16x64xf32>
    %cst_185 = arith.constant 0.000000e+00 : f32
    %302 = vector.broadcast %cst_185 : f32 to vector<16x64xf32>
    %303 = arith.maximumf %301, %302 : vector<16x64xf32>
    %304 = arith.truncf %303 : vector<16x64xf32> to vector<16x64xbf16>
    %c0_186 = arith.constant 0 : index
    %c0_187 = arith.constant 0 : index
    %305 = vector.load %arg5[%c0_186, %c0_187] : memref<64x256xbf16, #tpu.memory_space<vmem>>, vector<64x256xbf16>
    %cst_188 = arith.constant dense<0.000000e+00> : vector<16x256xf32>
    %306 = tpu.matmul %304, %305, %cst_188 {dimension_numbers = #tpu.dot_dimension_numbers<[1], [0], [0], [1], [0, 0, 1, 1], [], []>} : vector<16x64xbf16>, vector<64x256xbf16>, vector<16x256xf32> -> vector<16x256xf32>
    %c7_i32 = arith.constant 7 : i32
    %307 = arith.addi %1, %c7_i32 : i32
    %c0_189 = arith.constant 0 : index
    %308 = arith.index_cast %307 : i32 to index
    %c0_190 = arith.constant 0 : index
    %c0_191 = arith.constant 0 : index
    %309 = vector.load %arg2[%c0_189, %308, %c0_190, %c0_191] : memref<1x16x16x256xbf16, #tpu.memory_space<vmem>>, vector<1x1x16x256xbf16>
    %310 = vector.shape_cast %309 : vector<1x1x16x256xbf16> to vector<1x16x256xbf16>
    %311 = vector.shape_cast %310 : vector<1x16x256xbf16> to vector<16x256xbf16>
    %312 = vector.broadcast %6 : vector<1x256xf32> to vector<16x256xf32>
    %313 = arith.mulf %306, %312 : vector<16x256xf32>
    %314 = vector.broadcast %7 : vector<1x256xf32> to vector<16x256xf32>
    %315 = arith.addf %313, %314 : vector<16x256xf32>
    %316 = arith.extf %311 : vector<16x256xbf16> to vector<16x256xf32>
    %317 = arith.addf %315, %316 : vector<16x256xf32>
    %cst_192 = arith.constant 0.000000e+00 : f32
    %318 = vector.broadcast %cst_192 : f32 to vector<16x256xf32>
    %319 = arith.maximumf %317, %318 : vector<16x256xf32>
    %320 = arith.truncf %319 : vector<16x256xf32> to vector<16x256xbf16>
    %c0_193 = arith.constant 0 : index
    %c7 = arith.constant 7 : index
    %c0_194 = arith.constant 0 : index
    %c0_195 = arith.constant 0 : index
    %321 = vector.load %arg8[%c0_193, %c7, %c0_194, %c0_195] : memref<1x8x16x256xbf16, #tpu.memory_space<vmem>>, vector<1x1x16x256xbf16>
    %322 = vector.shape_cast %321 : vector<1x1x16x256xbf16> to vector<16x256xbf16>
    %323 = vector.shape_cast %320 : vector<16x256xbf16> to vector<1x1x16x256xbf16>
    tpu.vector_store %arg8[%c0_193, %c7, %c0_194, %c0_195], %323 {strides = array<i32>} : memref<1x8x16x256xbf16, #tpu.memory_space<vmem>>, vector<1x1x16x256xbf16>,
    return
  }
  func.func @transform_0(%arg0: i32, %arg1: i32) -> (i32, i32, i32, i32) {
    %c0_i32 = arith.constant 0 : i32
    %c0_i32_0 = arith.constant 0 : i32
    %c0_i32_1 = arith.constant 0 : i32
    %c0_i32_2 = arith.constant 0 : i32
    return %arg0, %c0_i32, %c0_i32_0, %c0_i32_1 : i32, i32, i32, i32
  }
  func.func @transform_1(%arg0: i32, %arg1: i32) -> (i32, i32) {
    %c0_i32 = arith.constant 0 : i32
    %c0_i32_0 = arith.constant 0 : i32
    %c0_i32_1 = arith.constant 0 : i32
    return %c0_i32, %c0_i32_0 : i32, i32
  }
  func.func @transform_2(%arg0: i32, %arg1: i32) -> (i32, i32, i32, i32) {
    %c0_i32 = arith.constant 0 : i32
    %c0_i32_0 = arith.constant 0 : i32
    %c0_i32_1 = arith.constant 0 : i32
    %c0_i32_2 = arith.constant 0 : i32
    %c0_i32_3 = arith.constant 0 : i32
    return %c0_i32, %c0_i32_0, %c0_i32_1, %c0_i32_2 : i32, i32, i32, i32
  }
  func.func @transform_3(%arg0: i32, %arg1: i32) -> (i32, i32) {
    %c0_i32 = arith.constant 0 : i32
    %c0_i32_0 = arith.constant 0 : i32
    %c0_i32_1 = arith.constant 0 : i32
    return %c0_i32, %c0_i32_0 : i32, i32
  }
  func.func @transform_4(%arg0: i32, %arg1: i32) -> (i32, i32) {
    %c0_i32 = arith.constant 0 : i32
    %c0_i32_0 = arith.constant 0 : i32
    %c0_i32_1 = arith.constant 0 : i32
    return %c0_i32, %c0_i32_0 : i32, i32
  }
  func.func @transform_5(%arg0: i32, %arg1: i32) -> (i32, i32) {
    %c0_i32 = arith.constant 0 : i32
    %c0_i32_0 = arith.constant 0 : i32
    %c0_i32_1 = arith.constant 0 : i32
    return %c0_i32, %c0_i32_0 : i32, i32
  }
  func.func @transform_6(%arg0: i32, %arg1: i32) -> (i32, i32, i32, i32) {
    %c0_i32 = arith.constant 0 : i32
    %c0_i32_0 = arith.constant 0 : i32
    %c0_i32_1 = arith.constant 0 : i32
    return %arg0, %arg1, %c0_i32, %c0_i32_0 : i32, i32, i32, i32
  }
}

</mosaic_0001>

<llo_original>
// kernel: tpu_custom_call.1
$region0: #{tpu_custom_call.1}
  #allocation0 [shape = 'u32[]', space=smem, size = 0x4, offset = 0x4, fixed_abs, tag = 'smem constant byte address 0x4 - core index']
  #allocation1 [shape = 'u32[144,128]{1,0:T(1,128)}', space=vmem, size = 0x12000, scoped, tag = 'internal scratch']
  #allocation2 [shape = 'bf16[264,64]{1,0:T(8,128)(2,1)}', space=vmem, size = 0x10800, scoped, tag = 'scratch operand']
  %s0 = inlined_call_operand.hbm [shape: bf16[2,16,16,256], index: 0, kind: input, shape index: {}]
  %s1 = inlined_call_operand.vmem [shape: bf16[256,64], index: 1, kind: input, shape index: {}]
  %s2 = inlined_call_operand.hbm [shape: bf16[3,3,64,64], index: 2, kind: input, shape index: {}]
  %s3 = inlined_call_operand.vmem [shape: bf16[64,256], index: 3, kind: input, shape index: {}]
  %s4 = inlined_call_operand.vmem [shape: f32[4,64], index: 4, kind: input, shape index: {}]
  %s5 = inlined_call_operand.vmem [shape: f32[2,256], index: 5, kind: input, shape index: {}]
  %s6 = inlined_call_operand.hbm [shape: bf16[2,16,16,256], index: 6, kind: output, shape index: {}]
  %s7 = sld [smem:[#allocation0]]
  $region81: #{tpu_custom_call.1} parent=0
    _
  %s9 = ssub.s32 1, %s7
  %s10 = scalar_select 0, %s9, %s7
  $region1: #{tpu_custom_call.1} parent=0
    #allocation3 [shape = 'u8[262144]{0}', space=vmem, size = 0x40000, scoped, tag = 'input window, operand 0']
    #allocation4 [shape = 's32[2]{0}', space=sflag, size = 0x8, scoped, tag = 'scoped memory for tpu_custom_call.1']
    #allocation5 [shape = 's32[2]{0}', space=sflag, size = 0x8, scoped, tag = 'scoped memory for tpu_custom_call.1']
    #allocation6 [shape = 'u8[147456]{0}', space=vmem, size = 0x24000, scoped, tag = 'input window, operand 2, single buffered']
    #allocation7 [shape = 's32[1]{0}', space=sflag, size = 0x4, scoped, tag = 'scoped memory for tpu_custom_call.1']
    #allocation8 [shape = 'u8[131072]{0}', space=vmem, size = 0x20000, scoped, tag = 'output window, operand 0']
    %11 = vsyncpa [#allocation4], 0
    %s12 = scalar_lea.sflag [#allocation4], 1
    %13 = vsyncpa %s12, 0
    %14 = vsyncpa [#allocation7], 0
    %15 = vsyncpa [#allocation5], 0
    %s16 = scalar_lea.sflag [#allocation5], 1
    %17 = vsyncpa %s16, 0
    loop: start=0, step=1, limit=6
    $region2: #{tpu_custom_call.1} parent=1 // loop_pre_header
      _
    $region3: #{tpu_custom_call.1} parent=1 // loop_header
      %s19 = sphi 0, %s23
      %p20 = scmp.ge.s32.totalorder %s19, 6
      %s26 = sphi 0, %s38
      %s27 = sphi 0, %s34
      %s28 = sphi 0, %s26
      %s29 = sphi 0, %s27
      %s30 = sphi 0, %s28
      %s31 = sphi 0, %s29
      %s41 = sphi 0, %s43
      %s44 = sphi 0, %s41
      %s45 = sphi 0, %s44
      %s61 = sphi 0, %s45
      %s65 = sphi 0, %s65
      %s67 = sphi 0, %s65
      %s68 = sphi 0, %s67
      %s82 = sphi 0, %s68
      %s86 = sphi 0, %s86
      %s88 = sphi 0, %s86
      %s89 = sphi 0, %s88
      %s103 = sphi 0, %s89
      %s107 = sphi 0, %s107
      %s109 = sphi 0, %s107
      %s110 = sphi 0, %s109
      %s124 = sphi 0, %s110
      %s128 = sphi 0, %s128
      %s130 = sphi 0, %s128
      %s131 = sphi 0, %s130
      %s145 = sphi 0, %s131
      %s149 = sphi 0, %s149
      %s151 = sphi 0, %s149
      %s152 = sphi 0, %s151
      %s166 = sphi 0, %s152
      %s174 = sphi 0, %s176
      %s177 = sphi 0, %s174
      %s178 = sphi 0, %s177
      %s194 = sphi 0, %s178
    $region4: #{tpu_custom_call.1} parent=1 // loop_header_branch
      %22 = sbr.rel (%p20) target = $region8
    $region5: #{tpu_custom_call.1} parent=1 // loop_body
      %s24 = ssub.s32 %s19, 1
      %s25 = ssub.s32 %s19, 2
      %s32 = sadd.s32 1, %s27
      %p33 = scmp.ge.s32.totalorder %s32, 2
      %s34 = scalar_select %p33, 0, %s32
      %s35 = sadd.s32 1, %s26
      %s36 = scalar_select %p33, %s35, %s26
      %p37 = scmp.ge.s32.totalorder %s36, 2
      %s38 = scalar_select %p37, 0, %s36
      %s39 = ssub.s32 %s26, %s38
      %p40 = scmp.eq.s32.totalorder %s39, 0
      %s42 = sadd.s32 %s41, 1
      %s43 = scalar_select %p40, %s41, %s42
      %p46 = pneg %p40
      %p47 = scmp.eq.s32.totalorder %s19, 3
      %p48 = por %p46, %p47
      %p49 = scmp.ne.s32.totalorder %s41, %s44
      %p50 = scmp.eq.s32.totalorder %s19, 0
      %p51 = por %p49, %p50
      %p52 = scmp.ne.s32.totalorder %s41, %s44
      %p53 = scmp.eq.s32.totalorder %s24, 3
      %p54 = por %p52, %p53
      %p55 = scmp.ne.s32.totalorder %s44, %s45
      %p56 = scmp.eq.s32.totalorder %s24, 0
      %p57 = por %p55, %p56
      %p58 = scmp.ne.s32.totalorder %s44, %s45
      %p59 = scmp.eq.s32.totalorder %s25, 3
      %p60 = por %p58, %p59
      %p62 = scmp.ne.s32.totalorder %s45, %s61
      %p63 = scmp.eq.s32.totalorder %s25, 0
      %p64 = por %p62, %p63
      %s66 = sadd.s32 %s65, 1
      %p69 = scmp.eq.s32.totalorder %s19, 3
      %p70 = scmp.ne.s32.totalorder %s65, %s67
      %p71 = scmp.eq.s32.totalorder %s19, 0
      %p72 = por %p70, %p71
      %p73 = scmp.ne.s32.totalorder %s65, %s67
      %p74 = scmp.eq.s32.totalorder %s24, 3
      %p75 = por %p73, %p74
      %p76 = scmp.ne.s32.totalorder %s67, %s68
      %p77 = scmp.eq.s32.totalorder %s24, 0
      %p78 = por %p76, %p77
      %p79 = scmp.ne.s32.totalorder %s67, %s68
      %p80 = scmp.eq.s32.totalorder %s25, 3
      %p81 = por %p79, %p80
      %p83 = scmp.ne.s32.totalorder %s68, %s82
      %p84 = scmp.eq.s32.totalorder %s25, 0
      %p85 = por %p83, %p84
      %s87 = sadd.s32 %s86, 1
      %p90 = scmp.eq.s32.totalorder %s19, 3
      %p91 = scmp.ne.s32.totalorder %s86, %s88
      %p92 = scmp.eq.s32.totalorder %s19, 0
      %p93 = por %p91, %p92
      %p94 = scmp.ne.s32.totalorder %s86, %s88
      %p95 = scmp.eq.s32.totalorder %s24, 3
      %p96 = por %p94, %p95
      %p97 = scmp.ne.s32.totalorder %s88, %s89
      %p98 = scmp.eq.s32.totalorder %s24, 0
      %p99 = por %p97, %p98
      %p100 = scmp.ne.s32.totalorder %s88, %s89
      %p101 = scmp.eq.s32.totalorder %s25, 3
      %p102 = por %p100, %p101
      %p104 = scmp.ne.s32.totalorder %s89, %s103
      %p105 = scmp.eq.s32.totalorder %s25, 0
      %p106 = por %p104, %p105
      %s108 = sadd.s32 %s107, 1
      %p111 = scmp.eq.s32.totalorder %s19, 3
      %p112 = scmp.ne.s32.totalorder %s107, %s109
      %p113 = scmp.eq.s32.totalorder %s19, 0
      %p114 = por %p112, %p113
      %p115 = scmp.ne.s32.totalorder %s107, %s109
      %p116 = scmp.eq.s32.totalorder %s24, 3
      %p117 = por %p115, %p116
      %p118 = scmp.ne.s32.totalorder %s109, %s110
      %p119 = scmp.eq.s32.totalorder %s24, 0
      %p120 = por %p118, %p119
      %p121 = scmp.ne.s32.totalorder %s109, %s110
      %p122 = scmp.eq.s32.totalorder %s25, 3
      %p123 = por %p121, %p122
      %p125 = scmp.ne.s32.totalorder %s110, %s124
      %p126 = scmp.eq.s32.totalorder %s25, 0
      %p127 = por %p125, %p126
      %s129 = sadd.s32 %s128, 1
      %p132 = scmp.eq.s32.totalorder %s19, 3
      %p133 = scmp.ne.s32.totalorder %s128, %s130
      %p134 = scmp.eq.s32.totalorder %s19, 0
      %p135 = por %p133, %p134
      %p136 = scmp.ne.s32.totalorder %s128, %s130
      %p137 = scmp.eq.s32.totalorder %s24, 3
      %p138 = por %p136, %p137
      %p139 = scmp.ne.s32.totalorder %s130, %s131
      %p140 = scmp.eq.s32.totalorder %s24, 0
      %p141 = por %p139, %p140
      %p142 = scmp.ne.s32.totalorder %s130, %s131
      %p143 = scmp.eq.s32.totalorder %s25, 3
      %p144 = por %p142, %p143
      %p146 = scmp.ne.s32.totalorder %s131, %s145
      %p147 = scmp.eq.s32.totalorder %s25, 0
      %p148 = por %p146, %p147
      %s150 = sadd.s32 %s149, 1
      %p153 = scmp.eq.s32.totalorder %s19, 3
      %p154 = scmp.ne.s32.totalorder %s149, %s151
      %p155 = scmp.eq.s32.totalorder %s19, 0
      %p156 = por %p154, %p155
      %p157 = scmp.ne.s32.totalorder %s149, %s151
      %p158 = scmp.eq.s32.totalorder %s24, 3
      %p159 = por %p157, %p158
      %p160 = scmp.ne.s32.totalorder %s151, %s152
      %p161 = scmp.eq.s32.totalorder %s24, 0
      %p162 = por %p160, %p161
      %p163 = scmp.ne.s32.totalorder %s151, %s152
      %p164 = scmp.eq.s32.totalorder %s25, 3
      %p165 = por %p163, %p164
      %p167 = scmp.ne.s32.totalorder %s152, %s166
      %p168 = scmp.eq.s32.totalorder %s25, 0
      %p169 = por %p167, %p168
      %s170 = ssub.s32 %s26, %s38
      %s171 = ssub.s32 %s27, %s34
      %s172 = sor.u32 %s170, %s171
      %p173 = scmp.eq.s32.totalorder %s172, 0
      %s175 = sadd.s32 %s174, 1
      %s176 = scalar_select %p173, %s174, %s175
      %p179 = pneg %p173
      %p180 = scmp.eq.s32.totalorder %s19, 3
      %p181 = por %p179, %p180
      %p182 = scmp.ne.s32.totalorder %s174, %s177
      %p183 = scmp.eq.s32.totalorder %s19, 0
      %p184 = por %p182, %p183
      %p185 = scmp.ne.s32.totalorder %s174, %s177
      %p186 = scmp.eq.s32.totalorder %s24, 3
      %p187 = por %p185, %p186
      %p188 = scmp.ne.s32.totalorder %s177, %s178
      %p189 = scmp.eq.s32.totalorder %s24, 0
      %p190 = por %p188, %p189
      %p191 = scmp.ne.s32.totalorder %s177, %s178
      %p192 = scmp.eq.s32.totalorder %s25, 3
      %p193 = por %p191, %p192
      %p195 = scmp.ne.s32.totalorder %s178, %s194
      %p196 = scmp.eq.s32.totalorder %s25, 0
      %p197 = por %p195, %p196
      %p198 = scmp.le.s32.totalorder 1, %s19
      %p199 = scmp.lt.s32.totalorder %s19, 5
      %p200 = pnand %p198, %p199
      %p201 = pneg %p200
      // Predicated region
      $region9: #{tpu_custom_call.1} parent=5 // pred_check
        _
      $region10: #{tpu_custom_call.1} parent=5 // pred_check_branch
        %203 = sbr.rel (%p200) target = $region12
      $region11: #{tpu_custom_call.1} parent=5 // pred_region
        %s204 = ssub.s32 %s19, 1
        // Predicated region
        $region13: #{tpu_custom_call.1} parent=11 // pred_check
          %p205 = pneg %p78
        $region14: #{tpu_custom_call.1} parent=11 // pred_check_branch
          %207 = sbr.rel (%p205) target = $region16
        $region15: #{tpu_custom_call.1} parent=11 // pred_region
          _
        $region16: #{tpu_custom_call.1} parent=11 // pred_fallthru
          _
        // Predicated region
        $region17: #{tpu_custom_call.1} parent=11 // pred_check
          %p208 = pneg %p99
        $region18: #{tpu_custom_call.1} parent=11 // pred_check_branch
          %210 = sbr.rel (%p208) target = $region20
        $region19: #{tpu_custom_call.1} parent=11 // pred_region
          %s212 = ssub.s32 4608, 4608
          %213 = vsyncadd [#allocation7], %s212
          %s214 = sshll.u32 [#allocation6], 4
          %s215 = int_to_ptr.vmem [resolvable:$true] %s214
          %220 = dma.hbm_to_vmem [thread:$0]  %s2, 4608, %s215, [#allocation7], 64, 64, 4
        $region20: #{tpu_custom_call.1} parent=11 // pred_fallthru
          _
        // Predicated region
        $region21: #{tpu_custom_call.1} parent=11 // pred_check
          %p221 = pneg %p120
        $region22: #{tpu_custom_call.1} parent=11 // pred_check_branch
          %223 = sbr.rel (%p221) target = $region24
        $region23: #{tpu_custom_call.1} parent=11 // pred_region
          _
        $region24: #{tpu_custom_call.1} parent=11 // pred_fallthru
          _
        // Predicated region
        $region25: #{tpu_custom_call.1} parent=11 // pred_check
          %p224 = pneg %p141
        $region26: #{tpu_custom_call.1} parent=11 // pred_check_branch
          %226 = sbr.rel (%p224) target = $region28
        $region27: #{tpu_custom_call.1} parent=11 // pred_region
          _
        $region28: #{tpu_custom_call.1} parent=11 // pred_fallthru
          _
        // Predicated region
        $region29: #{tpu_custom_call.1} parent=11 // pred_check
          %p227 = pneg %p162
        $region30: #{tpu_custom_call.1} parent=11 // pred_check_branch
          %229 = sbr.rel (%p227) target = $region32
        $region31: #{tpu_custom_call.1} parent=11 // pred_region
          _
        $region32: #{tpu_custom_call.1} parent=11 // pred_fallthru
          _
      $region12: #{tpu_custom_call.1} parent=5 // pred_fallthru
        _
      %p230 = scmp.lt.s32.totalorder %s19, 4
      // Predicated region
      $region33: #{tpu_custom_call.1} parent=5 // pred_check
        %p231 = pneg %p230
      $region34: #{tpu_custom_call.1} parent=5 // pred_check_branch
        %233 = sbr.rel (%p231) target = $region36
      $region35: #{tpu_custom_call.1} parent=5 // pred_region
        // Predicated region
        $region37: #{tpu_custom_call.1} parent=35 // pred_check
          %p234 = pneg %p51
        $region38: #{tpu_custom_call.1} parent=35 // pred_check_branch
          %236 = sbr.rel (%p234) target = $region40
        $region39: #{tpu_custom_call.1} parent=35 // pred_region
          %s237 = sand.u32 %s41, 1
          %s238 = scalar_lea.sflag [#allocation4], %s237
          %s239 = sand.u32 %s41, 1
          %s240 = smul.addr %s239, 256
          %s241 = scalar_lea.vmem [#allocation3], %s240
          %s243 = ssub.s32 4096, 4096
          %244 = vsyncadd %s238, %s243
          %s245 = smul.addr %s26, 64
          %s246 = smul.addr %s245, 64
          %s247 = scalar_lea.hbm %s0, %s246
          %s248 = sshll.u32 %s241, 4
          %s249 = int_to_ptr.vmem [resolvable:$true] %s248
          %254 = dma.hbm_to_vmem [thread:$0]  %s247, 4096, %s249, %s238, 128, 128, 8
        $region40: #{tpu_custom_call.1} parent=35 // pred_fallthru
          _
      $region36: #{tpu_custom_call.1} parent=5 // pred_fallthru
        _
      %p255 = scmp.le.s32.totalorder 1, %s19
      %p256 = scmp.lt.s32.totalorder %s19, 5
      %p257 = pnand %p255, %p256
      %p258 = pneg %p257
      // Predicated region
      $region41: #{tpu_custom_call.1} parent=5 // pred_check
        _
      $region42: #{tpu_custom_call.1} parent=5 // pred_check_branch
        %260 = sbr.rel (%p257) target = $region44
      $region43: #{tpu_custom_call.1} parent=5 // pred_region
        %s261 = ssub.s32 %s19, 1
        %s262 = sand.u32 %s44, 1
        %s263 = scalar_lea.sflag [#allocation4], %s262
        %s264 = sand.u32 %s44, 1
        %s265 = smul.addr %s264, 256
        %s266 = scalar_lea.vmem [#allocation3], %s265
        // Predicated region
        $region45: #{tpu_custom_call.1} parent=43 // pred_check
          %p267 = pneg %p57
        $region46: #{tpu_custom_call.1} parent=43 // pred_check_branch
          %269 = sbr.rel (%p267) target = $region48
        $region47: #{tpu_custom_call.1} parent=43 // pred_region
          %270 = dma.done %s263, 4096
        $region48: #{tpu_custom_call.1} parent=43 // pred_fallthru
          _
        // Predicated region
        $region49: #{tpu_custom_call.1} parent=43 // pred_check
          %p271 = pneg %p99
        $region50: #{tpu_custom_call.1} parent=43 // pred_check_branch
          %273 = sbr.rel (%p271) target = $region52
        $region51: #{tpu_custom_call.1} parent=43 // pred_region
          %274 = dma.done [#allocation7], 4608
        $region52: #{tpu_custom_call.1} parent=43 // pred_fallthru
          _
        %s275 = sand.u32 %s44, 1
        %s276 = scalar_lea.sflag [#allocation4], %s275
        %s277 = sand.u32 %s44, 1
        %s278 = smul.addr %s277, 256
        %s279 = scalar_lea.vmem [#allocation3], %s278
        %p280 = pneg %p57
        %p281 = pneg %p54
        %p282 = pneg %p78
        %p283 = pneg %p75
        %p284 = pneg %p99
        %p285 = pneg %p96
        %p286 = pneg %p120
        %p287 = pneg %p117
        %p288 = pneg %p141
        %p289 = pneg %p138
        %p290 = pneg %p162
        %p291 = pneg %p159
        %p292 = pneg %p190
        %p293 = pneg %p187
        %s294 = sand.u32 %s177, 1
        %s295 = scalar_lea.sflag [#allocation5], %s294
        %s296 = sand.u32 %s177, 1
        %s297 = smul.addr %s296, 128
        %s298 = scalar_lea.vmem [#allocation8], %s297
        %s299 = smul.u32 8, %s29
        %s301 = smul.u32 %s29, 8
        %v302 = vld [vmem:[%s4] sm:$0x1]
        %v303 = vld [vmem:[%s4 + $0x1] sm:$0x1]
        %v304 = vld [vmem:[%s4 + $0x2] sm:$0x1]
        %v305 = vld [vmem:[%s4 + $0x3] sm:$0x1]
        %v306 = vld [vmem:[%s5] ss:$2 sm:$0x3]
        %s307 = scalar_lea.vmem %s5, 1
        %v308 = vld [vmem:[%s307] ss:$2 sm:$0x3]
        %vm309 = vcmask 516096
        %vm310 = vsmask.f32 256
        %vm311 = vmand %vm309, %vm310
        %v312 = vld [vmem:[#allocation2] sm:$0x1]
        %v313 = vsel %vm311, 0, %v312
        %314 = vst [vmem:[#allocation2] sm:$0x1] %v313
        %vm315 = vcmask 519168
        %vm316 = vsmask.f32 7938
        %vm317 = vmand %vm315, %vm316
        %v318 = vld [vmem:[#allocation2 + $0x8] sm:$0xf]
        %v319 = vsel %vm317, 0, %v318
        %320 = vst [vmem:[#allocation2 + $0x8] sm:$0xf] %v319
        %v321 = vld [vmem:[#allocation2 + $0xc] sm:$0x1]
        %v322 = vsel %vm311, 0, %v321
        %323 = vst [vmem:[#allocation2 + $0xc] sm:$0x1] %v322
        %v324 = vld [vmem:[#allocation2 + $0x14] sm:$0xf]
        %v325 = vsel %vm317, 0, %v324
        %326 = vst [vmem:[#allocation2 + $0x14] sm:$0xf] %v325
        %v327 = vld [vmem:[#allocation2 + $0x18] sm:$0x1]
        %v328 = vsel %vm311, 0, %v327
        %329 = vst [vmem:[#allocation2 + $0x18] sm:$0x1] %v328
        %v330 = vld [vmem:[#allocation2 + $0x20] sm:$0xf]
        %v331 = vsel %vm317, 0, %v330
        %332 = vst [vmem:[#allocation2 + $0x20] sm:$0xf] %v331
        %v333 = vld [vmem:[#allocation2 + $0x24] sm:$0x1]
        %v334 = vsel %vm311, 0, %v333
        %335 = vst [vmem:[#allocation2 + $0x24] sm:$0x1] %v334
        %v336 = vld [vmem:[#allocation2 + $0x2c] sm:$0xf]
        %v337 = vsel %vm317, 0, %v336
        %338 = vst [vmem:[#allocation2 + $0x2c] sm:$0xf] %v337
        %v339 = vld [vmem:[#allocation2 + $0x30] sm:$0x1]
        %v340 = vsel %vm311, 0, %v339
        %341 = vst [vmem:[#allocation2 + $0x30] sm:$0x1] %v340
        %v342 = vld [vmem:[#allocation2 + $0x38] sm:$0xf]
        %v343 = vsel %vm317, 0, %v342
        %344 = vst [vmem:[#allocation2 + $0x38] sm:$0xf] %v343
        %v345 = vld [vmem:[#allocation2 + $0x3c] sm:$0x1]
        %v346 = vsel %vm311, 0, %v345
        %347 = vst [vmem:[#allocation2 + $0x3c] sm:$0x1] %v346
        %v348 = vld [vmem:[#allocation2 + $0x44] sm:$0xf]
        %v349 = vsel %vm317, 0, %v348
        %350 = vst [vmem:[#allocation2 + $0x44] sm:$0xf] %v349
        %v351 = vld [vmem:[#allocation2 + $0x48] sm:$0x1]
        %v352 = vsel %vm311, 0, %v351
        %353 = vst [vmem:[#allocation2 + $0x48] sm:$0x1] %v352
        %v354 = vld [vmem:[#allocation2 + $0x50] sm:$0xf]
        %v355 = vsel %vm317, 0, %v354
        %356 = vst [vmem:[#allocation2 + $0x50] sm:$0xf] %v355
        %v357 = vld [vmem:[#allocation2 + $0x54] sm:$0x1]
        %v358 = vsel %vm311, 0, %v357
        %359 = vst [vmem:[#allocation2 + $0x54] sm:$0x1] %v358
        %v360 = vld [vmem:[#allocation2 + $0x5c] sm:$0xf]
        %v361 = vsel %vm317, 0, %v360
        %362 = vst [vmem:[#allocation2 + $0x5c] sm:$0xf] %v361
        %v363 = vld [vmem:[#allocation2 + $0x60] sm:$0x1]
        %v364 = vsel %vm311, 0, %v363
        %365 = vst [vmem:[#allocation2 + $0x60] sm:$0x1] %v364
        %v366 = vld [vmem:[#allocation2 + $0x68] sm:$0xf]
        %v367 = vsel %vm317, 0, %v366
        %368 = vst [vmem:[#allocation2 + $0x68] sm:$0xf] %v367
        %v369 = vld [vmem:[#allocation2 + $0x6c] sm:$0x1]
        %v370 = vsel %vm311, 0, %v369
        %371 = vst [vmem:[#allocation2 + $0x6c] sm:$0x1] %v370
        %v372 = vld [vmem:[#allocation2 + $0x74] sm:$0xf]
        %v373 = vsel %vm317, 0, %v372
        %374 = vst [vmem:[#allocation2 + $0x74] sm:$0xf] %v373
        %v375 = vld [vmem:[#allocation2 + $0x78] sm:$0x1]
        %v376 = vsel %vm311, 0, %v375
        %377 = vst [vmem:[#allocation2 + $0x78] sm:$0x1] %v376
        %s378 = smul.u32 %s301, 4
        %s379 = smul.addr %s378, 4
        %s380 = scalar_lea.vmem %s266, %s379 [#allocation3]
        %v381 = vld [vmem:[%s380] sm:$0xff]
        %v382 = vld [vmem:[%s380 + $0x8] sm:$0xff]
        %v383 = vld [vmem:[%s380 + $0x10] sm:$0xff]
        %v384 = vld [vmem:[%s380 + $0x18] sm:$0xff]
        %v385 = vld [vmem:[%s380 + $0x20] sm:$0xff]
        %v386 = vld [vmem:[%s380 + $0x28] sm:$0xff]
        %v387 = vld [vmem:[%s380 + $0x30] sm:$0xff]
        %v388 = vld [vmem:[%s380 + $0x38] sm:$0xff]
        %v389 = vld [vmem:[%s380 + $0x40] sm:$0xff]
        %v390 = vld [vmem:[%s380 + $0x48] sm:$0xff]
        %v391 = vld [vmem:[%s380 + $0x50] sm:$0xff]
        %v392 = vld [vmem:[%s380 + $0x58] sm:$0xff]
        %v393 = vld [vmem:[%s380 + $0x60] sm:$0xff]
        %v394 = vld [vmem:[%s380 + $0x68] sm:$0xff]
        %v395 = vld [vmem:[%s380 + $0x70] sm:$0xff]
        %v396 = vld [vmem:[%s380 + $0x78] sm:$0xff]
        %v397 = vld [vmem:[%s1] sm:$0xf]
        %v398 = vld [vmem:[%s1 + $0x4] sm:$0xf]
        %v399 = vld [vmem:[%s1 + $0x8] sm:$0xf]
        %v400 = vld [vmem:[%s1 + $0xc] sm:$0xf]
        %v401 = vld [vmem:[%s1 + $0x10] sm:$0xf]
        %v402 = vld [vmem:[%s1 + $0x14] sm:$0xf]
        %v403 = vld [vmem:[%s1 + $0x18] sm:$0xf]
        %v404 = vld [vmem:[%s1 + $0x1c] sm:$0xf]
        %v405 = vld [vmem:[%s1 + $0x20] sm:$0xf]
        %v406 = vld [vmem:[%s1 + $0x24] sm:$0xf]
        %v407 = vld [vmem:[%s1 + $0x28] sm:$0xf]
        %v408 = vld [vmem:[%s1 + $0x2c] sm:$0xf]
        %v409 = vld [vmem:[%s1 + $0x30] sm:$0xf]
        %v410 = vld [vmem:[%s1 + $0x34] sm:$0xf]
        %v411 = vld [vmem:[%s1 + $0x38] sm:$0xf]
        %v412 = vld [vmem:[%s1 + $0x3c] sm:$0xf]
        %v413 = vld [vmem:[%s1 + $0x40] sm:$0xf]
        %v414 = vld [vmem:[%s1 + $0x44] sm:$0xf]
        %v415 = vld [vmem:[%s1 + $0x48] sm:$0xf]
        %v416 = vld [vmem:[%s1 + $0x4c] sm:$0xf]
        %v417 = vld [vmem:[%s1 + $0x50] sm:$0xf]
        %v418 = vld [vmem:[%s1 + $0x54] sm:$0xf]
        %v419 = vld [vmem:[%s1 + $0x58] sm:$0xf]
        %v420 = vld [vmem:[%s1 + $0x5c] sm:$0xf]
        %v421 = vld [vmem:[%s1 + $0x60] sm:$0xf]
        %v422 = vld [vmem:[%s1 + $0x64] sm:$0xf]
        %v423 = vld [vmem:[%s1 + $0x68] sm:$0xf]
        %v424 = vld [vmem:[%s1 + $0x6c] sm:$0xf]
        %v425 = vld [vmem:[%s1 + $0x70] sm:$0xf]
        %v426 = vld [vmem:[%s1 + $0x74] sm:$0xf]
        %v427 = vld [vmem:[%s1 + $0x78] sm:$0xf]
        %v428 = vld [vmem:[%s1 + $0x7c] sm:$0xf]
        %v445 = vunpack.c.l.b16 %v381
        %v446 = vunpack.c.h.b16 %v381
        %v447 = vunpack.c.l.b16 %v382
        %v448 = vunpack.c.h.b16 %v382
        %v449 = vunpack.c.l.b16 %v383
        %v450 = vunpack.c.h.b16 %v383
        %v451 = vunpack.c.l.b16 %v384
        %v452 = vunpack.c.h.b16 %v384
        %v453 = vunpack.c.l.b16 %v385
        %v454 = vunpack.c.h.b16 %v385
        %v455 = vunpack.c.l.b16 %v386
        %v456 = vunpack.c.h.b16 %v386
        %v457 = vunpack.c.l.b16 %v387
        %v458 = vunpack.c.h.b16 %v387
        %v459 = vunpack.c.l.b16 %v388
        %v460 = vunpack.c.h.b16 %v388
        %v461 = vunpack.c.l.b16 %v389
        %v462 = vunpack.c.h.b16 %v389
        %v463 = vunpack.c.l.b16 %v390
        %v464 = vunpack.c.h.b16 %v390
        %v465 = vunpack.c.l.b16 %v391
        %v466 = vunpack.c.h.b16 %v391
        %v467 = vunpack.c.l.b16 %v392
        %v468 = vunpack.c.h.b16 %v392
        %v469 = vunpack.c.l.b16 %v393
        %v470 = vunpack.c.h.b16 %v393
        %v471 = vunpack.c.l.b16 %v394
        %v472 = vunpack.c.h.b16 %v394
        %v473 = vunpack.c.l.b16 %v395
        %v474 = vunpack.c.h.b16 %v395
        %v475 = vunpack.c.l.b16 %v396
        %v476 = vunpack.c.h.b16 %v396
        %v477 = vpack.c.b16 %v447, %v445
        %v478 = vpack.c.b16 %v448, %v446
        %v479 = vpack.c.b16 %v451, %v449
        %v480 = vpack.c.b16 %v452, %v450
        %v481 = vpack.c.b16 %v455, %v453
        %v482 = vpack.c.b16 %v456, %v454
        %v483 = vpack.c.b16 %v459, %v457
        %v484 = vpack.c.b16 %v460, %v458
        %v485 = vpack.c.b16 %v463, %v461
        %v486 = vpack.c.b16 %v464, %v462
        %v487 = vpack.c.b16 %v467, %v465
        %v488 = vpack.c.b16 %v468, %v466
        %v489 = vpack.c.b16 %v471, %v469
        %v490 = vpack.c.b16 %v472, %v470
        %v491 = vpack.c.b16 %v475, %v473
        %v492 = vpack.c.b16 %v476, %v474
        %v541 = vunpack.c.l.b16 %v397
        %v542 = vunpack.c.l.b16 %v398
        %v543 = vunpack.c.l.b16 %v399
        %v544 = vunpack.c.l.b16 %v400
        %v545 = vunpack.c.l.b16 %v401
        %v546 = vunpack.c.l.b16 %v402
        %v547 = vunpack.c.l.b16 %v403
        %v548 = vunpack.c.l.b16 %v404
        %v549 = vunpack.c.l.b16 %v405
        %v550 = vunpack.c.l.b16 %v406
        %v551 = vunpack.c.l.b16 %v407
        %v552 = vunpack.c.l.b16 %v408
        %v553 = vunpack.c.l.b16 %v409
        %v554 = vunpack.c.l.b16 %v410
        %v555 = vunpack.c.l.b16 %v411
        %v556 = vunpack.c.l.b16 %v412
        %v557 = vunpack.c.l.b16 %v413
        %v558 = vunpack.c.l.b16 %v414
        %v559 = vunpack.c.l.b16 %v415
        %v560 = vunpack.c.l.b16 %v416
        %v561 = vunpack.c.l.b16 %v417
        %v562 = vunpack.c.l.b16 %v418
        %v563 = vunpack.c.l.b16 %v419
        %v564 = vunpack.c.l.b16 %v420
        %v565 = vunpack.c.l.b16 %v421
        %v566 = vunpack.c.l.b16 %v422
        %v567 = vunpack.c.l.b16 %v423
        %v568 = vunpack.c.l.b16 %v424
        %v569 = vunpack.c.l.b16 %v425
        %v570 = vunpack.c.l.b16 %v426
        %v571 = vunpack.c.l.b16 %v427
        %v572 = vunpack.c.l.b16 %v428
        %v573 = vpack.c.b16 %v542, %v541
        %v574 = vpack.c.b16 %v544, %v543
        %v575 = vpack.c.b16 %v546, %v545
        %v576 = vpack.c.b16 %v548, %v547
        %v577 = vpack.c.b16 %v550, %v549
        %v578 = vpack.c.b16 %v552, %v551
        %v579 = vpack.c.b16 %v554, %v553
        %v580 = vpack.c.b16 %v556, %v555
        %v581 = vpack.c.b16 %v558, %v557
        %v582 = vpack.c.b16 %v560, %v559
        %v583 = vpack.c.b16 %v562, %v561
        %v584 = vpack.c.b16 %v564, %v563
        %v585 = vpack.c.b16 %v566, %v565
        %v586 = vpack.c.b16 %v568, %v567
        %v587 = vpack.c.b16 %v570, %v569
        %v588 = vpack.c.b16 %v572, %v571
        %605 = vmatprep.subr.bf16.mxu0 0
        %606 = vmatpush1.bf16.msra.mxu0 %v580
        %607 = vmatprep.subr.bf16.mxu0 0
        %608 = vmatpush1.bf16.msra.mxu0 %v579
        %609 = vmatprep.subr.bf16.mxu0 0
        %610 = vmatpush1.bf16.msra.mxu0 %v578
        %611 = vmatprep.subr.bf16.mxu0 0
        %612 = vmatpush1.bf16.msra.mxu0 %v577
        %613 = vmatprep.subr.bf16.mxu0 0
        %614 = vmatpush1.bf16.msra.mxu0 %v576
        %615 = vmatprep.subr.bf16.mxu0 0
        %616 = vmatpush1.bf16.msra.mxu0 %v575
        %617 = vmatprep.subr.bf16.mxu0 0
        %618 = vmatpush1.bf16.msra.mxu0 %v574
        %619 = vmatprep.subr.bf16.mxu0 0
        %620 = vmatpush1.bf16.msra.mxu0 %v573
        %621 = vmatprep.subr.bf16.mxu0 0
        %622 = vmatpush2.bf16.msra.mxu0 %v588
        %623 = vmatprep.subr.bf16.mxu0 0
        %624 = vmatpush2.bf16.msra.mxu0 %v587
        %625 = vmatprep.subr.bf16.mxu0 0
        %626 = vmatpush2.bf16.msra.mxu0 %v586
        %627 = vmatprep.subr.bf16.mxu0 0
        %628 = vmatpush2.bf16.msra.mxu0 %v585
        %629 = vmatprep.subr.bf16.mxu0 0
        %630 = vmatpush2.bf16.msra.mxu0 %v584
        %631 = vmatprep.subr.bf16.mxu0 0
        %632 = vmatpush2.bf16.msra.mxu0 %v583
        %633 = vmatprep.subr.bf16.mxu0 0
        %634 = vmatpush2.bf16.msra.mxu0 %v582
        %635 = vmatprep.subr.bf16.mxu0 0
        %636 = vmatpush2.bf16.msra.mxu0 %v581
        %637 = vmatprep.mubr.bf16.mxu0 %v478
        %638 = vmatmul.mubr.bf16.gmra.mxu0 %v477
        %v639 = vpop.f32.mrf.mxu0
        %v640 = vadd.f32 0.0, %v639
        %v641 = vpop.f32.mrf.mxu0
        %v642 = vpop.f32.mrf.mxu0
        %v643 = vadd.f32 0.0, %v642
        %v644 = vpop.f32.mrf.mxu0
        %645 = vmatprep.mubr.bf16.mxu0 %v480
        %646 = vmatmul.mubr.bf16.gmra.mxu0 %v479
        %v647 = vpop.f32.mrf.mxu0
        %v648 = vadd.f32 0.0, %v647
        %v649 = vpop.f32.mrf.mxu0
        %v650 = vpop.f32.mrf.mxu0
        %v651 = vadd.f32 0.0, %v650
        %v652 = vpop.f32.mrf.mxu0
        %653 = vmatprep.mubr.bf16.mxu0 %v482
        %654 = vmatmul.mubr.bf16.gmra.mxu0 %v481
        %v655 = vpop.f32.mrf.mxu0
        %v656 = vadd.f32 0.0, %v655
        %v657 = vpop.f32.mrf.mxu0
        %v658 = vpop.f32.mrf.mxu0
        %v659 = vadd.f32 0.0, %v658
        %v660 = vpop.f32.mrf.mxu0
        %661 = vmatprep.mubr.bf16.mxu0 %v484
        %662 = vmatmul.mubr.bf16.gmra.mxu0 %v483
        %v663 = vpop.f32.mrf.mxu0
        %v664 = vadd.f32 0.0, %v663
        %v665 = vpop.f32.mrf.mxu0
        %v666 = vpop.f32.mrf.mxu0
        %v667 = vadd.f32 0.0, %v666
        %v668 = vpop.f32.mrf.mxu0
        %669 = vmatprep.mubr.bf16.mxu0 %v486
        %670 = vmatmul.mubr.bf16.gmra.mxu0 %v485
        %v671 = vpop.f32.mrf.mxu0
        %v672 = vadd.f32 0.0, %v671
        %v673 = vpop.f32.mrf.mxu0
        %v674 = vpop.f32.mrf.mxu0
        %v675 = vadd.f32 0.0, %v674
        %v676 = vpop.f32.mrf.mxu0
        %677 = vmatprep.mubr.bf16.mxu0 %v488
        %678 = vmatmul.mubr.bf16.gmra.mxu0 %v487
        %v679 = vpop.f32.mrf.mxu0
        %v680 = vadd.f32 0.0, %v679
        %v681 = vpop.f32.mrf.mxu0
        %v682 = vpop.f32.mrf.mxu0
        %v683 = vadd.f32 0.0, %v682
        %v684 = vpop.f32.mrf.mxu0
        %685 = vmatprep.mubr.bf16.mxu0 %v490
        %686 = vmatmul.mubr.bf16.gmra.mxu0 %v489
        %v687 = vpop.f32.mrf.mxu0
        %v688 = vadd.f32 0.0, %v687
        %v689 = vpop.f32.mrf.mxu0
        %v690 = vpop.f32.mrf.mxu0
        %v691 = vadd.f32 0.0, %v690
        %v692 = vpop.f32.mrf.mxu0
        %693 = vmatprep.mubr.bf16.mxu0 %v492
        %694 = vmatmul.mubr.bf16.gmra.mxu0 %v491
        %v695 = vpop.f32.mrf.mxu0
        %v696 = vadd.f32 0.0, %v695
        %v697 = vpop.f32.mrf.mxu0
        %v698 = vpop.f32.mrf.mxu0
        %v699 = vadd.f32 0.0, %v698
        %v700 = vpop.f32.mrf.mxu0
        %701 = vdwg.mxu0
        %v702 = vlaneseq
        %v703 = vshrl.u32 %v702, 7
        %v704 = vsub.s32 0, %v703
        %v705 = vrot.slane %v302, %v704
        %v706 = vmul.f32 %v640, %v705
        %v707 = vmul.f32 %v643, %v705
        %v708 = vmul.f32 %v648, %v705
        %v709 = vmul.f32 %v651, %v705
        %v710 = vmul.f32 %v656, %v705
        %v711 = vmul.f32 %v659, %v705
        %v712 = vmul.f32 %v664, %v705
        %v713 = vmul.f32 %v667, %v705
        %v714 = vmul.f32 %v672, %v705
        %v715 = vmul.f32 %v675, %v705
        %v716 = vmul.f32 %v680, %v705
        %v717 = vmul.f32 %v683, %v705
        %v718 = vmul.f32 %v688, %v705
        %v719 = vmul.f32 %v691, %v705
        %v720 = vmul.f32 %v696, %v705
        %v721 = vmul.f32 %v699, %v705
        %v722 = vlaneseq
        %v723 = vshrl.u32 %v722, 7
        %v724 = vsub.s32 0, %v723
        %v725 = vrot.slane %v303, %v724
        %v726 = vadd.f32 %v706, %v725
        %v727 = vadd.f32 %v707, %v725
        %v728 = vadd.f32 %v708, %v725
        %v729 = vadd.f32 %v709, %v725
        %v730 = vadd.f32 %v710, %v725
        %v731 = vadd.f32 %v711, %v725
        %v732 = vadd.f32 %v712, %v725
        %v733 = vadd.f32 %v713, %v725
        %v734 = vadd.f32 %v714, %v725
        %v735 = vadd.f32 %v715, %v725
        %v736 = vadd.f32 %v716, %v725
        %v737 = vadd.f32 %v717, %v725
        %v738 = vadd.f32 %v718, %v725
        %v739 = vadd.f32 %v719, %v725
        %v740 = vadd.f32 %v720, %v725
        %v741 = vadd.f32 %v721, %v725
        %v742 = vmax.f32 %v726, 0.0
        %v743 = vmax.f32 %v727, 0.0
        %v744 = vmax.f32 %v728, 0.0
        %v745 = vmax.f32 %v729, 0.0
        %v746 = vmax.f32 %v730, 0.0
        %v747 = vmax.f32 %v731, 0.0
        %v748 = vmax.f32 %v732, 0.0
        %v749 = vmax.f32 %v733, 0.0
        %v750 = vmax.f32 %v734, 0.0
        %v751 = vmax.f32 %v735, 0.0
        %v752 = vmax.f32 %v736, 0.0
        %v753 = vmax.f32 %v737, 0.0
        %v754 = vmax.f32 %v738, 0.0
        %v755 = vmax.f32 %v739, 0.0
        %v756 = vmax.f32 %v740, 0.0
        %v757 = vmax.f32 %v741, 0.0
        %v758 = vpack.c.bf16 %v743, %v742
        %v759 = vpack.c.bf16 %v745, %v744
        %v760 = vpack.c.bf16 %v747, %v746
        %v761 = vpack.c.bf16 %v749, %v748
        %v762 = vpack.c.bf16 %v751, %v750
        %v763 = vpack.c.bf16 %v753, %v752
        %v764 = vpack.c.bf16 %v755, %v754
        %v765 = vpack.c.bf16 %v757, %v756
        %v767 = vunpack.c.l.b16 %v758
        %v768 = vunpack.c.h.b16 %v758
        %v769 = vpack.c.b16 %v767, %v767
        %v770 = vpack.c.b16 %v768, %v768
        %vm771 = vsmask.f32 4368
        %vm772 = vmor %vm310, %vm771
        %v774 = vshrl.u32 %v769, 16
        %v776 = vrot.slane %v774, 7
        %v777 = vshll.u32 %v769, 16
        %v779 = vor.u32 %v776, %v777
        %v780 = vrot.slane %v776, 4
        %v782 = vshrl.u32 %v770, 16
        %v784 = vrot.slane %v782, 7
        %v785 = vshll.u32 %v770, 16
        %v787 = vor.u32 %v784, %v785
        %v788 = vsel %vm772, %v780, %v787
        %v789 = vrot.slane %v784, 4
        %v793 = vld [vmem:[#allocation2 + $0xc] sm:$0xf]
        %v794 = vsel %vm317, %v779, %v793
        %795 = vst [vmem:[#allocation2 + $0xc] sm:$0xf] %v794
        %vm796 = vcmask 519168
        %797 = vst.msk [vmem:[#allocation2 + $0x10] sm:$0xf] %vm796, %v788
        %v798 = vld [vmem:[#allocation2 + $0x14] sm:$0x1]
        %v799 = vsel %vm311, %v789, %v798
        %800 = vst [vmem:[#allocation2 + $0x14] sm:$0x1] %v799
        %v802 = vunpack.c.l.b16 %v759
        %v803 = vunpack.c.h.b16 %v759
        %v804 = vpack.c.b16 %v802, %v802
        %v805 = vpack.c.b16 %v803, %v803
        %v807 = vshrl.u32 %v804, 16
        %v809 = vrot.slane %v807, 7
        %v810 = vshll.u32 %v804, 16
        %v812 = vor.u32 %v809, %v810
        %v813 = vrot.slane %v809, 4
        %v815 = vshrl.u32 %v805, 16
        %v817 = vrot.slane %v815, 7
        %v818 = vshll.u32 %v805, 16
        %v820 = vor.u32 %v817, %v818
        %v821 = vsel %vm772, %v813, %v820
        %v822 = vrot.slane %v817, 4
        %v826 = vld [vmem:[#allocation2 + $0x18] sm:$0xf]
        %v827 = vsel %vm317, %v812, %v826
        %828 = vst [vmem:[#allocation2 + $0x18] sm:$0xf] %v827
        %829 = vst.msk [vmem:[#allocation2 + $0x1c] sm:$0xf] %vm796, %v821
        %v830 = vld [vmem:[#allocation2 + $0x20] sm:$0x1]
        %v831 = vsel %vm311, %v822, %v830
        %832 = vst [vmem:[#allocation2 + $0x20] sm:$0x1] %v831
        %v834 = vunpack.c.l.b16 %v760
        %v835 = vunpack.c.h.b16 %v760
        %v836 = vpack.c.b16 %v834, %v834
        %v837 = vpack.c.b16 %v835, %v835
        %v839 = vshrl.u32 %v836, 16
        %v841 = vrot.slane %v839, 7
        %v842 = vshll.u32 %v836, 16
        %v844 = vor.u32 %v841, %v842
        %v845 = vrot.slane %v841, 4
        %v847 = vshrl.u32 %v837, 16
        %v849 = vrot.slane %v847, 7
        %v850 = vshll.u32 %v837, 16
        %v852 = vor.u32 %v849, %v850
        %v853 = vsel %vm772, %v845, %v852
        %v854 = vrot.slane %v849, 4
        %v858 = vld [vmem:[#allocation2 + $0x24] sm:$0xf]
        %v859 = vsel %vm317, %v844, %v858
        %860 = vst [vmem:[#allocation2 + $0x24] sm:$0xf] %v859
        %861 = vst.msk [vmem:[#allocation2 + $0x28] sm:$0xf] %vm796, %v853
        %v862 = vld [vmem:[#allocation2 + $0x2c] sm:$0x1]
        %v863 = vsel %vm311, %v854, %v862
        %864 = vst [vmem:[#allocation2 + $0x2c] sm:$0x1] %v863
        %v866 = vunpack.c.l.b16 %v761
        %v867 = vunpack.c.h.b16 %v761
        %v868 = vpack.c.b16 %v866, %v866
        %v869 = vpack.c.b16 %v867, %v867
        %v871 = vshrl.u32 %v868, 16
        %v873 = vrot.slane %v871, 7
        %v874 = vshll.u32 %v868, 16
        %v876 = vor.u32 %v873, %v874
        %v877 = vrot.slane %v873, 4
        %v879 = vshrl.u32 %v869, 16
        %v881 = vrot.slane %v879, 7
        %v882 = vshll.u32 %v869, 16
        %v884 = vor.u32 %v881, %v882
        %v885 = vsel %vm772, %v877, %v884
        %v886 = vrot.slane %v881, 4
        %v890 = vld [vmem:[#allocation2 + $0x30] sm:$0xf]
        %v891 = vsel %vm317, %v876, %v890
        %892 = vst [vmem:[#allocation2 + $0x30] sm:$0xf] %v891
        %893 = vst.msk [vmem:[#allocation2 + $0x34] sm:$0xf] %vm796, %v885
        %v894 = vld [vmem:[#allocation2 + $0x38] sm:$0x1]
        %v895 = vsel %vm311, %v886, %v894
        %896 = vst [vmem:[#allocation2 + $0x38] sm:$0x1] %v895
        %v898 = vunpack.c.l.b16 %v762
        %v899 = vunpack.c.h.b16 %v762
        %v900 = vpack.c.b16 %v898, %v898
        %v901 = vpack.c.b16 %v899, %v899
        %v903 = vshrl.u32 %v900, 16
        %v905 = vrot.slane %v903, 7
        %v906 = vshll.u32 %v900, 16
        %v908 = vor.u32 %v905, %v906
        %v909 = vrot.slane %v905, 4
        %v911 = vshrl.u32 %v901, 16
        %v913 = vrot.slane %v911, 7
        %v914 = vshll.u32 %v901, 16
        %v916 = vor.u32 %v913, %v914
        %v917 = vsel %vm772, %v909, %v916
        %v918 = vrot.slane %v913, 4
        %v922 = vld [vmem:[#allocation2 + $0x3c] sm:$0xf]
        %v923 = vsel %vm317, %v908, %v922
        %924 = vst [vmem:[#allocation2 + $0x3c] sm:$0xf] %v923
        %925 = vst.msk [vmem:[#allocation2 + $0x40] sm:$0xf] %vm796, %v917
        %v926 = vld [vmem:[#allocation2 + $0x44] sm:$0x1]
        %v927 = vsel %vm311, %v918, %v926
        %928 = vst [vmem:[#allocation2 + $0x44] sm:$0x1] %v927
        %v930 = vunpack.c.l.b16 %v763
        %v931 = vunpack.c.h.b16 %v763
        %v932 = vpack.c.b16 %v930, %v930
        %v933 = vpack.c.b16 %v931, %v931
        %v935 = vshrl.u32 %v932, 16
        %v937 = vrot.slane %v935, 7
        %v938 = vshll.u32 %v932, 16
        %v940 = vor.u32 %v937, %v938
        %v941 = vrot.slane %v937, 4
        %v943 = vshrl.u32 %v933, 16
        %v945 = vrot.slane %v943, 7
        %v946 = vshll.u32 %v933, 16
        %v948 = vor.u32 %v945, %v946
        %v949 = vsel %vm772, %v941, %v948
        %v950 = vrot.slane %v945, 4
        %v954 = vld [vmem:[#allocation2 + $0x48] sm:$0xf]
        %v955 = vsel %vm317, %v940, %v954
        %956 = vst [vmem:[#allocation2 + $0x48] sm:$0xf] %v955
        %957 = vst.msk [vmem:[#allocation2 + $0x4c] sm:$0xf] %vm796, %v949
        %v958 = vld [vmem:[#allocation2 + $0x50] sm:$0x1]
        %v959 = vsel %vm311, %v950, %v958
        %960 = vst [vmem:[#allocation2 + $0x50] sm:$0x1] %v959
        %v962 = vunpack.c.l.b16 %v764
        %v963 = vunpack.c.h.b16 %v764
        %v964 = vpack.c.b16 %v962, %v962
        %v965 = vpack.c.b16 %v963, %v963
        %v967 = vshrl.u32 %v964, 16
        %v969 = vrot.slane %v967, 7
        %v970 = vshll.u32 %v964, 16
        %v972 = vor.u32 %v969, %v970
        %v973 = vrot.slane %v969, 4
        %v975 = vshrl.u32 %v965, 16
        %v977 = vrot.slane %v975, 7
        %v978 = vshll.u32 %v965, 16
        %v980 = vor.u32 %v977, %v978
        %v981 = vsel %vm772, %v973, %v980
        %v982 = vrot.slane %v977, 4
        %v986 = vld [vmem:[#allocation2 + $0x54] sm:$0xf]
        %v987 = vsel %vm317, %v972, %v986
        %988 = vst [vmem:[#allocation2 + $0x54] sm:$0xf] %v987
        %989 = vst.msk [vmem:[#allocation2 + $0x58] sm:$0xf] %vm796, %v981
        %v990 = vld [vmem:[#allocation2 + $0x5c] sm:$0x1]
        %v991 = vsel %vm311, %v982, %v990
        %992 = vst [vmem:[#allocation2 + $0x5c] sm:$0x1] %v991
        %v994 = vunpack.c.l.b16 %v765
        %v995 = vunpack.c.h.b16 %v765
        %v996 = vpack.c.b16 %v994, %v994
        %v997 = vpack.c.b16 %v995, %v995
        %v999 = vshrl.u32 %v996, 16
        %v1001 = vrot.slane %v999, 7
        %v1002 = vshll.u32 %v996, 16
        %v1004 = vor.u32 %v1001, %v1002
        %v1005 = vrot.slane %v1001, 4
        %v1007 = vshrl.u32 %v997, 16
        %v1009 = vrot.slane %v1007, 7
        %v1010 = vshll.u32 %v997, 16
        %v1012 = vor.u32 %v1009, %v1010
        %v1013 = vsel %vm772, %v1005, %v1012
        %v1014 = vrot.slane %v1009, 4
        %v1018 = vld [vmem:[#allocation2 + $0x60] sm:$0xf]
        %v1019 = vsel %vm317, %v1004, %v1018
        %1020 = vst [vmem:[#allocation2 + $0x60] sm:$0xf] %v1019
        %1021 = vst.msk [vmem:[#allocation2 + $0x64] sm:$0xf] %vm796, %v1013
        %v1022 = vld [vmem:[#allocation2 + $0x68] sm:$0x1]
        %v1023 = vsel %vm311, %v1014, %v1022
        %1024 = vst [vmem:[#allocation2 + $0x68] sm:$0x1] %v1023
        %p1025 = scmp.eq.s32.totalorder %s29, 0
        // Predicated region
        $region53: #{tpu_custom_call.1} parent=43 // pred_check
          %p1026 = pneg %p1025
        $region54: #{tpu_custom_call.1} parent=43 // pred_check_branch
          %1028 = sbr.rel (%p1026) target = $region56
        $region55: #{tpu_custom_call.1} parent=43 // pred_region
          %v1029 = vld [vmem:[#allocation2] sm:$0xf]
          %v1030 = vsel %vm317, 0, %v1029
          %1031 = vst [vmem:[#allocation2] sm:$0xf] %v1030
          %1032 = vst.msk [vmem:[#allocation2 + $0x4] sm:$0xf] %vm796, 0
          %v1033 = vld [vmem:[#allocation2 + $0x8] sm:$0x1]
          %v1034 = vsel %vm311, 0, %v1033
          %1035 = vst [vmem:[#allocation2 + $0x8] sm:$0x1] %v1034
        $region56: #{tpu_custom_call.1} parent=43 // pred_fallthru
          _
        %p1036 = scmp.gt.s32.totalorder %s29, 0
        // Predicated region
        $region57: #{tpu_custom_call.1} parent=43 // pred_check
          %p1037 = pneg %p1036
        $region58: #{tpu_custom_call.1} parent=43 // pred_check_branch
          %1039 = sbr.rel (%p1037) target = $region60
        $region59: #{tpu_custom_call.1} parent=43 // pred_region
          %s1040 = ssub.s32 %s301, 1
          %s1041 = smul.u32 %s1040, 4
          %s1042 = smul.addr %s1041, 4
          %s1043 = scalar_lea.vmem %s266, %s1042 [#allocation3]
          %v1044 = vld [vmem:[%s1043] sm:$0xff]
          %v1045 = vld [vmem:[%s1043 + $0x8] sm:$0xff]
          %v1046 = vld [vmem:[%s1] sm:$0xf]
          %v1047 = vld [vmem:[%s1 + $0x4] sm:$0xf]
          %v1048 = vld [vmem:[%s1 + $0x8] sm:$0xf]
          %v1049 = vld [vmem:[%s1 + $0xc] sm:$0xf]
          %v1050 = vld [vmem:[%s1 + $0x10] sm:$0xf]
          %v1051 = vld [vmem:[%s1 + $0x14] sm:$0xf]
          %v1052 = vld [vmem:[%s1 + $0x18] sm:$0xf]
          %v1053 = vld [vmem:[%s1 + $0x1c] sm:$0xf]
          %v1054 = vld [vmem:[%s1 + $0x20] sm:$0xf]
          %v1055 = vld [vmem:[%s1 + $0x24] sm:$0xf]
          %v1056 = vld [vmem:[%s1 + $0x28] sm:$0xf]
          %v1057 = vld [vmem:[%s1 + $0x2c] sm:$0xf]
          %v1058 = vld [vmem:[%s1 + $0x30] sm:$0xf]
          %v1059 = vld [vmem:[%s1 + $0x34] sm:$0xf]
          %v1060 = vld [vmem:[%s1 + $0x38] sm:$0xf]
          %v1061 = vld [vmem:[%s1 + $0x3c] sm:$0xf]
          %v1062 = vld [vmem:[%s1 + $0x40] sm:$0xf]
          %v1063 = vld [vmem:[%s1 + $0x44] sm:$0xf]
          %v1064 = vld [vmem:[%s1 + $0x48] sm:$0xf]
          %v1065 = vld [vmem:[%s1 + $0x4c] sm:$0xf]
          %v1066 = vld [vmem:[%s1 + $0x50] sm:$0xf]
          %v1067 = vld [vmem:[%s1 + $0x54] sm:$0xf]
          %v1068 = vld [vmem:[%s1 + $0x58] sm:$0xf]
          %v1069 = vld [vmem:[%s1 + $0x5c] sm:$0xf]
          %v1070 = vld [vmem:[%s1 + $0x60] sm:$0xf]
          %v1071 = vld [vmem:[%s1 + $0x64] sm:$0xf]
          %v1072 = vld [vmem:[%s1 + $0x68] sm:$0xf]
          %v1073 = vld [vmem:[%s1 + $0x6c] sm:$0xf]
          %v1074 = vld [vmem:[%s1 + $0x70] sm:$0xf]
          %v1075 = vld [vmem:[%s1 + $0x74] sm:$0xf]
          %v1076 = vld [vmem:[%s1 + $0x78] sm:$0xf]
          %v1077 = vld [vmem:[%s1 + $0x7c] sm:$0xf]
          %v1080 = vunpack.c.l.b16 %v1044
          %v1081 = vunpack.c.h.b16 %v1044
          %v1082 = vunpack.c.l.b16 %v1045
          %v1083 = vunpack.c.h.b16 %v1045
          %v1084 = vpack.c.b16 %v1082, %v1080
          %v1085 = vpack.c.b16 %v1083, %v1081
          %v1120 = vunpack.c.l.b16 %v1046
          %v1121 = vunpack.c.l.b16 %v1047
          %v1122 = vunpack.c.l.b16 %v1048
          %v1123 = vunpack.c.l.b16 %v1049
          %v1124 = vunpack.c.l.b16 %v1050
          %v1125 = vunpack.c.l.b16 %v1051
          %v1126 = vunpack.c.l.b16 %v1052
          %v1127 = vunpack.c.l.b16 %v1053
          %v1128 = vunpack.c.l.b16 %v1054
          %v1129 = vunpack.c.l.b16 %v1055
          %v1130 = vunpack.c.l.b16 %v1056
          %v1131 = vunpack.c.l.b16 %v1057
          %v1132 = vunpack.c.l.b16 %v1058
          %v1133 = vunpack.c.l.b16 %v1059
          %v1134 = vunpack.c.l.b16 %v1060
          %v1135 = vunpack.c.l.b16 %v1061
          %v1136 = vunpack.c.l.b16 %v1062
          %v1137 = vunpack.c.l.b16 %v1063
          %v1138 = vunpack.c.l.b16 %v1064
          %v1139 = vunpack.c.l.b16 %v1065
          %v1140 = vunpack.c.l.b16 %v1066
          %v1141 = vunpack.c.l.b16 %v1067
          %v1142 = vunpack.c.l.b16 %v1068
          %v1143 = vunpack.c.l.b16 %v1069
          %v1144 = vunpack.c.l.b16 %v1070
          %v1145 = vunpack.c.l.b16 %v1071
          %v1146 = vunpack.c.l.b16 %v1072
          %v1147 = vunpack.c.l.b16 %v1073
          %v1148 = vunpack.c.l.b16 %v1074
          %v1149 = vunpack.c.l.b16 %v1075
          %v1150 = vunpack.c.l.b16 %v1076
          %v1151 = vunpack.c.l.b16 %v1077
          %v1152 = vpack.c.b16 %v1121, %v1120
          %v1153 = vpack.c.b16 %v1123, %v1122
          %v1154 = vpack.c.b16 %v1125, %v1124
          %v1155 = vpack.c.b16 %v1127, %v1126
          %v1156 = vpack.c.b16 %v1129, %v1128
          %v1157 = vpack.c.b16 %v1131, %v1130
          %v1158 = vpack.c.b16 %v1133, %v1132
          %v1159 = vpack.c.b16 %v1135, %v1134
          %v1160 = vpack.c.b16 %v1137, %v1136
          %v1161 = vpack.c.b16 %v1139, %v1138
          %v1162 = vpack.c.b16 %v1141, %v1140
          %v1163 = vpack.c.b16 %v1143, %v1142
          %v1164 = vpack.c.b16 %v1145, %v1144
          %v1165 = vpack.c.b16 %v1147, %v1146
          %v1166 = vpack.c.b16 %v1149, %v1148
          %v1167 = vpack.c.b16 %v1151, %v1150
          %1184 = vmatprep.subr.bf16.mxu0 0
          %1185 = vmatpush1.bf16.msra.mxu0 %v1159
          %1186 = vmatprep.subr.bf16.mxu0 0
          %1187 = vmatpush1.bf16.msra.mxu0 %v1158
          %1188 = vmatprep.subr.bf16.mxu0 0
          %1189 = vmatpush1.bf16.msra.mxu0 %v1157
          %1190 = vmatprep.subr.bf16.mxu0 0
          %1191 = vmatpush1.bf16.msra.mxu0 %v1156
          %1192 = vmatprep.subr.bf16.mxu0 0
          %1193 = vmatpush1.bf16.msra.mxu0 %v1155
          %1194 = vmatprep.subr.bf16.mxu0 0
          %1195 = vmatpush1.bf16.msra.mxu0 %v1154
          %1196 = vmatprep.subr.bf16.mxu0 0
          %1197 = vmatpush1.bf16.msra.mxu0 %v1153
          %1198 = vmatprep.subr.bf16.mxu0 0
          %1199 = vmatpush1.bf16.msra.mxu0 %v1152
          %1200 = vmatprep.subr.bf16.mxu0 0
          %1201 = vmatpush2.bf16.msra.mxu0 %v1167
          %1202 = vmatprep.subr.bf16.mxu0 0
          %1203 = vmatpush2.bf16.msra.mxu0 %v1166
          %1204 = vmatprep.subr.bf16.mxu0 0
          %1205 = vmatpush2.bf16.msra.mxu0 %v1165
          %1206 = vmatprep.subr.bf16.mxu0 0
          %1207 = vmatpush2.bf16.msra.mxu0 %v1164
          %1208 = vmatprep.subr.bf16.mxu0 0
          %1209 = vmatpush2.bf16.msra.mxu0 %v1163
          %1210 = vmatprep.subr.bf16.mxu0 0
          %1211 = vmatpush2.bf16.msra.mxu0 %v1162
          %1212 = vmatprep.subr.bf16.mxu0 0
          %1213 = vmatpush2.bf16.msra.mxu0 %v1161
          %1214 = vmatprep.subr.bf16.mxu0 0
          %1215 = vmatpush2.bf16.msra.mxu0 %v1160
          %1216 = vmatprep.mubr.bf16.mxu0 %v1085
          %1217 = vmatmul.mubr.bf16.gmra.mxu0 %v1084
          %v1218 = vpop.f32.mrf.mxu0
          %v1219 = vadd.f32 0.0, %v1218
          %v1220 = vpop.f32.mrf.mxu0
          %v1221 = vpop.f32.mrf.mxu0
          %v1222 = vadd.f32 0.0, %v1221
          %v1223 = vpop.f32.mrf.mxu0
          %1224 = vdwg.mxu0
          %v1225 = vmul.f32 %v1219, %v705
          %v1226 = vmul.f32 %v1222, %v705
          %v1227 = vadd.f32 %v1225, %v725
          %v1228 = vadd.f32 %v1226, %v725
          %v1229 = vmax.f32 %v1227, 0.0
          %v1230 = vmax.f32 %v1228, 0.0
          %v1231 = vpack.c.bf16 %v1230, %v1229
          %v1233 = vunpack.c.l.b16 %v1231
          %v1234 = vunpack.c.h.b16 %v1231
          %v1235 = vpack.c.b16 %v1233, %v1233
          %v1236 = vpack.c.b16 %v1234, %v1234
          %v1238 = vshrl.u32 %v1235, 16
          %v1240 = vrot.slane %v1238, 7
          %v1241 = vshll.u32 %v1235, 16
          %v1243 = vor.u32 %v1240, %v1241
          %v1244 = vrot.slane %v1240, 4
          %v1246 = vshrl.u32 %v1236, 16
          %v1248 = vrot.slane %v1246, 7
          %v1249 = vshll.u32 %v1236, 16
          %v1251 = vor.u32 %v1248, %v1249
          %v1252 = vsel %vm772, %v1244, %v1251
          %v1253 = vrot.slane %v1248, 4
          %v1257 = vld [vmem:[#allocation2] sm:$0xf]
          %v1258 = vsel %vm317, %v1243, %v1257
          %1259 = vst [vmem:[#allocation2] sm:$0xf] %v1258
          %1260 = vst.msk [vmem:[#allocation2 + $0x4] sm:$0xf] %vm796, %v1252
          %v1261 = vld [vmem:[#allocation2 + $0x8] sm:$0x1]
          %v1262 = vsel %vm311, %v1253, %v1261
          %1263 = vst [vmem:[#allocation2 + $0x8] sm:$0x1] %v1262
        $region60: #{tpu_custom_call.1} parent=43 // pred_fallthru
          _
        %p1264 = scmp.eq.s32.totalorder %s29, 1
        // Predicated region
        $region61: #{tpu_custom_call.1} parent=43 // pred_check
          %p1265 = pneg %p1264
        $region62: #{tpu_custom_call.1} parent=43 // pred_check_branch
          %1267 = sbr.rel (%p1265) target = $region64
        $region63: #{tpu_custom_call.1} parent=43 // pred_region
          %v1268 = vld [vmem:[#allocation2 + $0x6c] sm:$0xf]
          %v1269 = vsel %vm317, 0, %v1268
          %1270 = vst [vmem:[#allocation2 + $0x6c] sm:$0xf] %v1269
          %1271 = vst.msk [vmem:[#allocation2 + $0x70] sm:$0xf] %vm796, 0
          %v1272 = vld [vmem:[#allocation2 + $0x74] sm:$0x1]
          %v1273 = vsel %vm311, 0, %v1272
          %1274 = vst [vmem:[#allocation2 + $0x74] sm:$0x1] %v1273
        $region64: #{tpu_custom_call.1} parent=43 // pred_fallthru
          _
        %p1275 = scmp.lt.s32.totalorder %s29, 1
        // Predicated region
        $region65: #{tpu_custom_call.1} parent=43 // pred_check
          %p1276 = pneg %p1275
        $region66: #{tpu_custom_call.1} parent=43 // pred_check_branch
          %1278 = sbr.rel (%p1276) target = $region68
        $region67: #{tpu_custom_call.1} parent=43 // pred_region
          %s1279 = sadd.s32 %s301, 8
          %s1280 = smul.u32 %s1279, 4
          %s1281 = smul.addr %s1280, 4
          %s1282 = scalar_lea.vmem %s266, %s1281 [#allocation3]
          %v1283 = vld [vmem:[%s1282] sm:$0xff]
          %v1284 = vld [vmem:[%s1282 + $0x8] sm:$0xff]
          %v1285 = vld [vmem:[%s1] sm:$0xf]
          %v1286 = vld [vmem:[%s1 + $0x4] sm:$0xf]
          %v1287 = vld [vmem:[%s1 + $0x8] sm:$0xf]
          %v1288 = vld [vmem:[%s1 + $0xc] sm:$0xf]
          %v1289 = vld [vmem:[%s1 + $0x10] sm:$0xf]
          %v1290 = vld [vmem:[%s1 + $0x14] sm:$0xf]
          %v1291 = vld [vmem:[%s1 + $0x18] sm:$0xf]
          %v1292 = vld [vmem:[%s1 + $0x1c] sm:$0xf]
          %v1293 = vld [vmem:[%s1 + $0x20] sm:$0xf]
          %v1294 = vld [vmem:[%s1 + $0x24] sm:$0xf]
          %v1295 = vld [vmem:[%s1 + $0x28] sm:$0xf]
          %v1296 = vld [vmem:[%s1 + $0x2c] sm:$0xf]
          %v1297 = vld [vmem:[%s1 + $0x30] sm:$0xf]
          %v1298 = vld [vmem:[%s1 + $0x34] sm:$0xf]
          %v1299 = vld [vmem:[%s1 + $0x38] sm:$0xf]
          %v1300 = vld [vmem:[%s1 + $0x3c] sm:$0xf]
          %v1301 = vld [vmem:[%s1 + $0x40] sm:$0xf]
          %v1302 = vld [vmem:[%s1 + $0x44] sm:$0xf]
          %v1303 = vld [vmem:[%s1 + $0x48] sm:$0xf]
          %v1304 = vld [vmem:[%s1 + $0x4c] sm:$0xf]
          %v1305 = vld [vmem:[%s1 + $0x50] sm:$0xf]
          %v1306 = vld [vmem:[%s1 + $0x54] sm:$0xf]
          %v1307 = vld [vmem:[%s1 + $0x58] sm:$0xf]
          %v1308 = vld [vmem:[%s1 + $0x5c] sm:$0xf]
          %v1309 = vld [vmem:[%s1 + $0x60] sm:$0xf]
          %v1310 = vld [vmem:[%s1 + $0x64] sm:$0xf]
          %v1311 = vld [vmem:[%s1 + $0x68] sm:$0xf]
          %v1312 = vld [vmem:[%s1 + $0x6c] sm:$0xf]
          %v1313 = vld [vmem:[%s1 + $0x70] sm:$0xf]
          %v1314 = vld [vmem:[%s1 + $0x74] sm:$0xf]
          %v1315 = vld [vmem:[%s1 + $0x78] sm:$0xf]
          %v1316 = vld [vmem:[%s1 + $0x7c] sm:$0xf]
          %v1319 = vunpack.c.l.b16 %v1283
          %v1320 = vunpack.c.h.b16 %v1283
          %v1321 = vunpack.c.l.b16 %v1284
          %v1322 = vunpack.c.h.b16 %v1284
          %v1323 = vpack.c.b16 %v1321, %v1319
          %v1324 = vpack.c.b16 %v1322, %v1320
          %v1359 = vunpack.c.l.b16 %v1285
          %v1360 = vunpack.c.l.b16 %v1286
          %v1361 = vunpack.c.l.b16 %v1287
          %v1362 = vunpack.c.l.b16 %v1288
          %v1363 = vunpack.c.l.b16 %v1289
          %v1364 = vunpack.c.l.b16 %v1290
          %v1365 = vunpack.c.l.b16 %v1291
          %v1366 = vunpack.c.l.b16 %v1292
          %v1367 = vunpack.c.l.b16 %v1293
          %v1368 = vunpack.c.l.b16 %v1294
          %v1369 = vunpack.c.l.b16 %v1295
          %v1370 = vunpack.c.l.b16 %v1296
          %v1371 = vunpack.c.l.b16 %v1297
          %v1372 = vunpack.c.l.b16 %v1298
          %v1373 = vunpack.c.l.b16 %v1299
          %v1374 = vunpack.c.l.b16 %v1300
          %v1375 = vunpack.c.l.b16 %v1301
          %v1376 = vunpack.c.l.b16 %v1302
          %v1377 = vunpack.c.l.b16 %v1303
          %v1378 = vunpack.c.l.b16 %v1304
          %v1379 = vunpack.c.l.b16 %v1305
          %v1380 = vunpack.c.l.b16 %v1306
          %v1381 = vunpack.c.l.b16 %v1307
          %v1382 = vunpack.c.l.b16 %v1308
          %v1383 = vunpack.c.l.b16 %v1309
          %v1384 = vunpack.c.l.b16 %v1310
          %v1385 = vunpack.c.l.b16 %v1311
          %v1386 = vunpack.c.l.b16 %v1312
          %v1387 = vunpack.c.l.b16 %v1313
          %v1388 = vunpack.c.l.b16 %v1314
          %v1389 = vunpack.c.l.b16 %v1315
          %v1390 = vunpack.c.l.b16 %v1316
          %v1391 = vpack.c.b16 %v1360, %v1359
          %v1392 = vpack.c.b16 %v1362, %v1361
          %v1393 = vpack.c.b16 %v1364, %v1363
          %v1394 = vpack.c.b16 %v1366, %v1365
          %v1395 = vpack.c.b16 %v1368, %v1367
          %v1396 = vpack.c.b16 %v1370, %v1369
          %v1397 = vpack.c.b16 %v1372, %v1371
          %v1398 = vpack.c.b16 %v1374, %v1373
          %v1399 = vpack.c.b16 %v1376, %v1375
          %v1400 = vpack.c.b16 %v1378, %v1377
          %v1401 = vpack.c.b16 %v1380, %v1379
          %v1402 = vpack.c.b16 %v1382, %v1381
          %v1403 = vpack.c.b16 %v1384, %v1383
          %v1404 = vpack.c.b16 %v1386, %v1385
          %v1405 = vpack.c.b16 %v1388, %v1387
          %v1406 = vpack.c.b16 %v1390, %v1389
          %1423 = vmatprep.subr.bf16.mxu0 0
          %1424 = vmatpush1.bf16.msra.mxu0 %v1398
          %1425 = vmatprep.subr.bf16.mxu0 0
          %1426 = vmatpush1.bf16.msra.mxu0 %v1397
          %1427 = vmatprep.subr.bf16.mxu0 0
          %1428 = vmatpush1.bf16.msra.mxu0 %v1396
          %1429 = vmatprep.subr.bf16.mxu0 0
          %1430 = vmatpush1.bf16.msra.mxu0 %v1395
          %1431 = vmatprep.subr.bf16.mxu0 0
          %1432 = vmatpush1.bf16.msra.mxu0 %v1394
          %1433 = vmatprep.subr.bf16.mxu0 0
          %1434 = vmatpush1.bf16.msra.mxu0 %v1393
          %1435 = vmatprep.subr.bf16.mxu0 0
          %1436 = vmatpush1.bf16.msra.mxu0 %v1392
          %1437 = vmatprep.subr.bf16.mxu0 0
          %1438 = vmatpush1.bf16.msra.mxu0 %v1391
          %1439 = vmatprep.subr.bf16.mxu0 0
          %1440 = vmatpush2.bf16.msra.mxu0 %v1406
          %1441 = vmatprep.subr.bf16.mxu0 0
          %1442 = vmatpush2.bf16.msra.mxu0 %v1405
          %1443 = vmatprep.subr.bf16.mxu0 0
          %1444 = vmatpush2.bf16.msra.mxu0 %v1404
          %1445 = vmatprep.subr.bf16.mxu0 0
          %1446 = vmatpush2.bf16.msra.mxu0 %v1403
          %1447 = vmatprep.subr.bf16.mxu0 0
          %1448 = vmatpush2.bf16.msra.mxu0 %v1402
          %1449 = vmatprep.subr.bf16.mxu0 0
          %1450 = vmatpush2.bf16.msra.mxu0 %v1401
          %1451 = vmatprep.subr.bf16.mxu0 0
          %1452 = vmatpush2.bf16.msra.mxu0 %v1400
          %1453 = vmatprep.subr.bf16.mxu0 0
          %1454 = vmatpush2.bf16.msra.mxu0 %v1399
          %1455 = vmatprep.mubr.bf16.mxu0 %v1324
          %1456 = vmatmul.mubr.bf16.gmra.mxu0 %v1323
          %v1457 = vpop.f32.mrf.mxu0
          %v1458 = vadd.f32 0.0, %v1457
          %v1459 = vpop.f32.mrf.mxu0
          %v1460 = vpop.f32.mrf.mxu0
          %v1461 = vadd.f32 0.0, %v1460
          %v1462 = vpop.f32.mrf.mxu0
          %1463 = vdwg.mxu0
          %v1464 = vmul.f32 %v1458, %v705
          %v1465 = vmul.f32 %v1461, %v705
          %v1466 = vadd.f32 %v1464, %v725
          %v1467 = vadd.f32 %v1465, %v725
          %v1468 = vmax.f32 %v1466, 0.0
          %v1469 = vmax.f32 %v1467, 0.0
          %v1470 = vpack.c.bf16 %v1469, %v1468
          %v1472 = vunpack.c.l.b16 %v1470
          %v1473 = vunpack.c.h.b16 %v1470
          %v1474 = vpack.c.b16 %v1472, %v1472
          %v1475 = vpack.c.b16 %v1473, %v1473
          %v1477 = vshrl.u32 %v1474, 16
          %v1479 = vrot.slane %v1477, 7
          %v1480 = vshll.u32 %v1474, 16
          %v1482 = vor.u32 %v1479, %v1480
          %v1483 = vrot.slane %v1479, 4
          %v1485 = vshrl.u32 %v1475, 16
          %v1487 = vrot.slane %v1485, 7
          %v1488 = vshll.u32 %v1475, 16
          %v1490 = vor.u32 %v1487, %v1488
          %v1491 = vsel %vm772, %v1483, %v1490
          %v1492 = vrot.slane %v1487, 4
          %v1496 = vld [vmem:[#allocation2 + $0x6c] sm:$0xf]
          %v1497 = vsel %vm317, %v1482, %v1496
          %1498 = vst [vmem:[#allocation2 + $0x6c] sm:$0xf] %v1497
          %1499 = vst.msk [vmem:[#allocation2 + $0x70] sm:$0xf] %vm796, %v1491
          %v1500 = vld [vmem:[#allocation2 + $0x74] sm:$0x1]
          %v1501 = vsel %vm311, %v1492, %v1500
          %1502 = vst [vmem:[#allocation2 + $0x74] sm:$0x1] %v1501
        $region68: #{tpu_custom_call.1} parent=43 // pred_fallthru
          _
        %v1503 = vld [vmem:[#allocation2] sm:$0xf]
        %v1504 = vld [vmem:[#allocation2 + $0x4] sm:$0xf]
        %v1505 = vld [vmem:[#allocation2 + $0x8] sm:$0xf]
        %v1506 = vld [vmem:[#allocation2 + $0xc] sm:$0xf]
        %v1507 = vld [vmem:[#allocation2 + $0x10] sm:$0xf]
        %v1508 = vld [vmem:[#allocation2 + $0x14] sm:$0xf]
        %v1509 = vld [vmem:[#allocation2 + $0x18] sm:$0xf]
        %v1510 = vld [vmem:[#allocation2 + $0x1c] sm:$0xf]
        %v1511 = vld [vmem:[#allocation2 + $0x20] sm:$0xf]
        %v1512 = vld [vmem:[#allocation2 + $0x24] sm:$0xf]
        %v1513 = vld [vmem:[#allocation2 + $0x28] sm:$0xf]
        %v1514 = vld [vmem:[#allocation2 + $0x2c] sm:$0xf]
        %v1515 = vld [vmem:[#allocation2 + $0x30] sm:$0xf]
        %v1516 = vld [vmem:[#allocation2 + $0x34] sm:$0xf]
        %v1517 = vld [vmem:[#allocation2 + $0x38] sm:$0xf]
        %v1518 = vld [vmem:[#allocation2 + $0x3c] sm:$0xf]
        %v1519 = vld [vmem:[#allocation2 + $0x40] sm:$0xf]
        %v1520 = vld [vmem:[#allocation2 + $0x44] sm:$0xf]
        %v1521 = vld [vmem:[#allocation2 + $0x48] sm:$0xf]
        %v1522 = vld [vmem:[#allocation2 + $0x4c] sm:$0xf]
        %v1523 = vld [vmem:[#allocation2 + $0x50] sm:$0xf]
        %v1524 = vld [vmem:[#allocation2 + $0x54] sm:$0xf]
        %v1525 = vld [vmem:[#allocation2 + $0x58] sm:$0xf]
        %v1526 = vld [vmem:[#allocation2 + $0x5c] sm:$0xf]
        %v1527 = vld [vmem:[#allocation6] sm:$0xf]
        %v1528 = vld [vmem:[#allocation6 + $0x4] sm:$0xf]
        %v1529 = vld [vmem:[#allocation6 + $0x8] sm:$0xf]
        %v1530 = vld [vmem:[#allocation6 + $0xc] sm:$0xf]
        %v1531 = vld [vmem:[#allocation6 + $0x10] sm:$0xf]
        %v1532 = vld [vmem:[#allocation6 + $0x14] sm:$0xf]
        %v1533 = vld [vmem:[#allocation6 + $0x18] sm:$0xf]
        %v1534 = vld [vmem:[#allocation6 + $0x1c] sm:$0xf]
        %v1535 = vld [vmem:[#allocation2 + $0x60] sm:$0x1]
        %s1536 = scalar_lea.vmem [#allocation6], 32
        %v1537 = vld [vmem:[%s1536] sm:$0xf]
        %v1538 = vld [vmem:[%s1536 + $0x4] sm:$0xf]
        %v1539 = vld [vmem:[%s1536 + $0x8] sm:$0xf]
        %v1540 = vld [vmem:[%s1536 + $0xc] sm:$0xf]
        %v1541 = vld [vmem:[%s1536 + $0x10] sm:$0xf]
        %v1542 = vld [vmem:[%s1536 + $0x14] sm:$0xf]
        %v1543 = vld [vmem:[%s1536 + $0x18] sm:$0xf]
        %v1544 = vld [vmem:[%s1536 + $0x1c] sm:$0xf]
        %v1570 = vunpack.c.l.b16 %v1503
        %v1571 = vunpack.c.l.b16 %v1504
        %v1572 = vunpack.c.l.b16 %v1505
        %v1573 = vunpack.c.l.b16 %v1506
        %v1574 = vunpack.c.l.b16 %v1507
        %v1575 = vunpack.c.l.b16 %v1508
        %v1576 = vunpack.c.l.b16 %v1509
        %v1577 = vunpack.c.l.b16 %v1510
        %v1578 = vunpack.c.l.b16 %v1511
        %v1579 = vunpack.c.l.b16 %v1512
        %v1580 = vunpack.c.l.b16 %v1513
        %v1581 = vunpack.c.l.b16 %v1514
        %v1582 = vunpack.c.l.b16 %v1515
        %v1583 = vunpack.c.l.b16 %v1516
        %v1584 = vunpack.c.l.b16 %v1517
        %v1585 = vunpack.c.l.b16 %v1518
        %v1586 = vunpack.c.l.b16 %v1519
        %v1587 = vunpack.c.l.b16 %v1520
        %v1588 = vunpack.c.l.b16 %v1521
        %v1589 = vunpack.c.l.b16 %v1522
        %v1590 = vunpack.c.l.b16 %v1523
        %v1591 = vunpack.c.l.b16 %v1524
        %v1592 = vunpack.c.l.b16 %v1525
        %v1593 = vunpack.c.l.b16 %v1526
        %v1594 = vunpack.c.l.b16 %v1535
        %v1595 = vpack.c.b16 %v1571, %v1570
        %v1596 = vpack.c.b16 %v1573, %v1572
        %v1597 = vpack.c.b16 %v1575, %v1574
        %v1598 = vpack.c.b16 %v1577, %v1576
        %v1599 = vpack.c.b16 %v1579, %v1578
        %v1600 = vpack.c.b16 %v1581, %v1580
        %v1601 = vpack.c.b16 %v1583, %v1582
        %v1602 = vpack.c.b16 %v1585, %v1584
        %v1603 = vpack.c.b16 %v1587, %v1586
        %v1604 = vpack.c.b16 %v1589, %v1588
        %v1605 = vpack.c.b16 %v1591, %v1590
        %v1606 = vpack.c.b16 %v1593, %v1592
        %v1607 = vpack.c.b16 %v1594, %v1594
        %vm1608 = vsmask.f32 7424
        %v1610 = vshrl.u32 %v1595, 16
        %v1612 = vshll.u32 %v1595, 16
        %v1614 = vrot.slane %v1612, 1
        %v1615 = vor.u32 %v1610, %v1614
        %v1617 = vshll.u32 %v1596, 16
        %v1619 = vrot.slane %v1617, 1
        %v1620 = vsel %vm1608, %v1615, %v1619
        %v1621 = vshrl.u32 %v1596, 16
        %v1623 = vor.u32 %v1621, %v1619
        %v1625 = vshll.u32 %v1597, 16
        %v1627 = vrot.slane %v1625, 1
        %v1628 = vsel %vm1608, %v1623, %v1627
        %v1629 = vshrl.u32 %v1597, 16
        %v1631 = vor.u32 %v1629, %v1627
        %v1633 = vshll.u32 %v1598, 16
        %v1635 = vrot.slane %v1633, 1
        %v1636 = vsel %vm1608, %v1631, %v1635
        %v1637 = vshrl.u32 %v1598, 16
        %v1639 = vor.u32 %v1637, %v1635
        %v1641 = vshll.u32 %v1599, 16
        %v1643 = vrot.slane %v1641, 1
        %v1644 = vsel %vm1608, %v1639, %v1643
        %v1645 = vshrl.u32 %v1599, 16
        %v1647 = vor.u32 %v1645, %v1643
        %v1649 = vshll.u32 %v1600, 16
        %v1651 = vrot.slane %v1649, 1
        %v1652 = vsel %vm1608, %v1647, %v1651
        %v1653 = vshrl.u32 %v1600, 16
        %v1655 = vor.u32 %v1653, %v1651
        %v1657 = vshll.u32 %v1601, 16
        %v1659 = vrot.slane %v1657, 1
        %v1660 = vsel %vm1608, %v1655, %v1659
        %v1661 = vshrl.u32 %v1601, 16
        %v1663 = vor.u32 %v1661, %v1659
        %v1665 = vshll.u32 %v1602, 16
        %v1667 = vrot.slane %v1665, 1
        %v1668 = vsel %vm1608, %v1663, %v1667
        %v1669 = vshrl.u32 %v1602, 16
        %v1671 = vor.u32 %v1669, %v1667
        %v1673 = vshll.u32 %v1603, 16
        %v1675 = vrot.slane %v1673, 1
        %v1676 = vsel %vm1608, %v1671, %v1675
        %v1677 = vshrl.u32 %v1603, 16
        %v1679 = vor.u32 %v1677, %v1675
        %v1681 = vshll.u32 %v1604, 16
        %v1683 = vrot.slane %v1681, 1
        %v1684 = vsel %vm1608, %v1679, %v1683
        %v1685 = vshrl.u32 %v1604, 16
        %v1687 = vor.u32 %v1685, %v1683
        %v1689 = vshll.u32 %v1605, 16
        %v1691 = vrot.slane %v1689, 1
        %v1692 = vsel %vm1608, %v1687, %v1691
        %v1693 = vshrl.u32 %v1605, 16
        %v1695 = vor.u32 %v1693, %v1691
        %v1697 = vshll.u32 %v1606, 16
        %v1699 = vrot.slane %v1697, 1
        %v1700 = vsel %vm1608, %v1695, %v1699
        %v1701 = vshrl.u32 %v1606, 16
        %v1703 = vor.u32 %v1701, %v1699
        %v1705 = vshll.u32 %v1607, 16
        %v1707 = vrot.slane %v1705, 1
        %v1708 = vsel %vm1608, %v1703, %v1707
        %v1717 = vunpack.c.l.b16 %v1537
        %v1718 = vunpack.c.l.b16 %v1538
        %v1719 = vunpack.c.l.b16 %v1539
        %v1720 = vunpack.c.l.b16 %v1540
        %v1721 = vunpack.c.l.b16 %v1541
        %v1722 = vunpack.c.l.b16 %v1542
        %v1723 = vunpack.c.l.b16 %v1543
        %v1724 = vunpack.c.l.b16 %v1544
        %v1725 = vpack.c.b16 %v1718, %v1717
        %v1726 = vpack.c.b16 %v1720, %v1719
        %v1727 = vpack.c.b16 %v1722, %v1721
        %v1728 = vpack.c.b16 %v1724, %v1723
        %vm1733 = vcmask 523264
        %v1735 = vsel %vm1733, %v1620, 0
        %v1738 = vsel %vm1733, %v1628, 0
        %v1741 = vsel %vm1733, %v1636, 0
        %v1744 = vsel %vm1733, %v1644, 0
        %v1747 = vsel %vm1733, %v1652, 0
        %v1750 = vsel %vm1733, %v1660, 0
        %v1753 = vsel %vm1733, %v1668, 0
        %v1756 = vsel %vm1733, %v1676, 0
        %v1759 = vsel %vm1733, %v1684, 0
        %v1762 = vsel %vm1733, %v1692, 0
        %v1765 = vsel %vm1733, %v1700, 0
        %v1768 = vsel %vm1733, %v1708, 0
        %1770 = vmatprep.subr.bf16.mxu0 0
        %1771 = vmatpush1.bf16.msra.mxu0 0
        %1772 = vmatprep.subr.bf16.mxu0 0
        %1773 = vmatpush1.bf16.msra.mxu0 0
        %1774 = vmatprep.subr.bf16.mxu0 0
        %1775 = vmatpush1.bf16.msra.mxu0 0
        %1776 = vmatprep.subr.bf16.mxu0 0
        %1777 = vmatpush1.bf16.msra.mxu0 0
        %1778 = vmatprep.subr.bf16.mxu0 0
        %1779 = vmatpush1.bf16.msra.mxu0 %v1728
        %1780 = vmatprep.subr.bf16.mxu0 0
        %1781 = vmatpush1.bf16.msra.mxu0 %v1727
        %1782 = vmatprep.subr.bf16.mxu0 0
        %1783 = vmatpush1.bf16.msra.mxu0 %v1726
        %1784 = vmatprep.subr.bf16.mxu0 0
        %1785 = vmatpush1.bf16.msra.mxu0 %v1725
        %1786 = vmatprep.subr.bf16.mxu0 0
        %1787 = vmatpush2.bf16.msra.mxu0 0
        %1788 = vmatprep.subr.bf16.mxu0 0
        %1789 = vmatpush2.bf16.msra.mxu0 0
        %1790 = vmatprep.subr.bf16.mxu0 0
        %1791 = vmatpush2.bf16.msra.mxu0 0
        %1792 = vmatprep.subr.bf16.mxu0 0
        %1793 = vmatpush2.bf16.msra.mxu0 0
        %1794 = vmatprep.subr.bf16.mxu0 0
        %1795 = vmatpush2.bf16.msra.mxu0 0
        %1796 = vmatprep.subr.bf16.mxu0 0
        %1797 = vmatpush2.bf16.msra.mxu0 0
        %1798 = vmatprep.subr.bf16.mxu0 0
        %1799 = vmatpush2.bf16.msra.mxu0 0
        %1800 = vmatprep.subr.bf16.mxu0 0
        %1801 = vmatpush2.bf16.msra.mxu0 0
        %1802 = vmatprep.mubr.bf16.mxu0 0
        %1803 = vmatmul.mubr.bf16.gmra.mxu0 %v1735
        %v1804 = vpop.f32.mrf.mxu0
        %v1805 = vadd.f32 0.0, %v1804
        %v1806 = vpop.f32.mrf.mxu0
        %v1807 = vpop.f32.mrf.mxu0
        %v1808 = vadd.f32 0.0, %v1807
        %v1809 = vpop.f32.mrf.mxu0
        %1810 = vmatprep.mubr.bf16.mxu0 0
        %1811 = vmatmul.mubr.bf16.gmra.mxu0 %v1738
        %v1812 = vpop.f32.mrf.mxu0
        %v1813 = vpop.f32.mrf.mxu0
        %v1814 = vpop.f32.mrf.mxu0
        %v1815 = vadd.f32 0.0, %v1814
        %v1816 = vpop.f32.mrf.mxu0
        %1817 = vmatprep.mubr.bf16.mxu0 0
        %1818 = vmatmul.mubr.bf16.gmra.mxu0 %v1741
        %v1819 = vpop.f32.mrf.mxu0
        %v1820 = vadd.f32 0.0, %v1819
        %v1821 = vpop.f32.mrf.mxu0
        %v1822 = vpop.f32.mrf.mxu0
        %v1823 = vpop.f32.mrf.mxu0
        %1824 = vmatprep.mubr.bf16.mxu0 0
        %1825 = vmatmul.mubr.bf16.gmra.mxu0 %v1744
        %v1826 = vpop.f32.mrf.mxu0
        %v1827 = vadd.f32 0.0, %v1826
        %v1828 = vpop.f32.mrf.mxu0
        %v1829 = vpop.f32.mrf.mxu0
        %v1830 = vadd.f32 0.0, %v1829
        %v1831 = vpop.f32.mrf.mxu0
        %1832 = vmatprep.mubr.bf16.mxu0 0
        %1833 = vmatmul.mubr.bf16.gmra.mxu0 %v1747
        %v1834 = vpop.f32.mrf.mxu0
        %v1835 = vpop.f32.mrf.mxu0
        %v1836 = vpop.f32.mrf.mxu0
        %v1837 = vadd.f32 0.0, %v1836
        %v1838 = vpop.f32.mrf.mxu0
        %1839 = vmatprep.mubr.bf16.mxu0 0
        %1840 = vmatmul.mubr.bf16.gmra.mxu0 %v1750
        %v1841 = vpop.f32.mrf.mxu0
        %v1842 = vadd.f32 0.0, %v1841
        %v1843 = vpop.f32.mrf.mxu0
        %v1844 = vpop.f32.mrf.mxu0
        %v1845 = vpop.f32.mrf.mxu0
        %1846 = vmatprep.mubr.bf16.mxu0 0
        %1847 = vmatmul.mubr.bf16.gmra.mxu0 %v1753
        %v1848 = vpop.f32.mrf.mxu0
        %v1849 = vadd.f32 0.0, %v1848
        %v1850 = vpop.f32.mrf.mxu0
        %v1851 = vpop.f32.mrf.mxu0
        %v1852 = vadd.f32 0.0, %v1851
        %v1853 = vpop.f32.mrf.mxu0
        %1854 = vmatprep.mubr.bf16.mxu0 0
        %1855 = vmatmul.mubr.bf16.gmra.mxu0 %v1756
        %v1856 = vpop.f32.mrf.mxu0
        %v1857 = vpop.f32.mrf.mxu0
        %v1858 = vpop.f32.mrf.mxu0
        %v1859 = vadd.f32 0.0, %v1858
        %v1860 = vpop.f32.mrf.mxu0
        %1861 = vmatprep.mubr.bf16.mxu0 0
        %1862 = vmatmul.mubr.bf16.gmra.mxu0 %v1759
        %v1863 = vpop.f32.mrf.mxu0
        %v1864 = vadd.f32 0.0, %v1863
        %v1865 = vpop.f32.mrf.mxu0
        %v1866 = vpop.f32.mrf.mxu0
        %v1867 = vpop.f32.mrf.mxu0
        %1868 = vmatprep.mubr.bf16.mxu0 0
        %1869 = vmatmul.mubr.bf16.gmra.mxu0 %v1762
        %v1870 = vpop.f32.mrf.mxu0
        %v1871 = vadd.f32 0.0, %v1870
        %v1872 = vpop.f32.mrf.mxu0
        %v1873 = vpop.f32.mrf.mxu0
        %v1874 = vadd.f32 0.0, %v1873
        %v1875 = vpop.f32.mrf.mxu0
        %1876 = vmatprep.mubr.bf16.mxu0 0
        %1877 = vmatmul.mubr.bf16.gmra.mxu0 %v1765
        %v1878 = vpop.f32.mrf.mxu0
        %v1879 = vpop.f32.mrf.mxu0
        %v1880 = vpop.f32.mrf.mxu0
        %v1881 = vadd.f32 0.0, %v1880
        %v1882 = vpop.f32.mrf.mxu0
        %1883 = vmatprep.mubr.bf16.mxu0 0
        %1884 = vmatmul.mubr.bf16.gmra.mxu0 %v1768
        %v1885 = vpop.f32.mrf.mxu0
        %v1886 = vadd.f32 0.0, %v1885
        %v1887 = vpop.f32.mrf.mxu0
        %v1888 = vpop.f32.mrf.mxu0
        %v1889 = vpop.f32.mrf.mxu0
        %1890 = vdwg.mxu0
        %v1899 = vunpack.c.l.b16 %v1527
        %v1900 = vunpack.c.l.b16 %v1528
        %v1901 = vunpack.c.l.b16 %v1529
        %v1902 = vunpack.c.l.b16 %v1530
        %v1903 = vunpack.c.l.b16 %v1531
        %v1904 = vunpack.c.l.b16 %v1532
        %v1905 = vunpack.c.l.b16 %v1533
        %v1906 = vunpack.c.l.b16 %v1534
        %v1907 = vpack.c.b16 %v1900, %v1899
        %v1908 = vpack.c.b16 %v1902, %v1901
        %v1909 = vpack.c.b16 %v1904, %v1903
        %v1910 = vpack.c.b16 %v1906, %v1905
        %v1915 = vsel %vm1733, %v1595, 0
        %v1917 = vsel %vm1733, %v1596, 0
        %v1919 = vsel %vm1733, %v1597, 0
        %v1921 = vsel %vm1733, %v1598, 0
        %v1923 = vsel %vm1733, %v1599, 0
        %v1925 = vsel %vm1733, %v1600, 0
        %v1927 = vsel %vm1733, %v1601, 0
        %v1929 = vsel %vm1733, %v1602, 0
        %v1931 = vsel %vm1733, %v1603, 0
        %v1933 = vsel %vm1733, %v1604, 0
        %v1935 = vsel %vm1733, %v1605, 0
        %v1937 = vsel %vm1733, %v1606, 0
        %1939 = vmatprep.subr.bf16.mxu0 0
        %1940 = vmatpush1.bf16.msra.mxu0 0
        %1941 = vmatprep.subr.bf16.mxu0 0
        %1942 = vmatpush1.bf16.msra.mxu0 0
        %1943 = vmatprep.subr.bf16.mxu0 0
        %1944 = vmatpush1.bf16.msra.mxu0 0
        %1945 = vmatprep.subr.bf16.mxu0 0
        %1946 = vmatpush1.bf16.msra.mxu0 0
        %1947 = vmatprep.subr.bf16.mxu0 0
        %1948 = vmatpush1.bf16.msra.mxu0 %v1910
        %1949 = vmatprep.subr.bf16.mxu0 0
        %1950 = vmatpush1.bf16.msra.mxu0 %v1909
        %1951 = vmatprep.subr.bf16.mxu0 0
        %1952 = vmatpush1.bf16.msra.mxu0 %v1908
        %1953 = vmatprep.subr.bf16.mxu0 0
        %1954 = vmatpush1.bf16.msra.mxu0 %v1907
        %1955 = vmatprep.subr.bf16.mxu0 0
        %1956 = vmatpush2.bf16.msra.mxu0 0
        %1957 = vmatprep.subr.bf16.mxu0 0
        %1958 = vmatpush2.bf16.msra.mxu0 0
        %1959 = vmatprep.subr.bf16.mxu0 0
        %1960 = vmatpush2.bf16.msra.mxu0 0
        %1961 = vmatprep.subr.bf16.mxu0 0
        %1962 = vmatpush2.bf16.msra.mxu0 0
        %1963 = vmatprep.subr.bf16.mxu0 0
        %1964 = vmatpush2.bf16.msra.mxu0 0
        %1965 = vmatprep.subr.bf16.mxu0 0
        %1966 = vmatpush2.bf16.msra.mxu0 0
        %1967 = vmatprep.subr.bf16.mxu0 0
        %1968 = vmatpush2.bf16.msra.mxu0 0
        %1969 = vmatprep.subr.bf16.mxu0 0
        %1970 = vmatpush2.bf16.msra.mxu0 0
        %1971 = vmatprep.mubr.bf16.mxu0 0
        %1972 = vmatmul.mubr.bf16.gmra.mxu0 %v1915
        %v1973 = vpop.f32.mrf.mxu0
        %v1974 = vadd.f32 %v1805, %v1973
        %v1975 = vpop.f32.mrf.mxu0
        %v1976 = vpop.f32.mrf.mxu0
        %v1977 = vadd.f32 %v1808, %v1976
        %v1978 = vpop.f32.mrf.mxu0
        %1979 = vmatprep.mubr.bf16.mxu0 0
        %1980 = vmatmul.mubr.bf16.gmra.mxu0 %v1917
        %v1981 = vpop.f32.mrf.mxu0
        %v1982 = vpop.f32.mrf.mxu0
        %v1983 = vpop.f32.mrf.mxu0
        %v1984 = vadd.f32 %v1815, %v1983
        %v1985 = vpop.f32.mrf.mxu0
        %1986 = vmatprep.mubr.bf16.mxu0 0
        %1987 = vmatmul.mubr.bf16.gmra.mxu0 %v1919
        %v1988 = vpop.f32.mrf.mxu0
        %v1989 = vadd.f32 %v1820, %v1988
        %v1990 = vpop.f32.mrf.mxu0
        %v1991 = vpop.f32.mrf.mxu0
        %v1992 = vpop.f32.mrf.mxu0
        %1993 = vmatprep.mubr.bf16.mxu0 0
        %1994 = vmatmul.mubr.bf16.gmra.mxu0 %v1921
        %v1995 = vpop.f32.mrf.mxu0
        %v1996 = vadd.f32 %v1827, %v1995
        %v1997 = vpop.f32.mrf.mxu0
        %v1998 = vpop.f32.mrf.mxu0
        %v1999 = vadd.f32 %v1830, %v1998
        %v2000 = vpop.f32.mrf.mxu0
        %2001 = vmatprep.mubr.bf16.mxu0 0
        %2002 = vmatmul.mubr.bf16.gmra.mxu0 %v1923
        %v2003 = vpop.f32.mrf.mxu0
        %v2004 = vpop.f32.mrf.mxu0
        %v2005 = vpop.f32.mrf.mxu0
        %v2006 = vadd.f32 %v1837, %v2005
        %v2007 = vpop.f32.mrf.mxu0
        %2008 = vmatprep.mubr.bf16.mxu0 0
        %2009 = vmatmul.mubr.bf16.gmra.mxu0 %v1925
        %v2010 = vpop.f32.mrf.mxu0
        %v2011 = vadd.f32 %v1842, %v2010
        %v2012 = vpop.f32.mrf.mxu0
        %v2013 = vpop.f32.mrf.mxu0
        %v2014 = vpop.f32.mrf.mxu0
        %2015 = vmatprep.mubr.bf16.mxu0 0
        %2016 = vmatmul.mubr.bf16.gmra.mxu0 %v1927
        %v2017 = vpop.f32.mrf.mxu0
        %v2018 = vadd.f32 %v1849, %v2017
        %v2019 = vpop.f32.mrf.mxu0
        %v2020 = vpop.f32.mrf.mxu0
        %v2021 = vadd.f32 %v1852, %v2020
        %v2022 = vpop.f32.mrf.mxu0
        %2023 = vmatprep.mubr.bf16.mxu0 0
        %2024 = vmatmul.mubr.bf16.gmra.mxu0 %v1929
        %v2025 = vpop.f32.mrf.mxu0
        %v2026 = vpop.f32.mrf.mxu0
        %v2027 = vpop.f32.mrf.mxu0
        %v2028 = vadd.f32 %v1859, %v2027
        %v2029 = vpop.f32.mrf.mxu0
        %2030 = vmatprep.mubr.bf16.mxu0 0
        %2031 = vmatmul.mubr.bf16.gmra.mxu0 %v1931
        %v2032 = vpop.f32.mrf.mxu0
        %v2033 = vadd.f32 %v1864, %v2032
        %v2034 = vpop.f32.mrf.mxu0
        %v2035 = vpop.f32.mrf.mxu0
        %v2036 = vpop.f32.mrf.mxu0
        %2037 = vmatprep.mubr.bf16.mxu0 0
        %2038 = vmatmul.mubr.bf16.gmra.mxu0 %v1933
        %v2039 = vpop.f32.mrf.mxu0
        %v2040 = vadd.f32 %v1871, %v2039
        %v2041 = vpop.f32.mrf.mxu0
        %v2042 = vpop.f32.mrf.mxu0
        %v2043 = vadd.f32 %v1874, %v2042
        %v2044 = vpop.f32.mrf.mxu0
        %2045 = vmatprep.mubr.bf16.mxu0 0
        %2046 = vmatmul.mubr.bf16.gmra.mxu0 %v1935
        %v2047 = vpop.f32.mrf.mxu0
        %v2048 = vpop.f32.mrf.mxu0
        %v2049 = vpop.f32.mrf.mxu0
        %v2050 = vadd.f32 %v1881, %v2049
        %v2051 = vpop.f32.mrf.mxu0
        %2052 = vmatprep.mubr.bf16.mxu0 0
        %2053 = vmatmul.mubr.bf16.gmra.mxu0 %v1937
        %v2054 = vpop.f32.mrf.mxu0
        %v2055 = vadd.f32 %v1886, %v2054
        %v2056 = vpop.f32.mrf.mxu0
        %v2057 = vpop.f32.mrf.mxu0
        %v2058 = vpop.f32.mrf.mxu0
        %2059 = vdwg.mxu0
        %v2060 = vld [vmem:[#allocation2] sm:$0xe]
        %s2061 = scalar_lea.vmem [#allocation6], 64
        %v2062 = vld [vmem:[%s2061] sm:$0xf]
        %v2063 = vld [vmem:[%s2061 + $0x4] sm:$0xf]
        %v2064 = vld [vmem:[%s2061 + $0x8] sm:$0xf]
        %v2065 = vld [vmem:[%s2061 + $0xc] sm:$0xf]
        %v2066 = vld [vmem:[%s2061 + $0x10] sm:$0xf]
        %v2067 = vld [vmem:[%s2061 + $0x14] sm:$0xf]
        %v2068 = vld [vmem:[%s2061 + $0x18] sm:$0xf]
        %v2069 = vld [vmem:[%s2061 + $0x1c] sm:$0xf]
        %v2071 = vunpack.c.l.b16 %v2060
        %v2072 = vpack.c.b16 %v1571, %v2071
        %vm2073 = vcmask 1046528
        %v2074 = vrot.slane %v2072, 1
        %v2075 = vrot.slane %v1596, 1
        %v2076 = vsel %vm2073, %v2074, %v2075
        %v2077 = vrot.slane %v1597, 1
        %v2078 = vsel %vm2073, %v2075, %v2077
        %v2079 = vrot.slane %v1598, 1
        %v2080 = vsel %vm2073, %v2077, %v2079
        %v2081 = vrot.slane %v1599, 1
        %v2082 = vsel %vm2073, %v2079, %v2081
        %v2083 = vrot.slane %v1600, 1
        %v2084 = vsel %vm2073, %v2081, %v2083
        %v2085 = vrot.slane %v1601, 1
        %v2086 = vsel %vm2073, %v2083, %v2085
        %v2087 = vrot.slane %v1602, 1
        %v2088 = vsel %vm2073, %v2085, %v2087
        %v2089 = vrot.slane %v1603, 1
        %v2090 = vsel %vm2073, %v2087, %v2089
        %v2091 = vrot.slane %v1604, 1
        %v2092 = vsel %vm2073, %v2089, %v2091
        %v2093 = vrot.slane %v1605, 1
        %v2094 = vsel %vm2073, %v2091, %v2093
        %v2095 = vrot.slane %v1606, 1
        %v2096 = vsel %vm2073, %v2093, %v2095
        %v2097 = vrot.slane %v1607, 1
        %v2098 = vsel %vm2073, %v2095, %v2097
        %v2107 = vunpack.c.l.b16 %v2062
        %v2108 = vunpack.c.l.b16 %v2063
        %v2109 = vunpack.c.l.b16 %v2064
        %v2110 = vunpack.c.l.b16 %v2065
        %v2111 = vunpack.c.l.b16 %v2066
        %v2112 = vunpack.c.l.b16 %v2067
        %v2113 = vunpack.c.l.b16 %v2068
        %v2114 = vunpack.c.l.b16 %v2069
        %v2115 = vpack.c.b16 %v2108, %v2107
        %v2116 = vpack.c.b16 %v2110, %v2109
        %v2117 = vpack.c.b16 %v2112, %v2111
        %v2118 = vpack.c.b16 %v2114, %v2113
        %v2124 = vsel %vm1733, %v2076, 0
        %v2127 = vsel %vm1733, %v2078, 0
        %v2130 = vsel %vm1733, %v2080, 0
        %v2133 = vsel %vm1733, %v2082, 0
        %v2136 = vsel %vm1733, %v2084, 0
        %v2139 = vsel %vm1733, %v2086, 0
        %v2142 = vsel %vm1733, %v2088, 0
        %v2145 = vsel %vm1733, %v2090, 0
        %v2148 = vsel %vm1733, %v2092, 0
        %v2151 = vsel %vm1733, %v2094, 0
        %v2154 = vsel %vm1733, %v2096, 0
        %v2157 = vsel %vm1733, %v2098, 0
        %2159 = vmatprep.subr.bf16.mxu0 0
        %2160 = vmatpush1.bf16.msra.mxu0 0
        %2161 = vmatprep.subr.bf16.mxu0 0
        %2162 = vmatpush1.bf16.msra.mxu0 0
        %2163 = vmatprep.subr.bf16.mxu0 0
        %2164 = vmatpush1.bf16.msra.mxu0 0
        %2165 = vmatprep.subr.bf16.mxu0 0
        %2166 = vmatpush1.bf16.msra.mxu0 0
        %2167 = vmatprep.subr.bf16.mxu0 0
        %2168 = vmatpush1.bf16.msra.mxu0 %v2118
        %2169 = vmatprep.subr.bf16.mxu0 0
        %2170 = vmatpush1.bf16.msra.mxu0 %v2117
        %2171 = vmatprep.subr.bf16.mxu0 0
        %2172 = vmatpush1.bf16.msra.mxu0 %v2116
        %2173 = vmatprep.subr.bf16.mxu0 0
        %2174 = vmatpush1.bf16.msra.mxu0 %v2115
        %2175 = vmatprep.subr.bf16.mxu0 0
        %2176 = vmatpush2.bf16.msra.mxu0 0
        %2177 = vmatprep.subr.bf16.mxu0 0
        %2178 = vmatpush2.bf16.msra.mxu0 0
        %2179 = vmatprep.subr.bf16.mxu0 0
        %2180 = vmatpush2.bf16.msra.mxu0 0
        %2181 = vmatprep.subr.bf16.mxu0 0
        %2182 = vmatpush2.bf16.msra.mxu0 0
        %2183 = vmatprep.subr.bf16.mxu0 0
        %2184 = vmatpush2.bf16.msra.mxu0 0
        %2185 = vmatprep.subr.bf16.mxu0 0
        %2186 = vmatpush2.bf16.msra.mxu0 0
        %2187 = vmatprep.subr.bf16.mxu0 0
        %2188 = vmatpush2.bf16.msra.mxu0 0
        %2189 = vmatprep.subr.bf16.mxu0 0
        %2190 = vmatpush2.bf16.msra.mxu0 0
        %2191 = vmatprep.mubr.bf16.mxu0 0
        %2192 = vmatmul.mubr.bf16.gmra.mxu0 %v2124
        %v2193 = vpop.f32.mrf.mxu0
        %v2194 = vadd.f32 0.0, %v2193
        %v2195 = vpop.f32.mrf.mxu0
        %v2196 = vpop.f32.mrf.mxu0
        %v2197 = vadd.f32 0.0, %v2196
        %v2198 = vpop.f32.mrf.mxu0
        %2199 = vmatprep.mubr.bf16.mxu0 0
        %2200 = vmatmul.mubr.bf16.gmra.mxu0 %v2127
        %v2201 = vpop.f32.mrf.mxu0
        %v2202 = vpop.f32.mrf.mxu0
        %v2203 = vpop.f32.mrf.mxu0
        %v2204 = vadd.f32 0.0, %v2203
        %v2205 = vpop.f32.mrf.mxu0
        %2206 = vmatprep.mubr.bf16.mxu0 0
        %2207 = vmatmul.mubr.bf16.gmra.mxu0 %v2130
        %v2208 = vpop.f32.mrf.mxu0
        %v2209 = vadd.f32 0.0, %v2208
        %v2210 = vpop.f32.mrf.mxu0
        %v2211 = vpop.f32.mrf.mxu0
        %v2212 = vpop.f32.mrf.mxu0
        %2213 = vmatprep.mubr.bf16.mxu0 0
        %2214 = vmatmul.mubr.bf16.gmra.mxu0 %v2133
        %v2215 = vpop.f32.mrf.mxu0
        %v2216 = vadd.f32 0.0, %v2215
        %v2217 = vpop.f32.mrf.mxu0
        %v2218 = vpop.f32.mrf.mxu0
        %v2219 = vadd.f32 0.0, %v2218
        %v2220 = vpop.f32.mrf.mxu0
        %2221 = vmatprep.mubr.bf16.mxu0 0
        %2222 = vmatmul.mubr.bf16.gmra.mxu0 %v2136
        %v2223 = vpop.f32.mrf.mxu0
        %v2224 = vpop.f32.mrf.mxu0
        %v2225 = vpop.f32.mrf.mxu0
        %v2226 = vadd.f32 0.0, %v2225
        %v2227 = vpop.f32.mrf.mxu0
        %2228 = vmatprep.mubr.bf16.mxu0 0
        %2229 = vmatmul.mubr.bf16.gmra.mxu0 %v2139
        %v2230 = vpop.f32.mrf.mxu0
        %v2231 = vadd.f32 0.0, %v2230
        %v2232 = vpop.f32.mrf.mxu0
        %v2233 = vpop.f32.mrf.mxu0
        %v2234 = vpop.f32.mrf.mxu0
        %2235 = vmatprep.mubr.bf16.mxu0 0
        %2236 = vmatmul.mubr.bf16.gmra.mxu0 %v2142
        %v2237 = vpop.f32.mrf.mxu0
        %v2238 = vadd.f32 0.0, %v2237
        %v2239 = vpop.f32.mrf.mxu0
        %v2240 = vpop.f32.mrf.mxu0
        %v2241 = vadd.f32 0.0, %v2240
        %v2242 = vpop.f32.mrf.mxu0
        %2243 = vmatprep.mubr.bf16.mxu0 0
        %2244 = vmatmul.mubr.bf16.gmra.mxu0 %v2145
        %v2245 = vpop.f32.mrf.mxu0
        %v2246 = vpop.f32.mrf.mxu0
        %v2247 = vpop.f32.mrf.mxu0
        %v2248 = vadd.f32 0.0, %v2247
        %v2249 = vpop.f32.mrf.mxu0
        %2250 = vmatprep.mubr.bf16.mxu0 0
        %2251 = vmatmul.mubr.bf16.gmra.mxu0 %v2148
        %v2252 = vpop.f32.mrf.mxu0
        %v2253 = vadd.f32 0.0, %v2252
        %v2254 = vpop.f32.mrf.mxu0
        %v2255 = vpop.f32.mrf.mxu0
        %v2256 = vpop.f32.mrf.mxu0
        %2257 = vmatprep.mubr.bf16.mxu0 0
        %2258 = vmatmul.mubr.bf16.gmra.mxu0 %v2151
        %v2259 = vpop.f32.mrf.mxu0
        %v2260 = vadd.f32 0.0, %v2259
        %v2261 = vpop.f32.mrf.mxu0
        %v2262 = vpop.f32.mrf.mxu0
        %v2263 = vadd.f32 0.0, %v2262
        %v2264 = vpop.f32.mrf.mxu0
        %2265 = vmatprep.mubr.bf16.mxu0 0
        %2266 = vmatmul.mubr.bf16.gmra.mxu0 %v2154
        %v2267 = vpop.f32.mrf.mxu0
        %v2268 = vpop.f32.mrf.mxu0
        %v2269 = vpop.f32.mrf.mxu0
        %v2270 = vadd.f32 0.0, %v2269
        %v2271 = vpop.f32.mrf.mxu0
        %2272 = vmatprep.mubr.bf16.mxu0 0
        %2273 = vmatmul.mubr.bf16.gmra.mxu0 %v2157
        %v2274 = vpop.f32.mrf.mxu0
        %v2275 = vadd.f32 0.0, %v2274
        %v2276 = vpop.f32.mrf.mxu0
        %v2277 = vpop.f32.mrf.mxu0
        %v2278 = vpop.f32.mrf.mxu0
        %2279 = vdwg.mxu0
        %v2280 = vadd.f32 %v1974, %v2194
        %v2281 = vadd.f32 %v1977, %v2197
        %v2282 = vadd.f32 %v1984, %v2204
        %v2283 = vadd.f32 %v1989, %v2209
        %v2284 = vadd.f32 %v1996, %v2216
        %v2285 = vadd.f32 %v1999, %v2219
        %v2286 = vadd.f32 %v2006, %v2226
        %v2287 = vadd.f32 %v2011, %v2231
        %v2288 = vadd.f32 %v2018, %v2238
        %v2289 = vadd.f32 %v2021, %v2241
        %v2290 = vadd.f32 %v2028, %v2248
        %v2291 = vadd.f32 %v2033, %v2253
        %v2292 = vadd.f32 %v2040, %v2260
        %v2293 = vadd.f32 %v2043, %v2263
        %v2294 = vadd.f32 %v2050, %v2270
        %v2295 = vadd.f32 %v2055, %v2275
        %v2296 = vld [vmem:[#allocation2 + $0xc] sm:$0xf]
        %v2297 = vld [vmem:[#allocation2 + $0x10] sm:$0xf]
        %v2298 = vld [vmem:[#allocation2 + $0x14] sm:$0xf]
        %v2299 = vld [vmem:[#allocation2 + $0x18] sm:$0xf]
        %v2300 = vld [vmem:[#allocation2 + $0x1c] sm:$0xf]
        %v2301 = vld [vmem:[#allocation2 + $0x20] sm:$0xf]
        %v2302 = vld [vmem:[#allocation2 + $0x24] sm:$0xf]
        %v2303 = vld [vmem:[#allocation2 + $0x28] sm:$0xf]
        %v2304 = vld [vmem:[#allocation2 + $0x2c] sm:$0xf]
        %v2305 = vld [vmem:[#allocation2 + $0x30] sm:$0xf]
        %v2306 = vld [vmem:[#allocation2 + $0x34] sm:$0xf]
        %v2307 = vld [vmem:[#allocation2 + $0x38] sm:$0xf]
        %v2308 = vld [vmem:[#allocation2 + $0x3c] sm:$0xf]
        %v2309 = vld [vmem:[#allocation2 + $0x40] sm:$0xf]
        %v2310 = vld [vmem:[#allocation2 + $0x44] sm:$0xf]
        %v2311 = vld [vmem:[#allocation2 + $0x48] sm:$0xf]
        %v2312 = vld [vmem:[#allocation2 + $0x4c] sm:$0xf]
        %v2313 = vld [vmem:[#allocation2 + $0x50] sm:$0xf]
        %v2314 = vld [vmem:[#allocation2 + $0x54] sm:$0xf]
        %v2315 = vld [vmem:[#allocation2 + $0x58] sm:$0xf]
        %v2316 = vld [vmem:[#allocation2 + $0x5c] sm:$0xf]
        %v2317 = vld [vmem:[#allocation2 + $0x60] sm:$0xf]
        %v2318 = vld [vmem:[#allocation2 + $0x64] sm:$0xf]
        %v2319 = vld [vmem:[#allocation2 + $0x68] sm:$0xf]
        %s2320 = scalar_lea.vmem [#allocation6], 96
        %v2321 = vld [vmem:[%s2320] sm:$0xf]
        %v2322 = vld [vmem:[%s2320 + $0x4] sm:$0xf]
        %v2323 = vld [vmem:[%s2320 + $0x8] sm:$0xf]
        %v2324 = vld [vmem:[%s2320 + $0xc] sm:$0xf]
        %v2325 = vld [vmem:[%s2320 + $0x10] sm:$0xf]
        %v2326 = vld [vmem:[%s2320 + $0x14] sm:$0xf]
        %v2327 = vld [vmem:[%s2320 + $0x18] sm:$0xf]
        %v2328 = vld [vmem:[%s2320 + $0x1c] sm:$0xf]
        %v2353 = vunpack.c.l.b16 %v2296
        %v2354 = vunpack.c.l.b16 %v2297
        %v2355 = vunpack.c.l.b16 %v2298
        %v2356 = vunpack.c.l.b16 %v2299
        %v2357 = vunpack.c.l.b16 %v2300
        %v2358 = vunpack.c.l.b16 %v2301
        %v2359 = vunpack.c.l.b16 %v2302
        %v2360 = vunpack.c.l.b16 %v2303
        %v2361 = vunpack.c.l.b16 %v2304
        %v2362 = vunpack.c.l.b16 %v2305
        %v2363 = vunpack.c.l.b16 %v2306
        %v2364 = vunpack.c.l.b16 %v2307
        %v2365 = vunpack.c.l.b16 %v2308
        %v2366 = vunpack.c.l.b16 %v2309
        %v2367 = vunpack.c.l.b16 %v2310
        %v2368 = vunpack.c.l.b16 %v2311
        %v2369 = vunpack.c.l.b16 %v2312
        %v2370 = vunpack.c.l.b16 %v2313
        %v2371 = vunpack.c.l.b16 %v2314
        %v2372 = vunpack.c.l.b16 %v2315
        %v2373 = vunpack.c.l.b16 %v2316
        %v2374 = vunpack.c.l.b16 %v2317
        %v2375 = vunpack.c.l.b16 %v2318
        %v2376 = vunpack.c.l.b16 %v2319
        %v2377 = vpack.c.b16 %v2354, %v2353
        %v2378 = vpack.c.b16 %v2356, %v2355
        %v2379 = vpack.c.b16 %v2358, %v2357
        %v2380 = vpack.c.b16 %v2360, %v2359
        %v2381 = vpack.c.b16 %v2362, %v2361
        %v2382 = vpack.c.b16 %v2364, %v2363
        %v2383 = vpack.c.b16 %v2366, %v2365
        %v2384 = vpack.c.b16 %v2368, %v2367
        %v2385 = vpack.c.b16 %v2370, %v2369
        %v2386 = vpack.c.b16 %v2372, %v2371
        %v2387 = vpack.c.b16 %v2374, %v2373
        %v2388 = vpack.c.b16 %v2376, %v2375
        %v2397 = vunpack.c.l.b16 %v2321
        %v2398 = vunpack.c.l.b16 %v2322
        %v2399 = vunpack.c.l.b16 %v2323
        %v2400 = vunpack.c.l.b16 %v2324
        %v2401 = vunpack.c.l.b16 %v2325
        %v2402 = vunpack.c.l.b16 %v2326
        %v2403 = vunpack.c.l.b16 %v2327
        %v2404 = vunpack.c.l.b16 %v2328
        %v2405 = vpack.c.b16 %v2398, %v2397
        %v2406 = vpack.c.b16 %v2400, %v2399
        %v2407 = vpack.c.b16 %v2402, %v2401
        %v2408 = vpack.c.b16 %v2404, %v2403
        %v2414 = vsel %vm1733, %v2377, 0
        %v2417 = vsel %vm1733, %v2378, 0
        %v2420 = vsel %vm1733, %v2379, 0
        %v2423 = vsel %vm1733, %v2380, 0
        %v2426 = vsel %vm1733, %v2381, 0
        %v2429 = vsel %vm1733, %v2382, 0
        %v2432 = vsel %vm1733, %v2383, 0
        %v2435 = vsel %vm1733, %v2384, 0
        %v2438 = vsel %vm1733, %v2385, 0
        %v2441 = vsel %vm1733, %v2386, 0
        %v2444 = vsel %vm1733, %v2387, 0
        %v2447 = vsel %vm1733, %v2388, 0
        %2449 = vmatprep.subr.bf16.mxu0 0
        %2450 = vmatpush1.bf16.msra.mxu0 0
        %2451 = vmatprep.subr.bf16.mxu0 0
        %2452 = vmatpush1.bf16.msra.mxu0 0
        %2453 = vmatprep.subr.bf16.mxu0 0
        %2454 = vmatpush1.bf16.msra.mxu0 0
        %2455 = vmatprep.subr.bf16.mxu0 0
        %2456 = vmatpush1.bf16.msra.mxu0 0
        %2457 = vmatprep.subr.bf16.mxu0 0
        %2458 = vmatpush1.bf16.msra.mxu0 %v2408
        %2459 = vmatprep.subr.bf16.mxu0 0
        %2460 = vmatpush1.bf16.msra.mxu0 %v2407
        %2461 = vmatprep.subr.bf16.mxu0 0
        %2462 = vmatpush1.bf16.msra.mxu0 %v2406
        %2463 = vmatprep.subr.bf16.mxu0 0
        %2464 = vmatpush1.bf16.msra.mxu0 %v2405
        %2465 = vmatprep.subr.bf16.mxu0 0
        %2466 = vmatpush2.bf16.msra.mxu0 0
        %2467 = vmatprep.subr.bf16.mxu0 0
        %2468 = vmatpush2.bf16.msra.mxu0 0
        %2469 = vmatprep.subr.bf16.mxu0 0
        %2470 = vmatpush2.bf16.msra.mxu0 0
        %2471 = vmatprep.subr.bf16.mxu0 0
        %2472 = vmatpush2.bf16.msra.mxu0 0
        %2473 = vmatprep.subr.bf16.mxu0 0
        %2474 = vmatpush2.bf16.msra.mxu0 0
        %2475 = vmatprep.subr.bf16.mxu0 0
        %2476 = vmatpush2.bf16.msra.mxu0 0
        %2477 = vmatprep.subr.bf16.mxu0 0
        %2478 = vmatpush2.bf16.msra.mxu0 0
        %2479 = vmatprep.subr.bf16.mxu0 0
        %2480 = vmatpush2.bf16.msra.mxu0 0
        %2481 = vmatprep.mubr.bf16.mxu0 0
        %2482 = vmatmul.mubr.bf16.gmra.mxu0 %v2414
        %v2483 = vpop.f32.mrf.mxu0
        %v2484 = vadd.f32 0.0, %v2483
        %v2485 = vpop.f32.mrf.mxu0
        %v2486 = vpop.f32.mrf.mxu0
        %v2487 = vadd.f32 0.0, %v2486
        %v2488 = vpop.f32.mrf.mxu0
        %2489 = vmatprep.mubr.bf16.mxu0 0
        %2490 = vmatmul.mubr.bf16.gmra.mxu0 %v2417
        %v2491 = vpop.f32.mrf.mxu0
        %v2492 = vpop.f32.mrf.mxu0
        %v2493 = vpop.f32.mrf.mxu0
        %v2494 = vadd.f32 0.0, %v2493
        %v2495 = vpop.f32.mrf.mxu0
        %2496 = vmatprep.mubr.bf16.mxu0 0
        %2497 = vmatmul.mubr.bf16.gmra.mxu0 %v2420
        %v2498 = vpop.f32.mrf.mxu0
        %v2499 = vadd.f32 0.0, %v2498
        %v2500 = vpop.f32.mrf.mxu0
        %v2501 = vpop.f32.mrf.mxu0
        %v2502 = vpop.f32.mrf.mxu0
        %2503 = vmatprep.mubr.bf16.mxu0 0
        %2504 = vmatmul.mubr.bf16.gmra.mxu0 %v2423
        %v2505 = vpop.f32.mrf.mxu0
        %v2506 = vadd.f32 0.0, %v2505
        %v2507 = vpop.f32.mrf.mxu0
        %v2508 = vpop.f32.mrf.mxu0
        %v2509 = vadd.f32 0.0, %v2508
        %v2510 = vpop.f32.mrf.mxu0
        %2511 = vmatprep.mubr.bf16.mxu0 0
        %2512 = vmatmul.mubr.bf16.gmra.mxu0 %v2426
        %v2513 = vpop.f32.mrf.mxu0
        %v2514 = vpop.f32.mrf.mxu0
        %v2515 = vpop.f32.mrf.mxu0
        %v2516 = vadd.f32 0.0, %v2515
        %v2517 = vpop.f32.mrf.mxu0
        %2518 = vmatprep.mubr.bf16.mxu0 0
        %2519 = vmatmul.mubr.bf16.gmra.mxu0 %v2429
        %v2520 = vpop.f32.mrf.mxu0
        %v2521 = vadd.f32 0.0, %v2520
        %v2522 = vpop.f32.mrf.mxu0
        %v2523 = vpop.f32.mrf.mxu0
        %v2524 = vpop.f32.mrf.mxu0
        %2525 = vmatprep.mubr.bf16.mxu0 0
        %2526 = vmatmul.mubr.bf16.gmra.mxu0 %v2432
        %v2527 = vpop.f32.mrf.mxu0
        %v2528 = vadd.f32 0.0, %v2527
        %v2529 = vpop.f32.mrf.mxu0
        %v2530 = vpop.f32.mrf.mxu0
        %v2531 = vadd.f32 0.0, %v2530
        %v2532 = vpop.f32.mrf.mxu0
        %2533 = vmatprep.mubr.bf16.mxu0 0
        %2534 = vmatmul.mubr.bf16.gmra.mxu0 %v2435
        %v2535 = vpop.f32.mrf.mxu0
        %v2536 = vpop.f32.mrf.mxu0
        %v2537 = vpop.f32.mrf.mxu0
        %v2538 = vadd.f32 0.0, %v2537
        %v2539 = vpop.f32.mrf.mxu0
        %2540 = vmatprep.mubr.bf16.mxu0 0
        %2541 = vmatmul.mubr.bf16.gmra.mxu0 %v2438
        %v2542 = vpop.f32.mrf.mxu0
        %v2543 = vadd.f32 0.0, %v2542
        %v2544 = vpop.f32.mrf.mxu0
        %v2545 = vpop.f32.mrf.mxu0
        %v2546 = vpop.f32.mrf.mxu0
        %2547 = vmatprep.mubr.bf16.mxu0 0
        %2548 = vmatmul.mubr.bf16.gmra.mxu0 %v2441
        %v2549 = vpop.f32.mrf.mxu0
        %v2550 = vadd.f32 0.0, %v2549
        %v2551 = vpop.f32.mrf.mxu0
        %v2552 = vpop.f32.mrf.mxu0
        %v2553 = vadd.f32 0.0, %v2552
        %v2554 = vpop.f32.mrf.mxu0
        %2555 = vmatprep.mubr.bf16.mxu0 0
        %2556 = vmatmul.mubr.bf16.gmra.mxu0 %v2444
        %v2557 = vpop.f32.mrf.mxu0
        %v2558 = vpop.f32.mrf.mxu0
        %v2559 = vpop.f32.mrf.mxu0
        %v2560 = vadd.f32 0.0, %v2559
        %v2561 = vpop.f32.mrf.mxu0
        %2562 = vmatprep.mubr.bf16.mxu0 0
        %2563 = vmatmul.mubr.bf16.gmra.mxu0 %v2447
        %v2564 = vpop.f32.mrf.mxu0
        %v2565 = vadd.f32 0.0, %v2564
        %v2566 = vpop.f32.mrf.mxu0
        %v2567 = vpop.f32.mrf.mxu0
        %v2568 = vpop.f32.mrf.mxu0
        %2569 = vdwg.mxu0
        %v2570 = vadd.f32 %v2280, %v2484
        %v2571 = vadd.f32 %v2281, %v2487
        %v2572 = vadd.f32 %v2282, %v2494
        %v2573 = vadd.f32 %v2283, %v2499
        %v2574 = vadd.f32 %v2284, %v2506
        %v2575 = vadd.f32 %v2285, %v2509
        %v2576 = vadd.f32 %v2286, %v2516
        %v2577 = vadd.f32 %v2287, %v2521
        %v2578 = vadd.f32 %v2288, %v2528
        %v2579 = vadd.f32 %v2289, %v2531
        %v2580 = vadd.f32 %v2290, %v2538
        %v2581 = vadd.f32 %v2291, %v2543
        %v2582 = vadd.f32 %v2292, %v2550
        %v2583 = vadd.f32 %v2293, %v2553
        %v2584 = vadd.f32 %v2294, %v2560
        %v2585 = vadd.f32 %v2295, %v2565
        %v2586 = vld [vmem:[#allocation2 + $0xc] sm:$0xf]
        %v2587 = vld [vmem:[#allocation2 + $0x10] sm:$0xf]
        %v2588 = vld [vmem:[#allocation2 + $0x14] sm:$0xf]
        %v2589 = vld [vmem:[#allocation2 + $0x18] sm:$0xf]
        %v2590 = vld [vmem:[#allocation2 + $0x1c] sm:$0xf]
        %v2591 = vld [vmem:[#allocation2 + $0x20] sm:$0xf]
        %v2592 = vld [vmem:[#allocation2 + $0x24] sm:$0xf]
        %v2593 = vld [vmem:[#allocation2 + $0x28] sm:$0xf]
        %v2594 = vld [vmem:[#allocation2 + $0x2c] sm:$0xf]
        %v2595 = vld [vmem:[#allocation2 + $0x30] sm:$0xf]
        %v2596 = vld [vmem:[#allocation2 + $0x34] sm:$0xf]
        %v2597 = vld [vmem:[#allocation2 + $0x38] sm:$0xf]
        %v2598 = vld [vmem:[#allocation2 + $0x3c] sm:$0xf]
        %v2599 = vld [vmem:[#allocation2 + $0x40] sm:$0xf]
        %v2600 = vld [vmem:[#allocation2 + $0x44] sm:$0xf]
        %v2601 = vld [vmem:[#allocation2 + $0x48] sm:$0xf]
        %v2602 = vld [vmem:[#allocation2 + $0x4c] sm:$0xf]
        %v2603 = vld [vmem:[#allocation2 + $0x50] sm:$0xf]
        %v2604 = vld [vmem:[#allocation2 + $0x54] sm:$0xf]
        %v2605 = vld [vmem:[#allocation2 + $0x58] sm:$0xf]
        %v2606 = vld [vmem:[#allocation2 + $0x5c] sm:$0xf]
        %v2607 = vld [vmem:[#allocation2 + $0x60] sm:$0xf]
        %v2608 = vld [vmem:[#allocation2 + $0x64] sm:$0xf]
        %v2609 = vld [vmem:[#allocation2 + $0x68] sm:$0xf]
        %v2610 = vld [vmem:[#allocation2 + $0x6c] sm:$0x1]
        %s2611 = scalar_lea.vmem [#allocation6], 128
        %v2612 = vld [vmem:[%s2611] sm:$0xf]
        %v2613 = vld [vmem:[%s2611 + $0x4] sm:$0xf]
        %v2614 = vld [vmem:[%s2611 + $0x8] sm:$0xf]
        %v2615 = vld [vmem:[%s2611 + $0xc] sm:$0xf]
        %v2616 = vld [vmem:[%s2611 + $0x10] sm:$0xf]
        %v2617 = vld [vmem:[%s2611 + $0x14] sm:$0xf]
        %v2618 = vld [vmem:[%s2611 + $0x18] sm:$0xf]
        %v2619 = vld [vmem:[%s2611 + $0x1c] sm:$0xf]
        %v2645 = vunpack.c.l.b16 %v2586
        %v2646 = vunpack.c.l.b16 %v2587
        %v2647 = vunpack.c.l.b16 %v2588
        %v2648 = vunpack.c.l.b16 %v2589
        %v2649 = vunpack.c.l.b16 %v2590
        %v2650 = vunpack.c.l.b16 %v2591
        %v2651 = vunpack.c.l.b16 %v2592
        %v2652 = vunpack.c.l.b16 %v2593
        %v2653 = vunpack.c.l.b16 %v2594
        %v2654 = vunpack.c.l.b16 %v2595
        %v2655 = vunpack.c.l.b16 %v2596
        %v2656 = vunpack.c.l.b16 %v2597
        %v2657 = vunpack.c.l.b16 %v2598
        %v2658 = vunpack.c.l.b16 %v2599
        %v2659 = vunpack.c.l.b16 %v2600
        %v2660 = vunpack.c.l.b16 %v2601
        %v2661 = vunpack.c.l.b16 %v2602
        %v2662 = vunpack.c.l.b16 %v2603
        %v2663 = vunpack.c.l.b16 %v2604
        %v2664 = vunpack.c.l.b16 %v2605
        %v2665 = vunpack.c.l.b16 %v2606
        %v2666 = vunpack.c.l.b16 %v2607
        %v2667 = vunpack.c.l.b16 %v2608
        %v2668 = vunpack.c.l.b16 %v2609
        %v2669 = vunpack.c.l.b16 %v2610
        %v2670 = vpack.c.b16 %v2646, %v2645
        %v2671 = vpack.c.b16 %v2648, %v2647
        %v2672 = vpack.c.b16 %v2650, %v2649
        %v2673 = vpack.c.b16 %v2652, %v2651
        %v2674 = vpack.c.b16 %v2654, %v2653
        %v2675 = vpack.c.b16 %v2656, %v2655
        %v2676 = vpack.c.b16 %v2658, %v2657
        %v2677 = vpack.c.b16 %v2660, %v2659
        %v2678 = vpack.c.b16 %v2662, %v2661
        %v2679 = vpack.c.b16 %v2664, %v2663
        %v2680 = vpack.c.b16 %v2666, %v2665
        %v2681 = vpack.c.b16 %v2668, %v2667
        %v2682 = vpack.c.b16 %v2669, %v2669
        %v2684 = vshrl.u32 %v2670, 16
        %v2686 = vshll.u32 %v2670, 16
        %v2688 = vrot.slane %v2686, 1
        %v2689 = vor.u32 %v2684, %v2688
        %v2691 = vshll.u32 %v2671, 16
        %v2693 = vrot.slane %v2691, 1
        %v2694 = vsel %vm1608, %v2689, %v2693
        %v2695 = vshrl.u32 %v2671, 16
        %v2697 = vor.u32 %v2695, %v2693
        %v2699 = vshll.u32 %v2672, 16
        %v2701 = vrot.slane %v2699, 1
        %v2702 = vsel %vm1608, %v2697, %v2701
        %v2703 = vshrl.u32 %v2672, 16
        %v2705 = vor.u32 %v2703, %v2701
        %v2707 = vshll.u32 %v2673, 16
        %v2709 = vrot.slane %v2707, 1
        %v2710 = vsel %vm1608, %v2705, %v2709
        %v2711 = vshrl.u32 %v2673, 16
        %v2713 = vor.u32 %v2711, %v2709
        %v2715 = vshll.u32 %v2674, 16
        %v2717 = vrot.slane %v2715, 1
        %v2718 = vsel %vm1608, %v2713, %v2717
        %v2719 = vshrl.u32 %v2674, 16
        %v2721 = vor.u32 %v2719, %v2717
        %v2723 = vshll.u32 %v2675, 16
        %v2725 = vrot.slane %v2723, 1
        %v2726 = vsel %vm1608, %v2721, %v2725
        %v2727 = vshrl.u32 %v2675, 16
        %v2729 = vor.u32 %v2727, %v2725
        %v2731 = vshll.u32 %v2676, 16
        %v2733 = vrot.slane %v2731, 1
        %v2734 = vsel %vm1608, %v2729, %v2733
        %v2735 = vshrl.u32 %v2676, 16
        %v2737 = vor.u32 %v2735, %v2733
        %v2739 = vshll.u32 %v2677, 16
        %v2741 = vrot.slane %v2739, 1
        %v2742 = vsel %vm1608, %v2737, %v2741
        %v2743 = vshrl.u32 %v2677, 16
        %v2745 = vor.u32 %v2743, %v2741
        %v2747 = vshll.u32 %v2678, 16
        %v2749 = vrot.slane %v2747, 1
        %v2750 = vsel %vm1608, %v2745, %v2749
        %v2751 = vshrl.u32 %v2678, 16
        %v2753 = vor.u32 %v2751, %v2749
        %v2755 = vshll.u32 %v2679, 16
        %v2757 = vrot.slane %v2755, 1
        %v2758 = vsel %vm1608, %v2753, %v2757
        %v2759 = vshrl.u32 %v2679, 16
        %v2761 = vor.u32 %v2759, %v2757
        %v2763 = vshll.u32 %v2680, 16
        %v2765 = vrot.slane %v2763, 1
        %v2766 = vsel %vm1608, %v2761, %v2765
        %v2767 = vshrl.u32 %v2680, 16
        %v2769 = vor.u32 %v2767, %v2765
        %v2771 = vshll.u32 %v2681, 16
        %v2773 = vrot.slane %v2771, 1
        %v2774 = vsel %vm1608, %v2769, %v2773
        %v2775 = vshrl.u32 %v2681, 16
        %v2777 = vor.u32 %v2775, %v2773
        %v2779 = vshll.u32 %v2682, 16
        %v2781 = vrot.slane %v2779, 1
        %v2782 = vsel %vm1608, %v2777, %v2781
        %v2791 = vunpack.c.l.b16 %v2612
        %v2792 = vunpack.c.l.b16 %v2613
        %v2793 = vunpack.c.l.b16 %v2614
        %v2794 = vunpack.c.l.b16 %v2615
        %v2795 = vunpack.c.l.b16 %v2616
        %v2796 = vunpack.c.l.b16 %v2617
        %v2797 = vunpack.c.l.b16 %v2618
        %v2798 = vunpack.c.l.b16 %v2619
        %v2799 = vpack.c.b16 %v2792, %v2791
        %v2800 = vpack.c.b16 %v2794, %v2793
        %v2801 = vpack.c.b16 %v2796, %v2795
        %v2802 = vpack.c.b16 %v2798, %v2797
        %v2808 = vsel %vm1733, %v2694, 0
        %v2811 = vsel %vm1733, %v2702, 0
        %v2814 = vsel %vm1733, %v2710, 0
        %v2817 = vsel %vm1733, %v2718, 0
        %v2820 = vsel %vm1733, %v2726, 0
        %v2823 = vsel %vm1733, %v2734, 0
        %v2826 = vsel %vm1733, %v2742, 0
        %v2829 = vsel %vm1733, %v2750, 0
        %v2832 = vsel %vm1733, %v2758, 0
        %v2835 = vsel %vm1733, %v2766, 0
        %v2838 = vsel %vm1733, %v2774, 0
        %v2841 = vsel %vm1733, %v2782, 0
        %2843 = vmatprep.subr.bf16.mxu0 0
        %2844 = vmatpush1.bf16.msra.mxu0 0
        %2845 = vmatprep.subr.bf16.mxu0 0
        %2846 = vmatpush1.bf16.msra.mxu0 0
        %2847 = vmatprep.subr.bf16.mxu0 0
        %2848 = vmatpush1.bf16.msra.mxu0 0
        %2849 = vmatprep.subr.bf16.mxu0 0
        %2850 = vmatpush1.bf16.msra.mxu0 0
        %2851 = vmatprep.subr.bf16.mxu0 0
        %2852 = vmatpush1.bf16.msra.mxu0 %v2802
        %2853 = vmatprep.subr.bf16.mxu0 0
        %2854 = vmatpush1.bf16.msra.mxu0 %v2801
        %2855 = vmatprep.subr.bf16.mxu0 0
        %2856 = vmatpush1.bf16.msra.mxu0 %v2800
        %2857 = vmatprep.subr.bf16.mxu0 0
        %2858 = vmatpush1.bf16.msra.mxu0 %v2799
        %2859 = vmatprep.subr.bf16.mxu0 0
        %2860 = vmatpush2.bf16.msra.mxu0 0
        %2861 = vmatprep.subr.bf16.mxu0 0
        %2862 = vmatpush2.bf16.msra.mxu0 0
        %2863 = vmatprep.subr.bf16.mxu0 0
        %2864 = vmatpush2.bf16.msra.mxu0 0
        %2865 = vmatprep.subr.bf16.mxu0 0
        %2866 = vmatpush2.bf16.msra.mxu0 0
        %2867 = vmatprep.subr.bf16.mxu0 0
        %2868 = vmatpush2.bf16.msra.mxu0 0
        %2869 = vmatprep.subr.bf16.mxu0 0
        %2870 = vmatpush2.bf16.msra.mxu0 0
        %2871 = vmatprep.subr.bf16.mxu0 0
        %2872 = vmatpush2.bf16.msra.mxu0 0
        %2873 = vmatprep.subr.bf16.mxu0 0
        %2874 = vmatpush2.bf16.msra.mxu0 0
        %2875 = vmatprep.mubr.bf16.mxu0 0
        %2876 = vmatmul.mubr.bf16.gmra.mxu0 %v2808
        %v2877 = vpop.f32.mrf.mxu0
        %v2878 = vadd.f32 0.0, %v2877
        %v2879 = vpop.f32.mrf.mxu0
        %v2880 = vpop.f32.mrf.mxu0
        %v2881 = vadd.f32 0.0, %v2880
        %v2882 = vpop.f32.mrf.mxu0
        %2883 = vmatprep.mubr.bf16.mxu0 0
        %2884 = vmatmul.mubr.bf16.gmra.mxu0 %v2811
        %v2885 = vpop.f32.mrf.mxu0
        %v2886 = vpop.f32.mrf.mxu0
        %v2887 = vpop.f32.mrf.mxu0
        %v2888 = vadd.f32 0.0, %v2887
        %v2889 = vpop.f32.mrf.mxu0
        %2890 = vmatprep.mubr.bf16.mxu0 0
        %2891 = vmatmul.mubr.bf16.gmra.mxu0 %v2814
        %v2892 = vpop.f32.mrf.mxu0
        %v2893 = vadd.f32 0.0, %v2892
        %v2894 = vpop.f32.mrf.mxu0
        %v2895 = vpop.f32.mrf.mxu0
        %v2896 = vpop.f32.mrf.mxu0
        %2897 = vmatprep.mubr.bf16.mxu0 0
        %2898 = vmatmul.mubr.bf16.gmra.mxu0 %v2817
        %v2899 = vpop.f32.mrf.mxu0
        %v2900 = vadd.f32 0.0, %v2899
        %v2901 = vpop.f32.mrf.mxu0
        %v2902 = vpop.f32.mrf.mxu0
        %v2903 = vadd.f32 0.0, %v2902
        %v2904 = vpop.f32.mrf.mxu0
        %2905 = vmatprep.mubr.bf16.mxu0 0
        %2906 = vmatmul.mubr.bf16.gmra.mxu0 %v2820
        %v2907 = vpop.f32.mrf.mxu0
        %v2908 = vpop.f32.mrf.mxu0
        %v2909 = vpop.f32.mrf.mxu0
        %v2910 = vadd.f32 0.0, %v2909
        %v2911 = vpop.f32.mrf.mxu0
        %2912 = vmatprep.mubr.bf16.mxu0 0
        %2913 = vmatmul.mubr.bf16.gmra.mxu0 %v2823
        %v2914 = vpop.f32.mrf.mxu0
        %v2915 = vadd.f32 0.0, %v2914
        %v2916 = vpop.f32.mrf.mxu0
        %v2917 = vpop.f32.mrf.mxu0
        %v2918 = vpop.f32.mrf.mxu0
        %2919 = vmatprep.mubr.bf16.mxu0 0
        %2920 = vmatmul.mubr.bf16.gmra.mxu0 %v2826
        %v2921 = vpop.f32.mrf.mxu0
        %v2922 = vadd.f32 0.0, %v2921
        %v2923 = vpop.f32.mrf.mxu0
        %v2924 = vpop.f32.mrf.mxu0
        %v2925 = vadd.f32 0.0, %v2924
        %v2926 = vpop.f32.mrf.mxu0
        %2927 = vmatprep.mubr.bf16.mxu0 0
        %2928 = vmatmul.mubr.bf16.gmra.mxu0 %v2829
        %v2929 = vpop.f32.mrf.mxu0
        %v2930 = vpop.f32.mrf.mxu0
        %v2931 = vpop.f32.mrf.mxu0
        %v2932 = vadd.f32 0.0, %v2931
        %v2933 = vpop.f32.mrf.mxu0
        %2934 = vmatprep.mubr.bf16.mxu0 0
        %2935 = vmatmul.mubr.bf16.gmra.mxu0 %v2832
        %v2936 = vpop.f32.mrf.mxu0
        %v2937 = vadd.f32 0.0, %v2936
        %v2938 = vpop.f32.mrf.mxu0
        %v2939 = vpop.f32.mrf.mxu0
        %v2940 = vpop.f32.mrf.mxu0
        %2941 = vmatprep.mubr.bf16.mxu0 0
        %2942 = vmatmul.mubr.bf16.gmra.mxu0 %v2835
        %v2943 = vpop.f32.mrf.mxu0
        %v2944 = vadd.f32 0.0, %v2943
        %v2945 = vpop.f32.mrf.mxu0
        %v2946 = vpop.f32.mrf.mxu0
        %v2947 = vadd.f32 0.0, %v2946
        %v2948 = vpop.f32.mrf.mxu0
        %2949 = vmatprep.mubr.bf16.mxu0 0
        %2950 = vmatmul.mubr.bf16.gmra.mxu0 %v2838
        %v2951 = vpop.f32.mrf.mxu0
        %v2952 = vpop.f32.mrf.mxu0
        %v2953 = vpop.f32.mrf.mxu0
        %v2954 = vadd.f32 0.0, %v2953
        %v2955 = vpop.f32.mrf.mxu0
        %2956 = vmatprep.mubr.bf16.mxu0 0
        %2957 = vmatmul.mubr.bf16.gmra.mxu0 %v2841
        %v2958 = vpop.f32.mrf.mxu0
        %v2959 = vadd.f32 0.0, %v2958
        %v2960 = vpop.f32.mrf.mxu0
        %v2961 = vpop.f32.mrf.mxu0
        %v2962 = vpop.f32.mrf.mxu0
        %2963 = vdwg.mxu0
        %v2964 = vadd.f32 %v2570, %v2878
        %v2965 = vadd.f32 %v2571, %v2881
        %v2966 = vadd.f32 %v2572, %v2888
        %v2967 = vadd.f32 %v2573, %v2893
        %v2968 = vadd.f32 %v2574, %v2900
        %v2969 = vadd.f32 %v2575, %v2903
        %v2970 = vadd.f32 %v2576, %v2910
        %v2971 = vadd.f32 %v2577, %v2915
        %v2972 = vadd.f32 %v2578, %v2922
        %v2973 = vadd.f32 %v2579, %v2925
        %v2974 = vadd.f32 %v2580, %v2932
        %v2975 = vadd.f32 %v2581, %v2937
        %v2976 = vadd.f32 %v2582, %v2944
        %v2977 = vadd.f32 %v2583, %v2947
        %v2978 = vadd.f32 %v2584, %v2954
        %v2979 = vadd.f32 %v2585, %v2959
        %v2980 = vld [vmem:[#allocation2 + $0xc] sm:$0xe]
        %s2981 = scalar_lea.vmem [#allocation6], 160
        %v2982 = vld [vmem:[%s2981] sm:$0xf]
        %v2983 = vld [vmem:[%s2981 + $0x4] sm:$0xf]
        %v2984 = vld [vmem:[%s2981 + $0x8] sm:$0xf]
        %v2985 = vld [vmem:[%s2981 + $0xc] sm:$0xf]
        %v2986 = vld [vmem:[%s2981 + $0x10] sm:$0xf]
        %v2987 = vld [vmem:[%s2981 + $0x14] sm:$0xf]
        %v2988 = vld [vmem:[%s2981 + $0x18] sm:$0xf]
        %v2989 = vld [vmem:[%s2981 + $0x1c] sm:$0xf]
        %v2991 = vunpack.c.l.b16 %v2980
        %v2992 = vpack.c.b16 %v2646, %v2991
        %v2993 = vrot.slane %v2992, 1
        %v2994 = vrot.slane %v2671, 1
        %v2995 = vsel %vm2073, %v2993, %v2994
        %v2996 = vrot.slane %v2672, 1
        %v2997 = vsel %vm2073, %v2994, %v2996
        %v2998 = vrot.slane %v2673, 1
        %v2999 = vsel %vm2073, %v2996, %v2998
        %v3000 = vrot.slane %v2674, 1
        %v3001 = vsel %vm2073, %v2998, %v3000
        %v3002 = vrot.slane %v2675, 1
        %v3003 = vsel %vm2073, %v3000, %v3002
        %v3004 = vrot.slane %v2676, 1
        %v3005 = vsel %vm2073, %v3002, %v3004
        %v3006 = vrot.slane %v2677, 1
        %v3007 = vsel %vm2073, %v3004, %v3006
        %v3008 = vrot.slane %v2678, 1
        %v3009 = vsel %vm2073, %v3006, %v3008
        %v3010 = vrot.slane %v2679, 1
        %v3011 = vsel %vm2073, %v3008, %v3010
        %v3012 = vrot.slane %v2680, 1
        %v3013 = vsel %vm2073, %v3010, %v3012
        %v3014 = vrot.slane %v2681, 1
        %v3015 = vsel %vm2073, %v3012, %v3014
        %v3016 = vrot.slane %v2682, 1
        %v3017 = vsel %vm2073, %v3014, %v3016
        %v3026 = vunpack.c.l.b16 %v2982
        %v3027 = vunpack.c.l.b16 %v2983
        %v3028 = vunpack.c.l.b16 %v2984
        %v3029 = vunpack.c.l.b16 %v2985
        %v3030 = vunpack.c.l.b16 %v2986
        %v3031 = vunpack.c.l.b16 %v2987
        %v3032 = vunpack.c.l.b16 %v2988
        %v3033 = vunpack.c.l.b16 %v2989
        %v3034 = vpack.c.b16 %v3027, %v3026
        %v3035 = vpack.c.b16 %v3029, %v3028
        %v3036 = vpack.c.b16 %v3031, %v3030
        %v3037 = vpack.c.b16 %v3033, %v3032
        %v3043 = vsel %vm1733, %v2995, 0
        %v3046 = vsel %vm1733, %v2997, 0
        %v3049 = vsel %vm1733, %v2999, 0
        %v3052 = vsel %vm1733, %v3001, 0
        %v3055 = vsel %vm1733, %v3003, 0
        %v3058 = vsel %vm1733, %v3005, 0
        %v3061 = vsel %vm1733, %v3007, 0
        %v3064 = vsel %vm1733, %v3009, 0
        %v3067 = vsel %vm1733, %v3011, 0
        %v3070 = vsel %vm1733, %v3013, 0
        %v3073 = vsel %vm1733, %v3015, 0
        %v3076 = vsel %vm1733, %v3017, 0
        %3078 = vmatprep.subr.bf16.mxu0 0
        %3079 = vmatpush1.bf16.msra.mxu0 0
        %3080 = vmatprep.subr.bf16.mxu0 0
        %3081 = vmatpush1.bf16.msra.mxu0 0
        %3082 = vmatprep.subr.bf16.mxu0 0
        %3083 = vmatpush1.bf16.msra.mxu0 0
        %3084 = vmatprep.subr.bf16.mxu0 0
        %3085 = vmatpush1.bf16.msra.mxu0 0
        %3086 = vmatprep.subr.bf16.mxu0 0
        %3087 = vmatpush1.bf16.msra.mxu0 %v3037
        %3088 = vmatprep.subr.bf16.mxu0 0
        %3089 = vmatpush1.bf16.msra.mxu0 %v3036
        %3090 = vmatprep.subr.bf16.mxu0 0
        %3091 = vmatpush1.bf16.msra.mxu0 %v3035
        %3092 = vmatprep.subr.bf16.mxu0 0
        %3093 = vmatpush1.bf16.msra.mxu0 %v3034
        %3094 = vmatprep.subr.bf16.mxu0 0
        %3095 = vmatpush2.bf16.msra.mxu0 0
        %3096 = vmatprep.subr.bf16.mxu0 0
        %3097 = vmatpush2.bf16.msra.mxu0 0
        %3098 = vmatprep.subr.bf16.mxu0 0
        %3099 = vmatpush2.bf16.msra.mxu0 0
        %3100 = vmatprep.subr.bf16.mxu0 0
        %3101 = vmatpush2.bf16.msra.mxu0 0
        %3102 = vmatprep.subr.bf16.mxu0 0
        %3103 = vmatpush2.bf16.msra.mxu0 0
        %3104 = vmatprep.subr.bf16.mxu0 0
        %3105 = vmatpush2.bf16.msra.mxu0 0
        %3106 = vmatprep.subr.bf16.mxu0 0
        %3107 = vmatpush2.bf16.msra.mxu0 0
        %3108 = vmatprep.subr.bf16.mxu0 0
        %3109 = vmatpush2.bf16.msra.mxu0 0
        %3110 = vmatprep.mubr.bf16.mxu0 0
        %3111 = vmatmul.mubr.bf16.gmra.mxu0 %v3043
        %v3112 = vpop.f32.mrf.mxu0
        %v3113 = vadd.f32 0.0, %v3112
        %v3114 = vpop.f32.mrf.mxu0
        %v3115 = vpop.f32.mrf.mxu0
        %v3116 = vadd.f32 0.0, %v3115
        %v3117 = vpop.f32.mrf.mxu0
        %3118 = vmatprep.mubr.bf16.mxu0 0
        %3119 = vmatmul.mubr.bf16.gmra.mxu0 %v3046
        %v3120 = vpop.f32.mrf.mxu0
        %v3121 = vpop.f32.mrf.mxu0
        %v3122 = vpop.f32.mrf.mxu0
        %v3123 = vadd.f32 0.0, %v3122
        %v3124 = vpop.f32.mrf.mxu0
        %3125 = vmatprep.mubr.bf16.mxu0 0
        %3126 = vmatmul.mubr.bf16.gmra.mxu0 %v3049
        %v3127 = vpop.f32.mrf.mxu0
        %v3128 = vadd.f32 0.0, %v3127
        %v3129 = vpop.f32.mrf.mxu0
        %v3130 = vpop.f32.mrf.mxu0
        %v3131 = vpop.f32.mrf.mxu0
        %3132 = vmatprep.mubr.bf16.mxu0 0
        %3133 = vmatmul.mubr.bf16.gmra.mxu0 %v3052
        %v3134 = vpop.f32.mrf.mxu0
        %v3135 = vadd.f32 0.0, %v3134
        %v3136 = vpop.f32.mrf.mxu0
        %v3137 = vpop.f32.mrf.mxu0
        %v3138 = vadd.f32 0.0, %v3137
        %v3139 = vpop.f32.mrf.mxu0
        %3140 = vmatprep.mubr.bf16.mxu0 0
        %3141 = vmatmul.mubr.bf16.gmra.mxu0 %v3055
        %v3142 = vpop.f32.mrf.mxu0
        %v3143 = vpop.f32.mrf.mxu0
        %v3144 = vpop.f32.mrf.mxu0
        %v3145 = vadd.f32 0.0, %v3144
        %v3146 = vpop.f32.mrf.mxu0
        %3147 = vmatprep.mubr.bf16.mxu0 0
        %3148 = vmatmul.mubr.bf16.gmra.mxu0 %v3058
        %v3149 = vpop.f32.mrf.mxu0
        %v3150 = vadd.f32 0.0, %v3149
        %v3151 = vpop.f32.mrf.mxu0
        %v3152 = vpop.f32.mrf.mxu0
        %v3153 = vpop.f32.mrf.mxu0
        %3154 = vmatprep.mubr.bf16.mxu0 0
        %3155 = vmatmul.mubr.bf16.gmra.mxu0 %v3061
        %v3156 = vpop.f32.mrf.mxu0
        %v3157 = vadd.f32 0.0, %v3156
        %v3158 = vpop.f32.mrf.mxu0
        %v3159 = vpop.f32.mrf.mxu0
        %v3160 = vadd.f32 0.0, %v3159
        %v3161 = vpop.f32.mrf.mxu0
        %3162 = vmatprep.mubr.bf16.mxu0 0
        %3163 = vmatmul.mubr.bf16.gmra.mxu0 %v3064
        %v3164 = vpop.f32.mrf.mxu0
        %v3165 = vpop.f32.mrf.mxu0
        %v3166 = vpop.f32.mrf.mxu0
        %v3167 = vadd.f32 0.0, %v3166
        %v3168 = vpop.f32.mrf.mxu0
        %3169 = vmatprep.mubr.bf16.mxu0 0
        %3170 = vmatmul.mubr.bf16.gmra.mxu0 %v3067
        %v3171 = vpop.f32.mrf.mxu0
        %v3172 = vadd.f32 0.0, %v3171
        %v3173 = vpop.f32.mrf.mxu0
        %v3174 = vpop.f32.mrf.mxu0
        %v3175 = vpop.f32.mrf.mxu0
        %3176 = vmatprep.mubr.bf16.mxu0 0
        %3177 = vmatmul.mubr.bf16.gmra.mxu0 %v3070
        %v3178 = vpop.f32.mrf.mxu0
        %v3179 = vadd.f32 0.0, %v3178
        %v3180 = vpop.f32.mrf.mxu0
        %v3181 = vpop.f32.mrf.mxu0
        %v3182 = vadd.f32 0.0, %v3181
        %v3183 = vpop.f32.mrf.mxu0
        %3184 = vmatprep.mubr.bf16.mxu0 0
        %3185 = vmatmul.mubr.bf16.gmra.mxu0 %v3073
        %v3186 = vpop.f32.mrf.mxu0
        %v3187 = vpop.f32.mrf.mxu0
        %v3188 = vpop.f32.mrf.mxu0
        %v3189 = vadd.f32 0.0, %v3188
        %v3190 = vpop.f32.mrf.mxu0
        %3191 = vmatprep.mubr.bf16.mxu0 0
        %3192 = vmatmul.mubr.bf16.gmra.mxu0 %v3076
        %v3193 = vpop.f32.mrf.mxu0
        %v3194 = vadd.f32 0.0, %v3193
        %v3195 = vpop.f32.mrf.mxu0
        %v3196 = vpop.f32.mrf.mxu0
        %v3197 = vpop.f32.mrf.mxu0
        %3198 = vdwg.mxu0
        %v3199 = vadd.f32 %v2964, %v3113
        %v3200 = vadd.f32 %v2965, %v3116
        %v3201 = vadd.f32 %v2966, %v3123
        %v3202 = vadd.f32 %v2967, %v3128
        %v3203 = vadd.f32 %v2968, %v3135
        %v3204 = vadd.f32 %v2969, %v3138
        %v3205 = vadd.f32 %v2970, %v3145
        %v3206 = vadd.f32 %v2971, %v3150
        %v3207 = vadd.f32 %v2972, %v3157
        %v3208 = vadd.f32 %v2973, %v3160
        %v3209 = vadd.f32 %v2974, %v3167
        %v3210 = vadd.f32 %v2975, %v3172
        %v3211 = vadd.f32 %v2976, %v3179
        %v3212 = vadd.f32 %v2977, %v3182
        %v3213 = vadd.f32 %v2978, %v3189
        %v3214 = vadd.f32 %v2979, %v3194
        %v3215 = vld [vmem:[#allocation2 + $0x18] sm:$0xf]
        %v3216 = vld [vmem:[#allocation2 + $0x1c] sm:$0xf]
        %v3217 = vld [vmem:[#allocation2 + $0x20] sm:$0xf]
        %v3218 = vld [vmem:[#allocation2 + $0x24] sm:$0xf]
        %v3219 = vld [vmem:[#allocation2 + $0x28] sm:$0xf]
        %v3220 = vld [vmem:[#allocation2 + $0x2c] sm:$0xf]
        %v3221 = vld [vmem:[#allocation2 + $0x30] sm:$0xf]
        %v3222 = vld [vmem:[#allocation2 + $0x34] sm:$0xf]
        %v3223 = vld [vmem:[#allocation2 + $0x38] sm:$0xf]
        %v3224 = vld [vmem:[#allocation2 + $0x3c] sm:$0xf]
        %v3225 = vld [vmem:[#allocation2 + $0x40] sm:$0xf]
        %v3226 = vld [vmem:[#allocation2 + $0x44] sm:$0xf]
        %v3227 = vld [vmem:[#allocation2 + $0x48] sm:$0xf]
        %v3228 = vld [vmem:[#allocation2 + $0x4c] sm:$0xf]
        %v3229 = vld [vmem:[#allocation2 + $0x50] sm:$0xf]
        %v3230 = vld [vmem:[#allocation2 + $0x54] sm:$0xf]
        %v3231 = vld [vmem:[#allocation2 + $0x58] sm:$0xf]
        %v3232 = vld [vmem:[#allocation2 + $0x5c] sm:$0xf]
        %v3233 = vld [vmem:[#allocation2 + $0x60] sm:$0xf]
        %v3234 = vld [vmem:[#allocation2 + $0x64] sm:$0xf]
        %v3235 = vld [vmem:[#allocation2 + $0x68] sm:$0xf]
        %v3236 = vld [vmem:[#allocation2 + $0x6c] sm:$0xf]
        %v3237 = vld [vmem:[#allocation2 + $0x70] sm:$0xf]
        %v3238 = vld [vmem:[#allocation2 + $0x74] sm:$0xf]
        %s3239 = scalar_lea.vmem [#allocation6], 192
        %v3240 = vld [vmem:[%s3239] sm:$0xf]
        %v3241 = vld [vmem:[%s3239 + $0x4] sm:$0xf]
        %v3242 = vld [vmem:[%s3239 + $0x8] sm:$0xf]
        %v3243 = vld [vmem:[%s3239 + $0xc] sm:$0xf]
        %v3244 = vld [vmem:[%s3239 + $0x10] sm:$0xf]
        %v3245 = vld [vmem:[%s3239 + $0x14] sm:$0xf]
        %v3246 = vld [vmem:[%s3239 + $0x18] sm:$0xf]
        %v3247 = vld [vmem:[%s3239 + $0x1c] sm:$0xf]
        %v3272 = vunpack.c.l.b16 %v3215
        %v3273 = vunpack.c.l.b16 %v3216
        %v3274 = vunpack.c.l.b16 %v3217
        %v3275 = vunpack.c.l.b16 %v3218
        %v3276 = vunpack.c.l.b16 %v3219
        %v3277 = vunpack.c.l.b16 %v3220
        %v3278 = vunpack.c.l.b16 %v3221
        %v3279 = vunpack.c.l.b16 %v3222
        %v3280 = vunpack.c.l.b16 %v3223
        %v3281 = vunpack.c.l.b16 %v3224
        %v3282 = vunpack.c.l.b16 %v3225
        %v3283 = vunpack.c.l.b16 %v3226
        %v3284 = vunpack.c.l.b16 %v3227
        %v3285 = vunpack.c.l.b16 %v3228
        %v3286 = vunpack.c.l.b16 %v3229
        %v3287 = vunpack.c.l.b16 %v3230
        %v3288 = vunpack.c.l.b16 %v3231
        %v3289 = vunpack.c.l.b16 %v3232
        %v3290 = vunpack.c.l.b16 %v3233
        %v3291 = vunpack.c.l.b16 %v3234
        %v3292 = vunpack.c.l.b16 %v3235
        %v3293 = vunpack.c.l.b16 %v3236
        %v3294 = vunpack.c.l.b16 %v3237
        %v3295 = vunpack.c.l.b16 %v3238
        %v3296 = vpack.c.b16 %v3273, %v3272
        %v3297 = vpack.c.b16 %v3275, %v3274
        %v3298 = vpack.c.b16 %v3277, %v3276
        %v3299 = vpack.c.b16 %v3279, %v3278
        %v3300 = vpack.c.b16 %v3281, %v3280
        %v3301 = vpack.c.b16 %v3283, %v3282
        %v3302 = vpack.c.b16 %v3285, %v3284
        %v3303 = vpack.c.b16 %v3287, %v3286
        %v3304 = vpack.c.b16 %v3289, %v3288
        %v3305 = vpack.c.b16 %v3291, %v3290
        %v3306 = vpack.c.b16 %v3293, %v3292
        %v3307 = vpack.c.b16 %v3295, %v3294
        %v3316 = vunpack.c.l.b16 %v3240
        %v3317 = vunpack.c.l.b16 %v3241
        %v3318 = vunpack.c.l.b16 %v3242
        %v3319 = vunpack.c.l.b16 %v3243
        %v3320 = vunpack.c.l.b16 %v3244
        %v3321 = vunpack.c.l.b16 %v3245
        %v3322 = vunpack.c.l.b16 %v3246
        %v3323 = vunpack.c.l.b16 %v3247
        %v3324 = vpack.c.b16 %v3317, %v3316
        %v3325 = vpack.c.b16 %v3319, %v3318
        %v3326 = vpack.c.b16 %v3321, %v3320
        %v3327 = vpack.c.b16 %v3323, %v3322
        %v3333 = vsel %vm1733, %v3296, 0
        %v3336 = vsel %vm1733, %v3297, 0
        %v3339 = vsel %vm1733, %v3298, 0
        %v3342 = vsel %vm1733, %v3299, 0
        %v3345 = vsel %vm1733, %v3300, 0
        %v3348 = vsel %vm1733, %v3301, 0
        %v3351 = vsel %vm1733, %v3302, 0
        %v3354 = vsel %vm1733, %v3303, 0
        %v3357 = vsel %vm1733, %v3304, 0
        %v3360 = vsel %vm1733, %v3305, 0
        %v3363 = vsel %vm1733, %v3306, 0
        %v3366 = vsel %vm1733, %v3307, 0
        %3368 = vmatprep.subr.bf16.mxu0 0
        %3369 = vmatpush1.bf16.msra.mxu0 0
        %3370 = vmatprep.subr.bf16.mxu0 0
        %3371 = vmatpush1.bf16.msra.mxu0 0
        %3372 = vmatprep.subr.bf16.mxu0 0
        %3373 = vmatpush1.bf16.msra.mxu0 0
        %3374 = vmatprep.subr.bf16.mxu0 0
        %3375 = vmatpush1.bf16.msra.mxu0 0
        %3376 = vmatprep.subr.bf16.mxu0 0
        %3377 = vmatpush1.bf16.msra.mxu0 %v3327
        %3378 = vmatprep.subr.bf16.mxu0 0
        %3379 = vmatpush1.bf16.msra.mxu0 %v3326
        %3380 = vmatprep.subr.bf16.mxu0 0
        %3381 = vmatpush1.bf16.msra.mxu0 %v3325
        %3382 = vmatprep.subr.bf16.mxu0 0
        %3383 = vmatpush1.bf16.msra.mxu0 %v3324
        %3384 = vmatprep.subr.bf16.mxu0 0
        %3385 = vmatpush2.bf16.msra.mxu0 0
        %3386 = vmatprep.subr.bf16.mxu0 0
        %3387 = vmatpush2.bf16.msra.mxu0 0
        %3388 = vmatprep.subr.bf16.mxu0 0
        %3389 = vmatpush2.bf16.msra.mxu0 0
        %3390 = vmatprep.subr.bf16.mxu0 0
        %3391 = vmatpush2.bf16.msra.mxu0 0
        %3392 = vmatprep.subr.bf16.mxu0 0
        %3393 = vmatpush2.bf16.msra.mxu0 0
        %3394 = vmatprep.subr.bf16.mxu0 0
        %3395 = vmatpush2.bf16.msra.mxu0 0
        %3396 = vmatprep.subr.bf16.mxu0 0
        %3397 = vmatpush2.bf16.msra.mxu0 0
        %3398 = vmatprep.subr.bf16.mxu0 0
        %3399 = vmatpush2.bf16.msra.mxu0 0
        %3400 = vmatprep.mubr.bf16.mxu0 0
        %3401 = vmatmul.mubr.bf16.gmra.mxu0 %v3333
        %v3402 = vpop.f32.mrf.mxu0
        %v3403 = vadd.f32 0.0, %v3402
        %v3404 = vpop.f32.mrf.mxu0
        %v3405 = vpop.f32.mrf.mxu0
        %v3406 = vadd.f32 0.0, %v3405
        %v3407 = vpop.f32.mrf.mxu0
        %3408 = vmatprep.mubr.bf16.mxu0 0
        %3409 = vmatmul.mubr.bf16.gmra.mxu0 %v3336
        %v3410 = vpop.f32.mrf.mxu0
        %v3411 = vpop.f32.mrf.mxu0
        %v3412 = vpop.f32.mrf.mxu0
        %v3413 = vadd.f32 0.0, %v3412
        %v3414 = vpop.f32.mrf.mxu0
        %3415 = vmatprep.mubr.bf16.mxu0 0
        %3416 = vmatmul.mubr.bf16.gmra.mxu0 %v3339
        %v3417 = vpop.f32.mrf.mxu0
        %v3418 = vadd.f32 0.0, %v3417
        %v3419 = vpop.f32.mrf.mxu0
        %v3420 = vpop.f32.mrf.mxu0
        %v3421 = vpop.f32.mrf.mxu0
        %3422 = vmatprep.mubr.bf16.mxu0 0
        %3423 = vmatmul.mubr.bf16.gmra.mxu0 %v3342
        %v3424 = vpop.f32.mrf.mxu0
        %v3425 = vadd.f32 0.0, %v3424
        %v3426 = vpop.f32.mrf.mxu0
        %v3427 = vpop.f32.mrf.mxu0
        %v3428 = vadd.f32 0.0, %v3427
        %v3429 = vpop.f32.mrf.mxu0
        %3430 = vmatprep.mubr.bf16.mxu0 0
        %3431 = vmatmul.mubr.bf16.gmra.mxu0 %v3345
        %v3432 = vpop.f32.mrf.mxu0
        %v3433 = vpop.f32.mrf.mxu0
        %v3434 = vpop.f32.mrf.mxu0
        %v3435 = vadd.f32 0.0, %v3434
        %v3436 = vpop.f32.mrf.mxu0
        %3437 = vmatprep.mubr.bf16.mxu0 0
        %3438 = vmatmul.mubr.bf16.gmra.mxu0 %v3348
        %v3439 = vpop.f32.mrf.mxu0
        %v3440 = vadd.f32 0.0, %v3439
        %v3441 = vpop.f32.mrf.mxu0
        %v3442 = vpop.f32.mrf.mxu0
        %v3443 = vpop.f32.mrf.mxu0
        %3444 = vmatprep.mubr.bf16.mxu0 0
        %3445 = vmatmul.mubr.bf16.gmra.mxu0 %v3351
        %v3446 = vpop.f32.mrf.mxu0
        %v3447 = vadd.f32 0.0, %v3446
        %v3448 = vpop.f32.mrf.mxu0
        %v3449 = vpop.f32.mrf.mxu0
        %v3450 = vadd.f32 0.0, %v3449
        %v3451 = vpop.f32.mrf.mxu0
        %3452 = vmatprep.mubr.bf16.mxu0 0
        %3453 = vmatmul.mubr.bf16.gmra.mxu0 %v3354
        %v3454 = vpop.f32.mrf.mxu0
        %v3455 = vpop.f32.mrf.mxu0
        %v3456 = vpop.f32.mrf.mxu0
        %v3457 = vadd.f32 0.0, %v3456
        %v3458 = vpop.f32.mrf.mxu0
        %3459 = vmatprep.mubr.bf16.mxu0 0
        %3460 = vmatmul.mubr.bf16.gmra.mxu0 %v3357
        %v3461 = vpop.f32.mrf.mxu0
        %v3462 = vadd.f32 0.0, %v3461
        %v3463 = vpop.f32.mrf.mxu0
        %v3464 = vpop.f32.mrf.mxu0
        %v3465 = vpop.f32.mrf.mxu0
        %3466 = vmatprep.mubr.bf16.mxu0 0
        %3467 = vmatmul.mubr.bf16.gmra.mxu0 %v3360
        %v3468 = vpop.f32.mrf.mxu0
        %v3469 = vadd.f32 0.0, %v3468
        %v3470 = vpop.f32.mrf.mxu0
        %v3471 = vpop.f32.mrf.mxu0
        %v3472 = vadd.f32 0.0, %v3471
        %v3473 = vpop.f32.mrf.mxu0
        %3474 = vmatprep.mubr.bf16.mxu0 0
        %3475 = vmatmul.mubr.bf16.gmra.mxu0 %v3363
        %v3476 = vpop.f32.mrf.mxu0
        %v3477 = vpop.f32.mrf.mxu0
        %v3478 = vpop.f32.mrf.mxu0
        %v3479 = vadd.f32 0.0, %v3478
        %v3480 = vpop.f32.mrf.mxu0
        %3481 = vmatprep.mubr.bf16.mxu0 0
        %3482 = vmatmul.mubr.bf16.gmra.mxu0 %v3366
        %v3483 = vpop.f32.mrf.mxu0
        %v3484 = vadd.f32 0.0, %v3483
        %v3485 = vpop.f32.mrf.mxu0
        %v3486 = vpop.f32.mrf.mxu0
        %v3487 = vpop.f32.mrf.mxu0
        %3488 = vdwg.mxu0
        %v3489 = vadd.f32 %v3199, %v3403
        %v3490 = vadd.f32 %v3200, %v3406
        %v3491 = vadd.f32 %v3201, %v3413
        %v3492 = vadd.f32 %v3202, %v3418
        %v3493 = vadd.f32 %v3203, %v3425
        %v3494 = vadd.f32 %v3204, %v3428
        %v3495 = vadd.f32 %v3205, %v3435
        %v3496 = vadd.f32 %v3206, %v3440
        %v3497 = vadd.f32 %v3207, %v3447
        %v3498 = vadd.f32 %v3208, %v3450
        %v3499 = vadd.f32 %v3209, %v3457
        %v3500 = vadd.f32 %v3210, %v3462
        %v3501 = vadd.f32 %v3211, %v3469
        %v3502 = vadd.f32 %v3212, %v3472
        %v3503 = vadd.f32 %v3213, %v3479
        %v3504 = vadd.f32 %v3214, %v3484
        %v3505 = vld [vmem:[#allocation2 + $0x18] sm:$0xf]
        %v3506 = vld [vmem:[#allocation2 + $0x1c] sm:$0xf]
        %v3507 = vld [vmem:[#allocation2 + $0x20] sm:$0xf]
        %v3508 = vld [vmem:[#allocation2 + $0x24] sm:$0xf]
        %v3509 = vld [vmem:[#allocation2 + $0x28] sm:$0xf]
        %v3510 = vld [vmem:[#allocation2 + $0x2c] sm:$0xf]
        %v3511 = vld [vmem:[#allocation2 + $0x30] sm:$0xf]
        %v3512 = vld [vmem:[#allocation2 + $0x34] sm:$0xf]
        %v3513 = vld [vmem:[#allocation2 + $0x38] sm:$0xf]
        %v3514 = vld [vmem:[#allocation2 + $0x3c] sm:$0xf]
        %v3515 = vld [vmem:[#allocation2 + $0x40] sm:$0xf]
        %v3516 = vld [vmem:[#allocation2 + $0x44] sm:$0xf]
        %v3517 = vld [vmem:[#allocation2 + $0x48] sm:$0xf]
        %v3518 = vld [vmem:[#allocation2 + $0x4c] sm:$0xf]
        %v3519 = vld [vmem:[#allocation2 + $0x50] sm:$0xf]
        %v3520 = vld [vmem:[#allocation2 + $0x54] sm:$0xf]
        %v3521 = vld [vmem:[#allocation2 + $0x58] sm:$0xf]
        %v3522 = vld [vmem:[#allocation2 + $0x5c] sm:$0xf]
        %v3523 = vld [vmem:[#allocation2 + $0x60] sm:$0xf]
        %v3524 = vld [vmem:[#allocation2 + $0x64] sm:$0xf]
        %v3525 = vld [vmem:[#allocation2 + $0x68] sm:$0xf]
        %v3526 = vld [vmem:[#allocation2 + $0x6c] sm:$0xf]
        %v3527 = vld [vmem:[#allocation2 + $0x70] sm:$0xf]
        %v3528 = vld [vmem:[#allocation2 + $0x74] sm:$0xf]
        %v3529 = vld [vmem:[#allocation2 + $0x78] sm:$0x1]
        %s3530 = scalar_lea.vmem [#allocation6], 224
        %v3531 = vld [vmem:[%s3530] sm:$0xf]
        %v3532 = vld [vmem:[%s3530 + $0x4] sm:$0xf]
        %v3533 = vld [vmem:[%s3530 + $0x8] sm:$0xf]
        %v3534 = vld [vmem:[%s3530 + $0xc] sm:$0xf]
        %v3535 = vld [vmem:[%s3530 + $0x10] sm:$0xf]
        %v3536 = vld [vmem:[%s3530 + $0x14] sm:$0xf]
        %v3537 = vld [vmem:[%s3530 + $0x18] sm:$0xf]
        %v3538 = vld [vmem:[%s3530 + $0x1c] sm:$0xf]
        %v3564 = vunpack.c.l.b16 %v3505
        %v3565 = vunpack.c.l.b16 %v3506
        %v3566 = vunpack.c.l.b16 %v3507
        %v3567 = vunpack.c.l.b16 %v3508
        %v3568 = vunpack.c.l.b16 %v3509
        %v3569 = vunpack.c.l.b16 %v3510
        %v3570 = vunpack.c.l.b16 %v3511
        %v3571 = vunpack.c.l.b16 %v3512
        %v3572 = vunpack.c.l.b16 %v3513
        %v3573 = vunpack.c.l.b16 %v3514
        %v3574 = vunpack.c.l.b16 %v3515
        %v3575 = vunpack.c.l.b16 %v3516
        %v3576 = vunpack.c.l.b16 %v3517
        %v3577 = vunpack.c.l.b16 %v3518
        %v3578 = vunpack.c.l.b16 %v3519
        %v3579 = vunpack.c.l.b16 %v3520
        %v3580 = vunpack.c.l.b16 %v3521
        %v3581 = vunpack.c.l.b16 %v3522
        %v3582 = vunpack.c.l.b16 %v3523
        %v3583 = vunpack.c.l.b16 %v3524
        %v3584 = vunpack.c.l.b16 %v3525
        %v3585 = vunpack.c.l.b16 %v3526
        %v3586 = vunpack.c.l.b16 %v3527
        %v3587 = vunpack.c.l.b16 %v3528
        %v3588 = vunpack.c.l.b16 %v3529
        %v3589 = vpack.c.b16 %v3565, %v3564
        %v3590 = vpack.c.b16 %v3567, %v3566
        %v3591 = vpack.c.b16 %v3569, %v3568
        %v3592 = vpack.c.b16 %v3571, %v3570
        %v3593 = vpack.c.b16 %v3573, %v3572
        %v3594 = vpack.c.b16 %v3575, %v3574
        %v3595 = vpack.c.b16 %v3577, %v3576
        %v3596 = vpack.c.b16 %v3579, %v3578
        %v3597 = vpack.c.b16 %v3581, %v3580
        %v3598 = vpack.c.b16 %v3583, %v3582
        %v3599 = vpack.c.b16 %v3585, %v3584
        %v3600 = vpack.c.b16 %v3587, %v3586
        %v3601 = vpack.c.b16 %v3588, %v3588
        %v3603 = vshrl.u32 %v3589, 16
        %v3605 = vshll.u32 %v3589, 16
        %v3607 = vrot.slane %v3605, 1
        %v3608 = vor.u32 %v3603, %v3607
        %v3610 = vshll.u32 %v3590, 16
        %v3612 = vrot.slane %v3610, 1
        %v3613 = vsel %vm1608, %v3608, %v3612
        %v3614 = vshrl.u32 %v3590, 16
        %v3616 = vor.u32 %v3614, %v3612
        %v3618 = vshll.u32 %v3591, 16
        %v3620 = vrot.slane %v3618, 1
        %v3621 = vsel %vm1608, %v3616, %v3620
        %v3622 = vshrl.u32 %v3591, 16
        %v3624 = vor.u32 %v3622, %v3620
        %v3626 = vshll.u32 %v3592, 16
        %v3628 = vrot.slane %v3626, 1
        %v3629 = vsel %vm1608, %v3624, %v3628
        %v3630 = vshrl.u32 %v3592, 16
        %v3632 = vor.u32 %v3630, %v3628
        %v3634 = vshll.u32 %v3593, 16
        %v3636 = vrot.slane %v3634, 1
        %v3637 = vsel %vm1608, %v3632, %v3636
        %v3638 = vshrl.u32 %v3593, 16
        %v3640 = vor.u32 %v3638, %v3636
        %v3642 = vshll.u32 %v3594, 16
        %v3644 = vrot.slane %v3642, 1
        %v3645 = vsel %vm1608, %v3640, %v3644
        %v3646 = vshrl.u32 %v3594, 16
        %v3648 = vor.u32 %v3646, %v3644
        %v3650 = vshll.u32 %v3595, 16
        %v3652 = vrot.slane %v3650, 1
        %v3653 = vsel %vm1608, %v3648, %v3652
        %v3654 = vshrl.u32 %v3595, 16
        %v3656 = vor.u32 %v3654, %v3652
        %v3658 = vshll.u32 %v3596, 16
        %v3660 = vrot.slane %v3658, 1
        %v3661 = vsel %vm1608, %v3656, %v3660
        %v3662 = vshrl.u32 %v3596, 16
        %v3664 = vor.u32 %v3662, %v3660
        %v3666 = vshll.u32 %v3597, 16
        %v3668 = vrot.slane %v3666, 1
        %v3669 = vsel %vm1608, %v3664, %v3668
        %v3670 = vshrl.u32 %v3597, 16
        %v3672 = vor.u32 %v3670, %v3668
        %v3674 = vshll.u32 %v3598, 16
        %v3676 = vrot.slane %v3674, 1
        %v3677 = vsel %vm1608, %v3672, %v3676
        %v3678 = vshrl.u32 %v3598, 16
        %v3680 = vor.u32 %v3678, %v3676
        %v3682 = vshll.u32 %v3599, 16
        %v3684 = vrot.slane %v3682, 1
        %v3685 = vsel %vm1608, %v3680, %v3684
        %v3686 = vshrl.u32 %v3599, 16
        %v3688 = vor.u32 %v3686, %v3684
        %v3690 = vshll.u32 %v3600, 16
        %v3692 = vrot.slane %v3690, 1
        %v3693 = vsel %vm1608, %v3688, %v3692
        %v3694 = vshrl.u32 %v3600, 16
        %v3696 = vor.u32 %v3694, %v3692
        %v3698 = vshll.u32 %v3601, 16
        %v3700 = vrot.slane %v3698, 1
        %v3701 = vsel %vm1608, %v3696, %v3700
        %v3710 = vunpack.c.l.b16 %v3531
        %v3711 = vunpack.c.l.b16 %v3532
        %v3712 = vunpack.c.l.b16 %v3533
        %v3713 = vunpack.c.l.b16 %v3534
        %v3714 = vunpack.c.l.b16 %v3535
        %v3715 = vunpack.c.l.b16 %v3536
        %v3716 = vunpack.c.l.b16 %v3537
        %v3717 = vunpack.c.l.b16 %v3538
        %v3718 = vpack.c.b16 %v3711, %v3710
        %v3719 = vpack.c.b16 %v3713, %v3712
        %v3720 = vpack.c.b16 %v3715, %v3714
        %v3721 = vpack.c.b16 %v3717, %v3716
        %v3727 = vsel %vm1733, %v3613, 0
        %v3730 = vsel %vm1733, %v3621, 0
        %v3733 = vsel %vm1733, %v3629, 0
        %v3736 = vsel %vm1733, %v3637, 0
        %v3739 = vsel %vm1733, %v3645, 0
        %v3742 = vsel %vm1733, %v3653, 0
        %v3745 = vsel %vm1733, %v3661, 0
        %v3748 = vsel %vm1733, %v3669, 0
        %v3751 = vsel %vm1733, %v3677, 0
        %v3754 = vsel %vm1733, %v3685, 0
        %v3757 = vsel %vm1733, %v3693, 0
        %v3760 = vsel %vm1733, %v3701, 0
        %3762 = vmatprep.subr.bf16.mxu0 0
        %3763 = vmatpush1.bf16.msra.mxu0 0
        %3764 = vmatprep.subr.bf16.mxu0 0
        %3765 = vmatpush1.bf16.msra.mxu0 0
        %3766 = vmatprep.subr.bf16.mxu0 0
        %3767 = vmatpush1.bf16.msra.mxu0 0
        %3768 = vmatprep.subr.bf16.mxu0 0
        %3769 = vmatpush1.bf16.msra.mxu0 0
        %3770 = vmatprep.subr.bf16.mxu0 0
        %3771 = vmatpush1.bf16.msra.mxu0 %v3721
        %3772 = vmatprep.subr.bf16.mxu0 0
        %3773 = vmatpush1.bf16.msra.mxu0 %v3720
        %3774 = vmatprep.subr.bf16.mxu0 0
        %3775 = vmatpush1.bf16.msra.mxu0 %v3719
        %3776 = vmatprep.subr.bf16.mxu0 0
        %3777 = vmatpush1.bf16.msra.mxu0 %v3718
        %3778 = vmatprep.subr.bf16.mxu0 0
        %3779 = vmatpush2.bf16.msra.mxu0 0
        %3780 = vmatprep.subr.bf16.mxu0 0
        %3781 = vmatpush2.bf16.msra.mxu0 0
        %3782 = vmatprep.subr.bf16.mxu0 0
        %3783 = vmatpush2.bf16.msra.mxu0 0
        %3784 = vmatprep.subr.bf16.mxu0 0
        %3785 = vmatpush2.bf16.msra.mxu0 0
        %3786 = vmatprep.subr.bf16.mxu0 0
        %3787 = vmatpush2.bf16.msra.mxu0 0
        %3788 = vmatprep.subr.bf16.mxu0 0
        %3789 = vmatpush2.bf16.msra.mxu0 0
        %3790 = vmatprep.subr.bf16.mxu0 0
        %3791 = vmatpush2.bf16.msra.mxu0 0
        %3792 = vmatprep.subr.bf16.mxu0 0
        %3793 = vmatpush2.bf16.msra.mxu0 0
        %3794 = vmatprep.mubr.bf16.mxu0 0
        %3795 = vmatmul.mubr.bf16.gmra.mxu0 %v3727
        %v3796 = vpop.f32.mrf.mxu0
        %v3797 = vadd.f32 0.0, %v3796
        %v3798 = vpop.f32.mrf.mxu0
        %v3799 = vpop.f32.mrf.mxu0
        %v3800 = vadd.f32 0.0, %v3799
        %v3801 = vpop.f32.mrf.mxu0
        %3802 = vmatprep.mubr.bf16.mxu0 0
        %3803 = vmatmul.mubr.bf16.gmra.mxu0 %v3730
        %v3804 = vpop.f32.mrf.mxu0
        %v3805 = vpop.f32.mrf.mxu0
        %v3806 = vpop.f32.mrf.mxu0
        %v3807 = vadd.f32 0.0, %v3806
        %v3808 = vpop.f32.mrf.mxu0
        %3809 = vmatprep.mubr.bf16.mxu0 0
        %3810 = vmatmul.mubr.bf16.gmra.mxu0 %v3733
        %v3811 = vpop.f32.mrf.mxu0
        %v3812 = vadd.f32 0.0, %v3811
        %v3813 = vpop.f32.mrf.mxu0
        %v3814 = vpop.f32.mrf.mxu0
        %v3815 = vpop.f32.mrf.mxu0
        %3816 = vmatprep.mubr.bf16.mxu0 0
        %3817 = vmatmul.mubr.bf16.gmra.mxu0 %v3736
        %v3818 = vpop.f32.mrf.mxu0
        %v3819 = vadd.f32 0.0, %v3818
        %v3820 = vpop.f32.mrf.mxu0
        %v3821 = vpop.f32.mrf.mxu0
        %v3822 = vadd.f32 0.0, %v3821
        %v3823 = vpop.f32.mrf.mxu0
        %3824 = vmatprep.mubr.bf16.mxu0 0
        %3825 = vmatmul.mubr.bf16.gmra.mxu0 %v3739
        %v3826 = vpop.f32.mrf.mxu0
        %v3827 = vpop.f32.mrf.mxu0
        %v3828 = vpop.f32.mrf.mxu0
        %v3829 = vadd.f32 0.0, %v3828
        %v3830 = vpop.f32.mrf.mxu0
        %3831 = vmatprep.mubr.bf16.mxu0 0
        %3832 = vmatmul.mubr.bf16.gmra.mxu0 %v3742
        %v3833 = vpop.f32.mrf.mxu0
        %v3834 = vadd.f32 0.0, %v3833
        %v3835 = vpop.f32.mrf.mxu0
        %v3836 = vpop.f32.mrf.mxu0
        %v3837 = vpop.f32.mrf.mxu0
        %3838 = vmatprep.mubr.bf16.mxu0 0
        %3839 = vmatmul.mubr.bf16.gmra.mxu0 %v3745
        %v3840 = vpop.f32.mrf.mxu0
        %v3841 = vadd.f32 0.0, %v3840
        %v3842 = vpop.f32.mrf.mxu0
        %v3843 = vpop.f32.mrf.mxu0
        %v3844 = vadd.f32 0.0, %v3843
        %v3845 = vpop.f32.mrf.mxu0
        %3846 = vmatprep.mubr.bf16.mxu0 0
        %3847 = vmatmul.mubr.bf16.gmra.mxu0 %v3748
        %v3848 = vpop.f32.mrf.mxu0
        %v3849 = vpop.f32.mrf.mxu0
        %v3850 = vpop.f32.mrf.mxu0
        %v3851 = vadd.f32 0.0, %v3850
        %v3852 = vpop.f32.mrf.mxu0
        %3853 = vmatprep.mubr.bf16.mxu0 0
        %3854 = vmatmul.mubr.bf16.gmra.mxu0 %v3751
        %v3855 = vpop.f32.mrf.mxu0
        %v3856 = vadd.f32 0.0, %v3855
        %v3857 = vpop.f32.mrf.mxu0
        %v3858 = vpop.f32.mrf.mxu0
        %v3859 = vpop.f32.mrf.mxu0
        %3860 = vmatprep.mubr.bf16.mxu0 0
        %3861 = vmatmul.mubr.bf16.gmra.mxu0 %v3754
        %v3862 = vpop.f32.mrf.mxu0
        %v3863 = vadd.f32 0.0, %v3862
        %v3864 = vpop.f32.mrf.mxu0
        %v3865 = vpop.f32.mrf.mxu0
        %v3866 = vadd.f32 0.0, %v3865
        %v3867 = vpop.f32.mrf.mxu0
        %3868 = vmatprep.mubr.bf16.mxu0 0
        %3869 = vmatmul.mubr.bf16.gmra.mxu0 %v3757
        %v3870 = vpop.f32.mrf.mxu0
        %v3871 = vpop.f32.mrf.mxu0
        %v3872 = vpop.f32.mrf.mxu0
        %v3873 = vadd.f32 0.0, %v3872
        %v3874 = vpop.f32.mrf.mxu0
        %3875 = vmatprep.mubr.bf16.mxu0 0
        %3876 = vmatmul.mubr.bf16.gmra.mxu0 %v3760
        %v3877 = vpop.f32.mrf.mxu0
        %v3878 = vadd.f32 0.0, %v3877
        %v3879 = vpop.f32.mrf.mxu0
        %v3880 = vpop.f32.mrf.mxu0
        %v3881 = vpop.f32.mrf.mxu0
        %3882 = vdwg.mxu0
        %v3883 = vadd.f32 %v3489, %v3797
        %v3884 = vadd.f32 %v3490, %v3800
        %v3885 = vadd.f32 %v3491, %v3807
        %v3886 = vadd.f32 %v3492, %v3812
        %v3887 = vadd.f32 %v3493, %v3819
        %v3888 = vadd.f32 %v3494, %v3822
        %v3889 = vadd.f32 %v3495, %v3829
        %v3890 = vadd.f32 %v3496, %v3834
        %v3891 = vadd.f32 %v3497, %v3841
        %v3892 = vadd.f32 %v3498, %v3844
        %v3893 = vadd.f32 %v3499, %v3851
        %v3894 = vadd.f32 %v3500, %v3856
        %v3895 = vadd.f32 %v3501, %v3863
        %v3896 = vadd.f32 %v3502, %v3866
        %v3897 = vadd.f32 %v3503, %v3873
        %v3898 = vadd.f32 %v3504, %v3878
        %v3899 = vld [vmem:[#allocation2 + $0x18] sm:$0xe]
        %s3900 = scalar_lea.vmem [#allocation6], 256
        %v3901 = vld [vmem:[%s3900] sm:$0xf]
        %v3902 = vld [vmem:[%s3900 + $0x4] sm:$0xf]
        %v3903 = vld [vmem:[%s3900 + $0x8] sm:$0xf]
        %v3904 = vld [vmem:[%s3900 + $0xc] sm:$0xf]
        %v3905 = vld [vmem:[%s3900 + $0x10] sm:$0xf]
        %v3906 = vld [vmem:[%s3900 + $0x14] sm:$0xf]
        %v3907 = vld [vmem:[%s3900 + $0x18] sm:$0xf]
        %v3908 = vld [vmem:[%s3900 + $0x1c] sm:$0xf]
        %v3910 = vunpack.c.l.b16 %v3899
        %v3911 = vpack.c.b16 %v3565, %v3910
        %v3912 = vrot.slane %v3911, 1
        %v3913 = vrot.slane %v3590, 1
        %v3914 = vsel %vm2073, %v3912, %v3913
        %v3915 = vrot.slane %v3591, 1
        %v3916 = vsel %vm2073, %v3913, %v3915
        %v3917 = vrot.slane %v3592, 1
        %v3918 = vsel %vm2073, %v3915, %v3917
        %v3919 = vrot.slane %v3593, 1
        %v3920 = vsel %vm2073, %v3917, %v3919
        %v3921 = vrot.slane %v3594, 1
        %v3922 = vsel %vm2073, %v3919, %v3921
        %v3923 = vrot.slane %v3595, 1
        %v3924 = vsel %vm2073, %v3921, %v3923
        %v3925 = vrot.slane %v3596, 1
        %v3926 = vsel %vm2073, %v3923, %v3925
        %v3927 = vrot.slane %v3597, 1
        %v3928 = vsel %vm2073, %v3925, %v3927
        %v3929 = vrot.slane %v3598, 1
        %v3930 = vsel %vm2073, %v3927, %v3929
        %v3931 = vrot.slane %v3599, 1
        %v3932 = vsel %vm2073, %v3929, %v3931
        %v3933 = vrot.slane %v3600, 1
        %v3934 = vsel %vm2073, %v3931, %v3933
        %v3935 = vrot.slane %v3601, 1
        %v3936 = vsel %vm2073, %v3933, %v3935
        %v3945 = vunpack.c.l.b16 %v3901
        %v3946 = vunpack.c.l.b16 %v3902
        %v3947 = vunpack.c.l.b16 %v3903
        %v3948 = vunpack.c.l.b16 %v3904
        %v3949 = vunpack.c.l.b16 %v3905
        %v3950 = vunpack.c.l.b16 %v3906
        %v3951 = vunpack.c.l.b16 %v3907
        %v3952 = vunpack.c.l.b16 %v3908
        %v3953 = vpack.c.b16 %v3946, %v3945
        %v3954 = vpack.c.b16 %v3948, %v3947
        %v3955 = vpack.c.b16 %v3950, %v3949
        %v3956 = vpack.c.b16 %v3952, %v3951
        %v3962 = vsel %vm1733, %v3914, 0
        %v3965 = vsel %vm1733, %v3916, 0
        %v3968 = vsel %vm1733, %v3918, 0
        %v3971 = vsel %vm1733, %v3920, 0
        %v3974 = vsel %vm1733, %v3922, 0
        %v3977 = vsel %vm1733, %v3924, 0
        %v3980 = vsel %vm1733, %v3926, 0
        %v3983 = vsel %vm1733, %v3928, 0
        %v3986 = vsel %vm1733, %v3930, 0
        %v3989 = vsel %vm1733, %v3932, 0
        %v3992 = vsel %vm1733, %v3934, 0
        %v3995 = vsel %vm1733, %v3936, 0
        %3997 = vmatprep.subr.bf16.mxu0 0
        %3998 = vmatpush1.bf16.msra.mxu0 0
        %3999 = vmatprep.subr.bf16.mxu0 0
        %4000 = vmatpush1.bf16.msra.mxu0 0
        %4001 = vmatprep.subr.bf16.mxu0 0
        %4002 = vmatpush1.bf16.msra.mxu0 0
        %4003 = vmatprep.subr.bf16.mxu0 0
        %4004 = vmatpush1.bf16.msra.mxu0 0
        %4005 = vmatprep.subr.bf16.mxu0 0
        %4006 = vmatpush1.bf16.msra.mxu0 %v3956
        %4007 = vmatprep.subr.bf16.mxu0 0
        %4008 = vmatpush1.bf16.msra.mxu0 %v3955
        %4009 = vmatprep.subr.bf16.mxu0 0
        %4010 = vmatpush1.bf16.msra.mxu0 %v3954
        %4011 = vmatprep.subr.bf16.mxu0 0
        %4012 = vmatpush1.bf16.msra.mxu0 %v3953
        %4013 = vmatprep.subr.bf16.mxu0 0
        %4014 = vmatpush2.bf16.msra.mxu0 0
        %4015 = vmatprep.subr.bf16.mxu0 0
        %4016 = vmatpush2.bf16.msra.mxu0 0
        %4017 = vmatprep.subr.bf16.mxu0 0
        %4018 = vmatpush2.bf16.msra.mxu0 0
        %4019 = vmatprep.subr.bf16.mxu0 0
        %4020 = vmatpush2.bf16.msra.mxu0 0
        %4021 = vmatprep.subr.bf16.mxu0 0
        %4022 = vmatpush2.bf16.msra.mxu0 0
        %4023 = vmatprep.subr.bf16.mxu0 0
        %4024 = vmatpush2.bf16.msra.mxu0 0
        %4025 = vmatprep.subr.bf16.mxu0 0
        %4026 = vmatpush2.bf16.msra.mxu0 0
        %4027 = vmatprep.subr.bf16.mxu0 0
        %4028 = vmatpush2.bf16.msra.mxu0 0
        %4029 = vmatprep.mubr.bf16.mxu0 0
        %4030 = vmatmul.mubr.bf16.gmra.mxu0 %v3962
        %v4031 = vpop.f32.mrf.mxu0
        %v4032 = vadd.f32 0.0, %v4031
        %v4033 = vpop.f32.mrf.mxu0
        %v4034 = vpop.f32.mrf.mxu0
        %v4035 = vadd.f32 0.0, %v4034
        %v4036 = vpop.f32.mrf.mxu0
        %4037 = vmatprep.mubr.bf16.mxu0 0
        %4038 = vmatmul.mubr.bf16.gmra.mxu0 %v3965
        %v4039 = vpop.f32.mrf.mxu0
        %v4040 = vpop.f32.mrf.mxu0
        %v4041 = vpop.f32.mrf.mxu0
        %v4042 = vadd.f32 0.0, %v4041
        %v4043 = vpop.f32.mrf.mxu0
        %4044 = vmatprep.mubr.bf16.mxu0 0
        %4045 = vmatmul.mubr.bf16.gmra.mxu0 %v3968
        %v4046 = vpop.f32.mrf.mxu0
        %v4047 = vadd.f32 0.0, %v4046
        %v4048 = vpop.f32.mrf.mxu0
        %v4049 = vpop.f32.mrf.mxu0
        %v4050 = vpop.f32.mrf.mxu0
        %4051 = vmatprep.mubr.bf16.mxu0 0
        %4052 = vmatmul.mubr.bf16.gmra.mxu0 %v3971
        %v4053 = vpop.f32.mrf.mxu0
        %v4054 = vadd.f32 0.0, %v4053
        %v4055 = vpop.f32.mrf.mxu0
        %v4056 = vpop.f32.mrf.mxu0
        %v4057 = vadd.f32 0.0, %v4056
        %v4058 = vpop.f32.mrf.mxu0
        %4059 = vmatprep.mubr.bf16.mxu0 0
        %4060 = vmatmul.mubr.bf16.gmra.mxu0 %v3974
        %v4061 = vpop.f32.mrf.mxu0
        %v4062 = vpop.f32.mrf.mxu0
        %v4063 = vpop.f32.mrf.mxu0
        %v4064 = vadd.f32 0.0, %v4063
        %v4065 = vpop.f32.mrf.mxu0
        %4066 = vmatprep.mubr.bf16.mxu0 0
        %4067 = vmatmul.mubr.bf16.gmra.mxu0 %v3977
        %v4068 = vpop.f32.mrf.mxu0
        %v4069 = vadd.f32 0.0, %v4068
        %v4070 = vpop.f32.mrf.mxu0
        %v4071 = vpop.f32.mrf.mxu0
        %v4072 = vpop.f32.mrf.mxu0
        %4073 = vmatprep.mubr.bf16.mxu0 0
        %4074 = vmatmul.mubr.bf16.gmra.mxu0 %v3980
        %v4075 = vpop.f32.mrf.mxu0
        %v4076 = vadd.f32 0.0, %v4075
        %v4077 = vpop.f32.mrf.mxu0
        %v4078 = vpop.f32.mrf.mxu0
        %v4079 = vadd.f32 0.0, %v4078
        %v4080 = vpop.f32.mrf.mxu0
        %4081 = vmatprep.mubr.bf16.mxu0 0
        %4082 = vmatmul.mubr.bf16.gmra.mxu0 %v3983
        %v4083 = vpop.f32.mrf.mxu0
        %v4084 = vpop.f32.mrf.mxu0
        %v4085 = vpop.f32.mrf.mxu0
        %v4086 = vadd.f32 0.0, %v4085
        %v4087 = vpop.f32.mrf.mxu0
        %4088 = vmatprep.mubr.bf16.mxu0 0
        %4089 = vmatmul.mubr.bf16.gmra.mxu0 %v3986
        %v4090 = vpop.f32.mrf.mxu0
        %v4091 = vadd.f32 0.0, %v4090
        %v4092 = vpop.f32.mrf.mxu0
        %v4093 = vpop.f32.mrf.mxu0
        %v4094 = vpop.f32.mrf.mxu0
        %4095 = vmatprep.mubr.bf16.mxu0 0
        %4096 = vmatmul.mubr.bf16.gmra.mxu0 %v3989
        %v4097 = vpop.f32.mrf.mxu0
        %v4098 = vadd.f32 0.0, %v4097
        %v4099 = vpop.f32.mrf.mxu0
        %v4100 = vpop.f32.mrf.mxu0
        %v4101 = vadd.f32 0.0, %v4100
        %v4102 = vpop.f32.mrf.mxu0
        %4103 = vmatprep.mubr.bf16.mxu0 0
        %4104 = vmatmul.mubr.bf16.gmra.mxu0 %v3992
        %v4105 = vpop.f32.mrf.mxu0
        %v4106 = vpop.f32.mrf.mxu0
        %v4107 = vpop.f32.mrf.mxu0
        %v4108 = vadd.f32 0.0, %v4107
        %v4109 = vpop.f32.mrf.mxu0
        %4110 = vmatprep.mubr.bf16.mxu0 0
        %4111 = vmatmul.mubr.bf16.gmra.mxu0 %v3995
        %v4112 = vpop.f32.mrf.mxu0
        %v4113 = vadd.f32 0.0, %v4112
        %v4114 = vpop.f32.mrf.mxu0
        %v4115 = vpop.f32.mrf.mxu0
        %v4116 = vpop.f32.mrf.mxu0
        %4117 = vdwg.mxu0
        %v4118 = vadd.f32 %v3883, %v4032
        %v4119 = vadd.f32 %v3884, %v4035
        %v4120 = vadd.f32 %v3885, %v4042
        %v4121 = vadd.f32 %v3886, %v4047
        %v4122 = vadd.f32 %v3887, %v4054
        %v4123 = vadd.f32 %v3888, %v4057
        %v4124 = vadd.f32 %v3889, %v4064
        %v4125 = vadd.f32 %v3890, %v4069
        %v4126 = vadd.f32 %v3891, %v4076
        %v4127 = vadd.f32 %v3892, %v4079
        %v4128 = vadd.f32 %v3893, %v4086
        %v4129 = vadd.f32 %v3894, %v4091
        %v4130 = vadd.f32 %v3895, %v4098
        %v4131 = vadd.f32 %v3896, %v4101
        %v4132 = vadd.f32 %v3897, %v4108
        %v4133 = vadd.f32 %v3898, %v4113
        %v4134 = vlaneseq
        %v4135 = vshrl.u32 %v4134, 7
        %v4136 = vsub.s32 0, %v4135
        %v4137 = vrot.slane %v304, %v4136
        %v4138 = vmul.f32 %v4118, %v4137
        %v4139 = vmul.f32 %v4119, %v4137
        %v4140 = vlaneseq
        %v4141 = vshrl.u32 %v4140, 7
        %v4142 = vsub.s32 0, %v4141
        %v4143 = vrot.slane %v305, %v4142
        %v4144 = vadd.f32 %v4138, %v4143
        %v4145 = vadd.f32 %v4139, %v4143
        %v4146 = vmax.f32 %v4144, 0.0
        %v4147 = vmax.f32 %v4145, 0.0
        %v4148 = vpack.c.bf16 %v4147, %v4146
        %v4149 = vld [vmem:[%s3] sm:$0xff]
        %v4150 = vld [vmem:[%s3 + $0x8] sm:$0xff]
        %v4151 = vld [vmem:[%s3 + $0x10] sm:$0xff]
        %v4152 = vld [vmem:[%s3 + $0x18] sm:$0xff]
        %v4153 = vld [vmem:[%s3 + $0x20] sm:$0xff]
        %v4154 = vld [vmem:[%s3 + $0x28] sm:$0xff]
        %v4155 = vld [vmem:[%s3 + $0x30] sm:$0xff]
        %v4156 = vld [vmem:[%s3 + $0x38] sm:$0xff]
        %v4165 = vunpack.c.l.b16 %v4149
        %v4166 = vunpack.c.h.b16 %v4149
        %v4167 = vunpack.c.l.b16 %v4150
        %v4168 = vunpack.c.h.b16 %v4150
        %v4169 = vunpack.c.l.b16 %v4151
        %v4170 = vunpack.c.h.b16 %v4151
        %v4171 = vunpack.c.l.b16 %v4152
        %v4172 = vunpack.c.h.b16 %v4152
        %v4173 = vunpack.c.l.b16 %v4153
        %v4174 = vunpack.c.h.b16 %v4153
        %v4175 = vunpack.c.l.b16 %v4154
        %v4176 = vunpack.c.h.b16 %v4154
        %v4177 = vunpack.c.l.b16 %v4155
        %v4178 = vunpack.c.h.b16 %v4155
        %v4179 = vunpack.c.l.b16 %v4156
        %v4180 = vunpack.c.h.b16 %v4156
        %v4181 = vpack.c.b16 %v4167, %v4165
        %v4182 = vpack.c.b16 %v4168, %v4166
        %v4183 = vpack.c.b16 %v4171, %v4169
        %v4184 = vpack.c.b16 %v4172, %v4170
        %v4185 = vpack.c.b16 %v4175, %v4173
        %v4186 = vpack.c.b16 %v4176, %v4174
        %v4187 = vpack.c.b16 %v4179, %v4177
        %v4188 = vpack.c.b16 %v4180, %v4178
        %v4198 = vsel %vm1733, %v4148, 0
        %4200 = vmatprep.subr.bf16.mxu0 0
        %4201 = vmatpush1.bf16.msra.mxu0 0
        %4202 = vmatprep.subr.bf16.mxu0 0
        %4203 = vmatpush1.bf16.msra.mxu0 0
        %4204 = vmatprep.subr.bf16.mxu0 0
        %4205 = vmatpush1.bf16.msra.mxu0 0
        %4206 = vmatprep.subr.bf16.mxu0 0
        %4207 = vmatpush1.bf16.msra.mxu0 0
        %4208 = vmatprep.subr.bf16.mxu0 %v4188
        %4209 = vmatpush1.bf16.msra.mxu0 %v4187
        %4210 = vmatprep.subr.bf16.mxu0 %v4186
        %4211 = vmatpush1.bf16.msra.mxu0 %v4185
        %4212 = vmatprep.subr.bf16.mxu0 %v4184
        %4213 = vmatpush1.bf16.msra.mxu0 %v4183
        %4214 = vmatprep.subr.bf16.mxu0 %v4182
        %4215 = vmatpush1.bf16.msra.mxu0 %v4181
        %4216 = vmatprep.subr.bf16.mxu0 0
        %4217 = vmatpush2.bf16.msra.mxu0 0
        %4218 = vmatprep.subr.bf16.mxu0 0
        %4219 = vmatpush2.bf16.msra.mxu0 0
        %4220 = vmatprep.subr.bf16.mxu0 0
        %4221 = vmatpush2.bf16.msra.mxu0 0
        %4222 = vmatprep.subr.bf16.mxu0 0
        %4223 = vmatpush2.bf16.msra.mxu0 0
        %4224 = vmatprep.subr.bf16.mxu0 0
        %4225 = vmatpush2.bf16.msra.mxu0 0
        %4226 = vmatprep.subr.bf16.mxu0 0
        %4227 = vmatpush2.bf16.msra.mxu0 0
        %4228 = vmatprep.subr.bf16.mxu0 0
        %4229 = vmatpush2.bf16.msra.mxu0 0
        %4230 = vmatprep.subr.bf16.mxu0 0
        %4231 = vmatpush2.bf16.msra.mxu0 0
        %4232 = vmatprep.mubr.bf16.mxu0 0
        %4233 = vmatmul.mubr.bf16.gmra.mxu0 %v4198
        %v4234 = vpop.f32.mrf.mxu0
        %v4235 = vadd.f32 0.0, %v4234
        %v4236 = vpop.f32.mrf.mxu0
        %v4237 = vadd.f32 0.0, %v4236
        %v4238 = vpop.f32.mrf.mxu0
        %v4239 = vadd.f32 0.0, %v4238
        %v4240 = vpop.f32.mrf.mxu0
        %v4241 = vadd.f32 0.0, %v4240
        %4242 = vdwg.mxu0
        %v4243 = vld [vmem:[%s380] sm:$0xff]
        %v4244 = vld [vmem:[%s380 + $0x8] sm:$0xff]
        %v4246 = vlaneseq
        %v4247 = vshrl.u32 %v4246, 7
        %v4248 = vsub.s32 0, %v4247
        %v4249 = vrot.slane %v306, %v4248
        %v4250 = vlaneseq
        %v4251 = vshrl.u32 %v4250, 7
        %v4252 = vsub.s32 1, %v4251
        %v4253 = vrot.slane %v306, %v4252
        %v4256 = vmul.f32 %v4235, %v4249
        %v4257 = vmul.f32 %v4237, %v4253
        %v4258 = vmul.f32 %v4239, %v4249
        %v4259 = vmul.f32 %v4241, %v4253
        %v4261 = vlaneseq
        %v4262 = vshrl.u32 %v4261, 7
        %v4263 = vsub.s32 0, %v4262
        %v4264 = vrot.slane %v308, %v4263
        %v4265 = vlaneseq
        %v4266 = vshrl.u32 %v4265, 7
        %v4267 = vsub.s32 1, %v4266
        %v4268 = vrot.slane %v308, %v4267
        %v4271 = vadd.f32 %v4256, %v4264
        %v4272 = vadd.f32 %v4257, %v4268
        %v4273 = vadd.f32 %v4258, %v4264
        %v4274 = vadd.f32 %v4259, %v4268
        %v4275 = vunpack.c.l.bf16 %v4243
        %v4276 = vunpack.c.h.bf16 %v4243
        %v4277 = vunpack.c.l.bf16 %v4244
        %v4278 = vunpack.c.h.bf16 %v4244
        %v4279 = vadd.f32 %v4271, %v4275
        %v4280 = vadd.f32 %v4272, %v4276
        %v4281 = vadd.f32 %v4273, %v4277
        %v4282 = vadd.f32 %v4274, %v4278
        %v4283 = vmax.f32 %v4279, 0.0
        %v4284 = vmax.f32 %v4280, 0.0
        %v4285 = vmax.f32 %v4281, 0.0
        %v4286 = vmax.f32 %v4282, 0.0
        %v4287 = vpack.c.bf16 %v4285, %v4283
        %v4288 = vpack.c.bf16 %v4286, %v4284
        %v4291 = vunpack.c.l.b16 %v4287
        %v4292 = vunpack.c.l.b16 %v4288
        %v4293 = vunpack.c.h.b16 %v4287
        %v4294 = vunpack.c.h.b16 %v4288
        %v4295 = vpack.c.b16 %v4292, %v4291
        %v4296 = vpack.c.b16 %v4294, %v4293
        %4299 = vst [vmem:[%s298] sm:$0xff] %v4295
        %4300 = vst [vmem:[%s298 + $0x8] sm:$0xff] %v4296
        %v4301 = vmul.f32 %v4120, %v4137
        %v4302 = vmul.f32 %v4121, %v4137
        %v4303 = vadd.f32 %v4301, %v4143
        %v4304 = vadd.f32 %v4302, %v4143
        %v4305 = vmax.f32 %v4303, 0.0
        %v4306 = vmax.f32 %v4304, 0.0
        %v4307 = vpack.c.bf16 %v4306, %v4305
        %v4308 = vld [vmem:[%s3] sm:$0xff]
        %v4309 = vld [vmem:[%s3 + $0x8] sm:$0xff]
        %v4310 = vld [vmem:[%s3 + $0x10] sm:$0xff]
        %v4311 = vld [vmem:[%s3 + $0x18] sm:$0xff]
        %v4312 = vld [vmem:[%s3 + $0x20] sm:$0xff]
        %v4313 = vld [vmem:[%s3 + $0x28] sm:$0xff]
        %v4314 = vld [vmem:[%s3 + $0x30] sm:$0xff]
        %v4315 = vld [vmem:[%s3 + $0x38] sm:$0xff]
        %v4324 = vunpack.c.l.b16 %v4308
        %v4325 = vunpack.c.h.b16 %v4308
        %v4326 = vunpack.c.l.b16 %v4309
        %v4327 = vunpack.c.h.b16 %v4309
        %v4328 = vunpack.c.l.b16 %v4310
        %v4329 = vunpack.c.h.b16 %v4310
        %v4330 = vunpack.c.l.b16 %v4311
        %v4331 = vunpack.c.h.b16 %v4311
        %v4332 = vunpack.c.l.b16 %v4312
        %v4333 = vunpack.c.h.b16 %v4312
        %v4334 = vunpack.c.l.b16 %v4313
        %v4335 = vunpack.c.h.b16 %v4313
        %v4336 = vunpack.c.l.b16 %v4314
        %v4337 = vunpack.c.h.b16 %v4314
        %v4338 = vunpack.c.l.b16 %v4315
        %v4339 = vunpack.c.h.b16 %v4315
        %v4340 = vpack.c.b16 %v4326, %v4324
        %v4341 = vpack.c.b16 %v4327, %v4325
        %v4342 = vpack.c.b16 %v4330, %v4328
        %v4343 = vpack.c.b16 %v4331, %v4329
        %v4344 = vpack.c.b16 %v4334, %v4332
        %v4345 = vpack.c.b16 %v4335, %v4333
        %v4346 = vpack.c.b16 %v4338, %v4336
        %v4347 = vpack.c.b16 %v4339, %v4337
        %v4357 = vsel %vm1733, %v4307, 0
        %4359 = vmatprep.subr.bf16.mxu0 0
        %4360 = vmatpush1.bf16.msra.mxu0 0
        %4361 = vmatprep.subr.bf16.mxu0 0
        %4362 = vmatpush1.bf16.msra.mxu0 0
        %4363 = vmatprep.subr.bf16.mxu0 0
        %4364 = vmatpush1.bf16.msra.mxu0 0
        %4365 = vmatprep.subr.bf16.mxu0 0
        %4366 = vmatpush1.bf16.msra.mxu0 0
        %4367 = vmatprep.subr.bf16.mxu0 %v4347
        %4368 = vmatpush1.bf16.msra.mxu0 %v4346
        %4369 = vmatprep.subr.bf16.mxu0 %v4345
        %4370 = vmatpush1.bf16.msra.mxu0 %v4344
        %4371 = vmatprep.subr.bf16.mxu0 %v4343
        %4372 = vmatpush1.bf16.msra.mxu0 %v4342
        %4373 = vmatprep.subr.bf16.mxu0 %v4341
        %4374 = vmatpush1.bf16.msra.mxu0 %v4340
        %4375 = vmatprep.subr.bf16.mxu0 0
        %4376 = vmatpush2.bf16.msra.mxu0 0
        %4377 = vmatprep.subr.bf16.mxu0 0
        %4378 = vmatpush2.bf16.msra.mxu0 0
        %4379 = vmatprep.subr.bf16.mxu0 0
        %4380 = vmatpush2.bf16.msra.mxu0 0
        %4381 = vmatprep.subr.bf16.mxu0 0
        %4382 = vmatpush2.bf16.msra.mxu0 0
        %4383 = vmatprep.subr.bf16.mxu0 0
        %4384 = vmatpush2.bf16.msra.mxu0 0
        %4385 = vmatprep.subr.bf16.mxu0 0
        %4386 = vmatpush2.bf16.msra.mxu0 0
        %4387 = vmatprep.subr.bf16.mxu0 0
        %4388 = vmatpush2.bf16.msra.mxu0 0
        %4389 = vmatprep.subr.bf16.mxu0 0
        %4390 = vmatpush2.bf16.msra.mxu0 0
        %4391 = vmatprep.mubr.bf16.mxu0 0
        %4392 = vmatmul.mubr.bf16.gmra.mxu0 %v4357
        %v4393 = vpop.f32.mrf.mxu0
        %v4394 = vadd.f32 0.0, %v4393
        %v4395 = vpop.f32.mrf.mxu0
        %v4396 = vadd.f32 0.0, %v4395
        %v4397 = vpop.f32.mrf.mxu0
        %v4398 = vadd.f32 0.0, %v4397
        %v4399 = vpop.f32.mrf.mxu0
        %v4400 = vadd.f32 0.0, %v4399
        %4401 = vdwg.mxu0
        %s4402 = sadd.s32 %s301, 1
        %s4403 = smul.u32 %s4402, 4
        %s4404 = smul.addr %s4403, 4
        %s4405 = scalar_lea.vmem %s266, %s4404 [#allocation3]
        %v4406 = vld [vmem:[%s4405] sm:$0xff]
        %v4407 = vld [vmem:[%s4405 + $0x8] sm:$0xff]
        %v4408 = vmul.f32 %v4394, %v4249
        %v4409 = vmul.f32 %v4396, %v4253
        %v4410 = vmul.f32 %v4398, %v4249
        %v4411 = vmul.f32 %v4400, %v4253
        %v4412 = vadd.f32 %v4408, %v4264
        %v4413 = vadd.f32 %v4409, %v4268
        %v4414 = vadd.f32 %v4410, %v4264
        %v4415 = vadd.f32 %v4411, %v4268
        %v4416 = vunpack.c.l.bf16 %v4406
        %v4417 = vunpack.c.h.bf16 %v4406
        %v4418 = vunpack.c.l.bf16 %v4407
        %v4419 = vunpack.c.h.bf16 %v4407
        %v4420 = vadd.f32 %v4412, %v4416
        %v4421 = vadd.f32 %v4413, %v4417
        %v4422 = vadd.f32 %v4414, %v4418
        %v4423 = vadd.f32 %v4415, %v4419
        %v4424 = vmax.f32 %v4420, 0.0
        %v4425 = vmax.f32 %v4421, 0.0
        %v4426 = vmax.f32 %v4422, 0.0
        %v4427 = vmax.f32 %v4423, 0.0
        %v4428 = vpack.c.bf16 %v4426, %v4424
        %v4429 = vpack.c.bf16 %v4427, %v4425
        %v4432 = vunpack.c.l.b16 %v4428
        %v4433 = vunpack.c.l.b16 %v4429
        %v4434 = vunpack.c.h.b16 %v4428
        %v4435 = vunpack.c.h.b16 %v4429
        %v4436 = vpack.c.b16 %v4433, %v4432
        %v4437 = vpack.c.b16 %v4435, %v4434
        %s4440 = scalar_lea.vmem %s298, 16 [#allocation8]
        %4441 = vst [vmem:[%s4440] sm:$0xff] %v4436
        %4442 = vst [vmem:[%s4440 + $0x8] sm:$0xff] %v4437
        %v4443 = vmul.f32 %v4122, %v4137
        %v4444 = vmul.f32 %v4123, %v4137
        %v4445 = vadd.f32 %v4443, %v4143
        %v4446 = vadd.f32 %v4444, %v4143
        %v4447 = vmax.f32 %v4445, 0.0
        %v4448 = vmax.f32 %v4446, 0.0
        %v4449 = vpack.c.bf16 %v4448, %v4447
        %v4450 = vld [vmem:[%s3] sm:$0xff]
        %v4451 = vld [vmem:[%s3 + $0x8] sm:$0xff]
        %v4452 = vld [vmem:[%s3 + $0x10] sm:$0xff]
        %v4453 = vld [vmem:[%s3 + $0x18] sm:$0xff]
        %v4454 = vld [vmem:[%s3 + $0x20] sm:$0xff]
        %v4455 = vld [vmem:[%s3 + $0x28] sm:$0xff]
        %v4456 = vld [vmem:[%s3 + $0x30] sm:$0xff]
        %v4457 = vld [vmem:[%s3 + $0x38] sm:$0xff]
        %v4466 = vunpack.c.l.b16 %v4450
        %v4467 = vunpack.c.h.b16 %v4450
        %v4468 = vunpack.c.l.b16 %v4451
        %v4469 = vunpack.c.h.b16 %v4451
        %v4470 = vunpack.c.l.b16 %v4452
        %v4471 = vunpack.c.h.b16 %v4452
        %v4472 = vunpack.c.l.b16 %v4453
        %v4473 = vunpack.c.h.b16 %v4453
        %v4474 = vunpack.c.l.b16 %v4454
        %v4475 = vunpack.c.h.b16 %v4454
        %v4476 = vunpack.c.l.b16 %v4455
        %v4477 = vunpack.c.h.b16 %v4455
        %v4478 = vunpack.c.l.b16 %v4456
        %v4479 = vunpack.c.h.b16 %v4456
        %v4480 = vunpack.c.l.b16 %v4457
        %v4481 = vunpack.c.h.b16 %v4457
        %v4482 = vpack.c.b16 %v4468, %v4466
        %v4483 = vpack.c.b16 %v4469, %v4467
        %v4484 = vpack.c.b16 %v4472, %v4470
        %v4485 = vpack.c.b16 %v4473, %v4471
        %v4486 = vpack.c.b16 %v4476, %v4474
        %v4487 = vpack.c.b16 %v4477, %v4475
        %v4488 = vpack.c.b16 %v4480, %v4478
        %v4489 = vpack.c.b16 %v4481, %v4479
        %v4499 = vsel %vm1733, %v4449, 0
        %4501 = vmatprep.subr.bf16.mxu0 0
        %4502 = vmatpush1.bf16.msra.mxu0 0
        %4503 = vmatprep.subr.bf16.mxu0 0
        %4504 = vmatpush1.bf16.msra.mxu0 0
        %4505 = vmatprep.subr.bf16.mxu0 0
        %4506 = vmatpush1.bf16.msra.mxu0 0
        %4507 = vmatprep.subr.bf16.mxu0 0
        %4508 = vmatpush1.bf16.msra.mxu0 0
        %4509 = vmatprep.subr.bf16.mxu0 %v4489
        %4510 = vmatpush1.bf16.msra.mxu0 %v4488
        %4511 = vmatprep.subr.bf16.mxu0 %v4487
        %4512 = vmatpush1.bf16.msra.mxu0 %v4486
        %4513 = vmatprep.subr.bf16.mxu0 %v4485
        %4514 = vmatpush1.bf16.msra.mxu0 %v4484
        %4515 = vmatprep.subr.bf16.mxu0 %v4483
        %4516 = vmatpush1.bf16.msra.mxu0 %v4482
        %4517 = vmatprep.subr.bf16.mxu0 0
        %4518 = vmatpush2.bf16.msra.mxu0 0
        %4519 = vmatprep.subr.bf16.mxu0 0
        %4520 = vmatpush2.bf16.msra.mxu0 0
        %4521 = vmatprep.subr.bf16.mxu0 0
        %4522 = vmatpush2.bf16.msra.mxu0 0
        %4523 = vmatprep.subr.bf16.mxu0 0
        %4524 = vmatpush2.bf16.msra.mxu0 0
        %4525 = vmatprep.subr.bf16.mxu0 0
        %4526 = vmatpush2.bf16.msra.mxu0 0
        %4527 = vmatprep.subr.bf16.mxu0 0
        %4528 = vmatpush2.bf16.msra.mxu0 0
        %4529 = vmatprep.subr.bf16.mxu0 0
        %4530 = vmatpush2.bf16.msra.mxu0 0
        %4531 = vmatprep.subr.bf16.mxu0 0
        %4532 = vmatpush2.bf16.msra.mxu0 0
        %4533 = vmatprep.mubr.bf16.mxu0 0
        %4534 = vmatmul.mubr.bf16.gmra.mxu0 %v4499
        %v4535 = vpop.f32.mrf.mxu0
        %v4536 = vadd.f32 0.0, %v4535
        %v4537 = vpop.f32.mrf.mxu0
        %v4538 = vadd.f32 0.0, %v4537
        %v4539 = vpop.f32.mrf.mxu0
        %v4540 = vadd.f32 0.0, %v4539
        %v4541 = vpop.f32.mrf.mxu0
        %v4542 = vadd.f32 0.0, %v4541
        %4543 = vdwg.mxu0
        %s4544 = sadd.s32 %s301, 2
        %s4545 = smul.u32 %s4544, 4
        %s4546 = smul.addr %s4545, 4
        %s4547 = scalar_lea.vmem %s266, %s4546 [#allocation3]
        %v4548 = vld [vmem:[%s4547] sm:$0xff]
        %v4549 = vld [vmem:[%s4547 + $0x8] sm:$0xff]
        %v4550 = vmul.f32 %v4536, %v4249
        %v4551 = vmul.f32 %v4538, %v4253
        %v4552 = vmul.f32 %v4540, %v4249
        %v4553 = vmul.f32 %v4542, %v4253
        %v4554 = vadd.f32 %v4550, %v4264
        %v4555 = vadd.f32 %v4551, %v4268
        %v4556 = vadd.f32 %v4552, %v4264
        %v4557 = vadd.f32 %v4553, %v4268
        %v4558 = vunpack.c.l.bf16 %v4548
        %v4559 = vunpack.c.h.bf16 %v4548
        %v4560 = vunpack.c.l.bf16 %v4549
        %v4561 = vunpack.c.h.bf16 %v4549
        %v4562 = vadd.f32 %v4554, %v4558
        %v4563 = vadd.f32 %v4555, %v4559
        %v4564 = vadd.f32 %v4556, %v4560
        %v4565 = vadd.f32 %v4557, %v4561
        %v4566 = vmax.f32 %v4562, 0.0
        %v4567 = vmax.f32 %v4563, 0.0
        %v4568 = vmax.f32 %v4564, 0.0
        %v4569 = vmax.f32 %v4565, 0.0
        %v4570 = vpack.c.bf16 %v4568, %v4566
        %v4571 = vpack.c.bf16 %v4569, %v4567
        %v4574 = vunpack.c.l.b16 %v4570
        %v4575 = vunpack.c.l.b16 %v4571
        %v4576 = vunpack.c.h.b16 %v4570
        %v4577 = vunpack.c.h.b16 %v4571
        %v4578 = vpack.c.b16 %v4575, %v4574
        %v4579 = vpack.c.b16 %v4577, %v4576
        %s4582 = scalar_lea.vmem %s298, 32 [#allocation8]
        %4583 = vst [vmem:[%s4582] sm:$0xff] %v4578
        %4584 = vst [vmem:[%s4582 + $0x8] sm:$0xff] %v4579
        %v4585 = vmul.f32 %v4124, %v4137
        %v4586 = vmul.f32 %v4125, %v4137
        %v4587 = vadd.f32 %v4585, %v4143
        %v4588 = vadd.f32 %v4586, %v4143
        %v4589 = vmax.f32 %v4587, 0.0
        %v4590 = vmax.f32 %v4588, 0.0
        %v4591 = vpack.c.bf16 %v4590, %v4589
        %v4592 = vld [vmem:[%s3] sm:$0xff]
        %v4593 = vld [vmem:[%s3 + $0x8] sm:$0xff]
        %v4594 = vld [vmem:[%s3 + $0x10] sm:$0xff]
        %v4595 = vld [vmem:[%s3 + $0x18] sm:$0xff]
        %v4596 = vld [vmem:[%s3 + $0x20] sm:$0xff]
        %v4597 = vld [vmem:[%s3 + $0x28] sm:$0xff]
        %v4598 = vld [vmem:[%s3 + $0x30] sm:$0xff]
        %v4599 = vld [vmem:[%s3 + $0x38] sm:$0xff]
        %v4608 = vunpack.c.l.b16 %v4592
        %v4609 = vunpack.c.h.b16 %v4592
        %v4610 = vunpack.c.l.b16 %v4593
        %v4611 = vunpack.c.h.b16 %v4593
        %v4612 = vunpack.c.l.b16 %v4594
        %v4613 = vunpack.c.h.b16 %v4594
        %v4614 = vunpack.c.l.b16 %v4595
        %v4615 = vunpack.c.h.b16 %v4595
        %v4616 = vunpack.c.l.b16 %v4596
        %v4617 = vunpack.c.h.b16 %v4596
        %v4618 = vunpack.c.l.b16 %v4597
        %v4619 = vunpack.c.h.b16 %v4597
        %v4620 = vunpack.c.l.b16 %v4598
        %v4621 = vunpack.c.h.b16 %v4598
        %v4622 = vunpack.c.l.b16 %v4599
        %v4623 = vunpack.c.h.b16 %v4599
        %v4624 = vpack.c.b16 %v4610, %v4608
        %v4625 = vpack.c.b16 %v4611, %v4609
        %v4626 = vpack.c.b16 %v4614, %v4612
        %v4627 = vpack.c.b16 %v4615, %v4613
        %v4628 = vpack.c.b16 %v4618, %v4616
        %v4629 = vpack.c.b16 %v4619, %v4617
        %v4630 = vpack.c.b16 %v4622, %v4620
        %v4631 = vpack.c.b16 %v4623, %v4621
        %v4641 = vsel %vm1733, %v4591, 0
        %4643 = vmatprep.subr.bf16.mxu0 0
        %4644 = vmatpush1.bf16.msra.mxu0 0
        %4645 = vmatprep.subr.bf16.mxu0 0
        %4646 = vmatpush1.bf16.msra.mxu0 0
        %4647 = vmatprep.subr.bf16.mxu0 0
        %4648 = vmatpush1.bf16.msra.mxu0 0
        %4649 = vmatprep.subr.bf16.mxu0 0
        %4650 = vmatpush1.bf16.msra.mxu0 0
        %4651 = vmatprep.subr.bf16.mxu0 %v4631
        %4652 = vmatpush1.bf16.msra.mxu0 %v4630
        %4653 = vmatprep.subr.bf16.mxu0 %v4629
        %4654 = vmatpush1.bf16.msra.mxu0 %v4628
        %4655 = vmatprep.subr.bf16.mxu0 %v4627
        %4656 = vmatpush1.bf16.msra.mxu0 %v4626
        %4657 = vmatprep.subr.bf16.mxu0 %v4625
        %4658 = vmatpush1.bf16.msra.mxu0 %v4624
        %4659 = vmatprep.subr.bf16.mxu0 0
        %4660 = vmatpush2.bf16.msra.mxu0 0
        %4661 = vmatprep.subr.bf16.mxu0 0
        %4662 = vmatpush2.bf16.msra.mxu0 0
        %4663 = vmatprep.subr.bf16.mxu0 0
        %4664 = vmatpush2.bf16.msra.mxu0 0
        %4665 = vmatprep.subr.bf16.mxu0 0
        %4666 = vmatpush2.bf16.msra.mxu0 0
        %4667 = vmatprep.subr.bf16.mxu0 0
        %4668 = vmatpush2.bf16.msra.mxu0 0
        %4669 = vmatprep.subr.bf16.mxu0 0
        %4670 = vmatpush2.bf16.msra.mxu0 0
        %4671 = vmatprep.subr.bf16.mxu0 0
        %4672 = vmatpush2.bf16.msra.mxu0 0
        %4673 = vmatprep.subr.bf16.mxu0 0
        %4674 = vmatpush2.bf16.msra.mxu0 0
        %4675 = vmatprep.mubr.bf16.mxu0 0
        %4676 = vmatmul.mubr.bf16.gmra.mxu0 %v4641
        %v4677 = vpop.f32.mrf.mxu0
        %v4678 = vadd.f32 0.0, %v4677
        %v4679 = vpop.f32.mrf.mxu0
        %v4680 = vadd.f32 0.0, %v4679
        %v4681 = vpop.f32.mrf.mxu0
        %v4682 = vadd.f32 0.0, %v4681
        %v4683 = vpop.f32.mrf.mxu0
        %v4684 = vadd.f32 0.0, %v4683
        %4685 = vdwg.mxu0
        %s4686 = sadd.s32 %s301, 3
        %s4687 = smul.u32 %s4686, 4
        %s4688 = smul.addr %s4687, 4
        %s4689 = scalar_lea.vmem %s266, %s4688 [#allocation3]
        %v4690 = vld [vmem:[%s4689] sm:$0xff]
        %v4691 = vld [vmem:[%s4689 + $0x8] sm:$0xff]
        %v4692 = vmul.f32 %v4678, %v4249
        %v4693 = vmul.f32 %v4680, %v4253
        %v4694 = vmul.f32 %v4682, %v4249
        %v4695 = vmul.f32 %v4684, %v4253
        %v4696 = vadd.f32 %v4692, %v4264
        %v4697 = vadd.f32 %v4693, %v4268
        %v4698 = vadd.f32 %v4694, %v4264
        %v4699 = vadd.f32 %v4695, %v4268
        %v4700 = vunpack.c.l.bf16 %v4690
        %v4701 = vunpack.c.h.bf16 %v4690
        %v4702 = vunpack.c.l.bf16 %v4691
        %v4703 = vunpack.c.h.bf16 %v4691
        %v4704 = vadd.f32 %v4696, %v4700
        %v4705 = vadd.f32 %v4697, %v4701
        %v4706 = vadd.f32 %v4698, %v4702
        %v4707 = vadd.f32 %v4699, %v4703
        %v4708 = vmax.f32 %v4704, 0.0
        %v4709 = vmax.f32 %v4705, 0.0
        %v4710 = vmax.f32 %v4706, 0.0
        %v4711 = vmax.f32 %v4707, 0.0
        %v4712 = vpack.c.bf16 %v4710, %v4708
        %v4713 = vpack.c.bf16 %v4711, %v4709
        %v4716 = vunpack.c.l.b16 %v4712
        %v4717 = vunpack.c.l.b16 %v4713
        %v4718 = vunpack.c.h.b16 %v4712
        %v4719 = vunpack.c.h.b16 %v4713
        %v4720 = vpack.c.b16 %v4717, %v4716
        %v4721 = vpack.c.b16 %v4719, %v4718
        %s4724 = scalar_lea.vmem %s298, 48 [#allocation8]
        %4725 = vst [vmem:[%s4724] sm:$0xff] %v4720
        %4726 = vst [vmem:[%s4724 + $0x8] sm:$0xff] %v4721
        %v4727 = vmul.f32 %v4126, %v4137
        %v4728 = vmul.f32 %v4127, %v4137
        %v4729 = vadd.f32 %v4727, %v4143
        %v4730 = vadd.f32 %v4728, %v4143
        %v4731 = vmax.f32 %v4729, 0.0
        %v4732 = vmax.f32 %v4730, 0.0
        %v4733 = vpack.c.bf16 %v4732, %v4731
        %v4734 = vld [vmem:[%s3] sm:$0xff]
        %v4735 = vld [vmem:[%s3 + $0x8] sm:$0xff]
        %v4736 = vld [vmem:[%s3 + $0x10] sm:$0xff]
        %v4737 = vld [vmem:[%s3 + $0x18] sm:$0xff]
        %v4738 = vld [vmem:[%s3 + $0x20] sm:$0xff]
        %v4739 = vld [vmem:[%s3 + $0x28] sm:$0xff]
        %v4740 = vld [vmem:[%s3 + $0x30] sm:$0xff]
        %v4741 = vld [vmem:[%s3 + $0x38] sm:$0xff]
        %v4750 = vunpack.c.l.b16 %v4734
        %v4751 = vunpack.c.h.b16 %v4734
        %v4752 = vunpack.c.l.b16 %v4735
        %v4753 = vunpack.c.h.b16 %v4735
        %v4754 = vunpack.c.l.b16 %v4736
        %v4755 = vunpack.c.h.b16 %v4736
        %v4756 = vunpack.c.l.b16 %v4737
        %v4757 = vunpack.c.h.b16 %v4737
        %v4758 = vunpack.c.l.b16 %v4738
        %v4759 = vunpack.c.h.b16 %v4738
        %v4760 = vunpack.c.l.b16 %v4739
        %v4761 = vunpack.c.h.b16 %v4739
        %v4762 = vunpack.c.l.b16 %v4740
        %v4763 = vunpack.c.h.b16 %v4740
        %v4764 = vunpack.c.l.b16 %v4741
        %v4765 = vunpack.c.h.b16 %v4741
        %v4766 = vpack.c.b16 %v4752, %v4750
        %v4767 = vpack.c.b16 %v4753, %v4751
        %v4768 = vpack.c.b16 %v4756, %v4754
        %v4769 = vpack.c.b16 %v4757, %v4755
        %v4770 = vpack.c.b16 %v4760, %v4758
        %v4771 = vpack.c.b16 %v4761, %v4759
        %v4772 = vpack.c.b16 %v4764, %v4762
        %v4773 = vpack.c.b16 %v4765, %v4763
        %v4783 = vsel %vm1733, %v4733, 0
        %4785 = vmatprep.subr.bf16.mxu0 0
        %4786 = vmatpush1.bf16.msra.mxu0 0
        %4787 = vmatprep.subr.bf16.mxu0 0
        %4788 = vmatpush1.bf16.msra.mxu0 0
        %4789 = vmatprep.subr.bf16.mxu0 0
        %4790 = vmatpush1.bf16.msra.mxu0 0
        %4791 = vmatprep.subr.bf16.mxu0 0
        %4792 = vmatpush1.bf16.msra.mxu0 0
        %4793 = vmatprep.subr.bf16.mxu0 %v4773
        %4794 = vmatpush1.bf16.msra.mxu0 %v4772
        %4795 = vmatprep.subr.bf16.mxu0 %v4771
        %4796 = vmatpush1.bf16.msra.mxu0 %v4770
        %4797 = vmatprep.subr.bf16.mxu0 %v4769
        %4798 = vmatpush1.bf16.msra.mxu0 %v4768
        %4799 = vmatprep.subr.bf16.mxu0 %v4767
        %4800 = vmatpush1.bf16.msra.mxu0 %v4766
        %4801 = vmatprep.subr.bf16.mxu0 0
        %4802 = vmatpush2.bf16.msra.mxu0 0
        %4803 = vmatprep.subr.bf16.mxu0 0
        %4804 = vmatpush2.bf16.msra.mxu0 0
        %4805 = vmatprep.subr.bf16.mxu0 0
        %4806 = vmatpush2.bf16.msra.mxu0 0
        %4807 = vmatprep.subr.bf16.mxu0 0
        %4808 = vmatpush2.bf16.msra.mxu0 0
        %4809 = vmatprep.subr.bf16.mxu0 0
        %4810 = vmatpush2.bf16.msra.mxu0 0
        %4811 = vmatprep.subr.bf16.mxu0 0
        %4812 = vmatpush2.bf16.msra.mxu0 0
        %4813 = vmatprep.subr.bf16.mxu0 0
        %4814 = vmatpush2.bf16.msra.mxu0 0
        %4815 = vmatprep.subr.bf16.mxu0 0
        %4816 = vmatpush2.bf16.msra.mxu0 0
        %4817 = vmatprep.mubr.bf16.mxu0 0
        %4818 = vmatmul.mubr.bf16.gmra.mxu0 %v4783
        %v4819 = vpop.f32.mrf.mxu0
        %v4820 = vadd.f32 0.0, %v4819
        %v4821 = vpop.f32.mrf.mxu0
        %v4822 = vadd.f32 0.0, %v4821
        %v4823 = vpop.f32.mrf.mxu0
        %v4824 = vadd.f32 0.0, %v4823
        %v4825 = vpop.f32.mrf.mxu0
        %v4826 = vadd.f32 0.0, %v4825
        %4827 = vdwg.mxu0
        %s4828 = sadd.s32 %s301, 4
        %s4829 = smul.u32 %s4828, 4
        %s4830 = smul.addr %s4829, 4
        %s4831 = scalar_lea.vmem %s266, %s4830 [#allocation3]
        %v4832 = vld [vmem:[%s4831] sm:$0xff]
        %v4833 = vld [vmem:[%s4831 + $0x8] sm:$0xff]
        %v4834 = vmul.f32 %v4820, %v4249
        %v4835 = vmul.f32 %v4822, %v4253
        %v4836 = vmul.f32 %v4824, %v4249
        %v4837 = vmul.f32 %v4826, %v4253
        %v4838 = vadd.f32 %v4834, %v4264
        %v4839 = vadd.f32 %v4835, %v4268
        %v4840 = vadd.f32 %v4836, %v4264
        %v4841 = vadd.f32 %v4837, %v4268
        %v4842 = vunpack.c.l.bf16 %v4832
        %v4843 = vunpack.c.h.bf16 %v4832
        %v4844 = vunpack.c.l.bf16 %v4833
        %v4845 = vunpack.c.h.bf16 %v4833
        %v4846 = vadd.f32 %v4838, %v4842
        %v4847 = vadd.f32 %v4839, %v4843
        %v4848 = vadd.f32 %v4840, %v4844
        %v4849 = vadd.f32 %v4841, %v4845
        %v4850 = vmax.f32 %v4846, 0.0
        %v4851 = vmax.f32 %v4847, 0.0
        %v4852 = vmax.f32 %v4848, 0.0
        %v4853 = vmax.f32 %v4849, 0.0
        %v4854 = vpack.c.bf16 %v4852, %v4850
        %v4855 = vpack.c.bf16 %v4853, %v4851
        %v4858 = vunpack.c.l.b16 %v4854
        %v4859 = vunpack.c.l.b16 %v4855
        %v4860 = vunpack.c.h.b16 %v4854
        %v4861 = vunpack.c.h.b16 %v4855
        %v4862 = vpack.c.b16 %v4859, %v4858
        %v4863 = vpack.c.b16 %v4861, %v4860
        %s4866 = scalar_lea.vmem %s298, 64 [#allocation8]
        %4867 = vst [vmem:[%s4866] sm:$0xff] %v4862
        %4868 = vst [vmem:[%s4866 + $0x8] sm:$0xff] %v4863
        %v4869 = vmul.f32 %v4128, %v4137
        %v4870 = vmul.f32 %v4129, %v4137
        %v4871 = vadd.f32 %v4869, %v4143
        %v4872 = vadd.f32 %v4870, %v4143
        %v4873 = vmax.f32 %v4871, 0.0
        %v4874 = vmax.f32 %v4872, 0.0
        %v4875 = vpack.c.bf16 %v4874, %v4873
        %v4876 = vld [vmem:[%s3] sm:$0xff]
        %v4877 = vld [vmem:[%s3 + $0x8] sm:$0xff]
        %v4878 = vld [vmem:[%s3 + $0x10] sm:$0xff]
        %v4879 = vld [vmem:[%s3 + $0x18] sm:$0xff]
        %v4880 = vld [vmem:[%s3 + $0x20] sm:$0xff]
        %v4881 = vld [vmem:[%s3 + $0x28] sm:$0xff]
        %v4882 = vld [vmem:[%s3 + $0x30] sm:$0xff]
        %v4883 = vld [vmem:[%s3 + $0x38] sm:$0xff]
        %v4892 = vunpack.c.l.b16 %v4876
        %v4893 = vunpack.c.h.b16 %v4876
        %v4894 = vunpack.c.l.b16 %v4877
        %v4895 = vunpack.c.h.b16 %v4877
        %v4896 = vunpack.c.l.b16 %v4878
        %v4897 = vunpack.c.h.b16 %v4878
        %v4898 = vunpack.c.l.b16 %v4879
        %v4899 = vunpack.c.h.b16 %v4879
        %v4900 = vunpack.c.l.b16 %v4880
        %v4901 = vunpack.c.h.b16 %v4880
        %v4902 = vunpack.c.l.b16 %v4881
        %v4903 = vunpack.c.h.b16 %v4881
        %v4904 = vunpack.c.l.b16 %v4882
        %v4905 = vunpack.c.h.b16 %v4882
        %v4906 = vunpack.c.l.b16 %v4883
        %v4907 = vunpack.c.h.b16 %v4883
        %v4908 = vpack.c.b16 %v4894, %v4892
        %v4909 = vpack.c.b16 %v4895, %v4893
        %v4910 = vpack.c.b16 %v4898, %v4896
        %v4911 = vpack.c.b16 %v4899, %v4897
        %v4912 = vpack.c.b16 %v4902, %v4900
        %v4913 = vpack.c.b16 %v4903, %v4901
        %v4914 = vpack.c.b16 %v4906, %v4904
        %v4915 = vpack.c.b16 %v4907, %v4905
        %v4925 = vsel %vm1733, %v4875, 0
        %4927 = vmatprep.subr.bf16.mxu0 0
        %4928 = vmatpush1.bf16.msra.mxu0 0
        %4929 = vmatprep.subr.bf16.mxu0 0
        %4930 = vmatpush1.bf16.msra.mxu0 0
        %4931 = vmatprep.subr.bf16.mxu0 0
        %4932 = vmatpush1.bf16.msra.mxu0 0
        %4933 = vmatprep.subr.bf16.mxu0 0
        %4934 = vmatpush1.bf16.msra.mxu0 0
        %4935 = vmatprep.subr.bf16.mxu0 %v4915
        %4936 = vmatpush1.bf16.msra.mxu0 %v4914
        %4937 = vmatprep.subr.bf16.mxu0 %v4913
        %4938 = vmatpush1.bf16.msra.mxu0 %v4912
        %4939 = vmatprep.subr.bf16.mxu0 %v4911
        %4940 = vmatpush1.bf16.msra.mxu0 %v4910
        %4941 = vmatprep.subr.bf16.mxu0 %v4909
        %4942 = vmatpush1.bf16.msra.mxu0 %v4908
        %4943 = vmatprep.subr.bf16.mxu0 0
        %4944 = vmatpush2.bf16.msra.mxu0 0
        %4945 = vmatprep.subr.bf16.mxu0 0
        %4946 = vmatpush2.bf16.msra.mxu0 0
        %4947 = vmatprep.subr.bf16.mxu0 0
        %4948 = vmatpush2.bf16.msra.mxu0 0
        %4949 = vmatprep.subr.bf16.mxu0 0
        %4950 = vmatpush2.bf16.msra.mxu0 0
        %4951 = vmatprep.subr.bf16.mxu0 0
        %4952 = vmatpush2.bf16.msra.mxu0 0
        %4953 = vmatprep.subr.bf16.mxu0 0
        %4954 = vmatpush2.bf16.msra.mxu0 0
        %4955 = vmatprep.subr.bf16.mxu0 0
        %4956 = vmatpush2.bf16.msra.mxu0 0
        %4957 = vmatprep.subr.bf16.mxu0 0
        %4958 = vmatpush2.bf16.msra.mxu0 0
        %4959 = vmatprep.mubr.bf16.mxu0 0
        %4960 = vmatmul.mubr.bf16.gmra.mxu0 %v4925
        %v4961 = vpop.f32.mrf.mxu0
        %v4962 = vadd.f32 0.0, %v4961
        %v4963 = vpop.f32.mrf.mxu0
        %v4964 = vadd.f32 0.0, %v4963
        %v4965 = vpop.f32.mrf.mxu0
        %v4966 = vadd.f32 0.0, %v4965
        %v4967 = vpop.f32.mrf.mxu0
        %v4968 = vadd.f32 0.0, %v4967
        %4969 = vdwg.mxu0
        %s4970 = sadd.s32 %s301, 5
        %s4971 = smul.u32 %s4970, 4
        %s4972 = smul.addr %s4971, 4
        %s4973 = scalar_lea.vmem %s266, %s4972 [#allocation3]
        %v4974 = vld [vmem:[%s4973] sm:$0xff]
        %v4975 = vld [vmem:[%s4973 + $0x8] sm:$0xff]
        %v4976 = vmul.f32 %v4962, %v4249
        %v4977 = vmul.f32 %v4964, %v4253
        %v4978 = vmul.f32 %v4966, %v4249
        %v4979 = vmul.f32 %v4968, %v4253
        %v4980 = vadd.f32 %v4976, %v4264
        %v4981 = vadd.f32 %v4977, %v4268
        %v4982 = vadd.f32 %v4978, %v4264
        %v4983 = vadd.f32 %v4979, %v4268
        %v4984 = vunpack.c.l.bf16 %v4974
        %v4985 = vunpack.c.h.bf16 %v4974
        %v4986 = vunpack.c.l.bf16 %v4975
        %v4987 = vunpack.c.h.bf16 %v4975
        %v4988 = vadd.f32 %v4980, %v4984
        %v4989 = vadd.f32 %v4981, %v4985
        %v4990 = vadd.f32 %v4982, %v4986
        %v4991 = vadd.f32 %v4983, %v4987
        %v4992 = vmax.f32 %v4988, 0.0
        %v4993 = vmax.f32 %v4989, 0.0
        %v4994 = vmax.f32 %v4990, 0.0
        %v4995 = vmax.f32 %v4991, 0.0
        %v4996 = vpack.c.bf16 %v4994, %v4992
        %v4997 = vpack.c.bf16 %v4995, %v4993
        %v5000 = vunpack.c.l.b16 %v4996
        %v5001 = vunpack.c.l.b16 %v4997
        %v5002 = vunpack.c.h.b16 %v4996
        %v5003 = vunpack.c.h.b16 %v4997
        %v5004 = vpack.c.b16 %v5001, %v5000
        %v5005 = vpack.c.b16 %v5003, %v5002
        %s5008 = scalar_lea.vmem %s298, 80 [#allocation8]
        %5009 = vst [vmem:[%s5008] sm:$0xff] %v5004
        %5010 = vst [vmem:[%s5008 + $0x8] sm:$0xff] %v5005
        %v5011 = vmul.f32 %v4130, %v4137
        %v5012 = vmul.f32 %v4131, %v4137
        %v5013 = vadd.f32 %v5011, %v4143
        %v5014 = vadd.f32 %v5012, %v4143
        %v5015 = vmax.f32 %v5013, 0.0
        %v5016 = vmax.f32 %v5014, 0.0
        %v5017 = vpack.c.bf16 %v5016, %v5015
        %v5018 = vld [vmem:[%s3] sm:$0xff]
        %v5019 = vld [vmem:[%s3 + $0x8] sm:$0xff]
        %v5020 = vld [vmem:[%s3 + $0x10] sm:$0xff]
        %v5021 = vld [vmem:[%s3 + $0x18] sm:$0xff]
        %v5022 = vld [vmem:[%s3 + $0x20] sm:$0xff]
        %v5023 = vld [vmem:[%s3 + $0x28] sm:$0xff]
        %v5024 = vld [vmem:[%s3 + $0x30] sm:$0xff]
        %v5025 = vld [vmem:[%s3 + $0x38] sm:$0xff]
        %v5034 = vunpack.c.l.b16 %v5018
        %v5035 = vunpack.c.h.b16 %v5018
        %v5036 = vunpack.c.l.b16 %v5019
        %v5037 = vunpack.c.h.b16 %v5019
        %v5038 = vunpack.c.l.b16 %v5020
        %v5039 = vunpack.c.h.b16 %v5020
        %v5040 = vunpack.c.l.b16 %v5021
        %v5041 = vunpack.c.h.b16 %v5021
        %v5042 = vunpack.c.l.b16 %v5022
        %v5043 = vunpack.c.h.b16 %v5022
        %v5044 = vunpack.c.l.b16 %v5023
        %v5045 = vunpack.c.h.b16 %v5023
        %v5046 = vunpack.c.l.b16 %v5024
        %v5047 = vunpack.c.h.b16 %v5024
        %v5048 = vunpack.c.l.b16 %v5025
        %v5049 = vunpack.c.h.b16 %v5025
        %v5050 = vpack.c.b16 %v5036, %v5034
        %v5051 = vpack.c.b16 %v5037, %v5035
        %v5052 = vpack.c.b16 %v5040, %v5038
        %v5053 = vpack.c.b16 %v5041, %v5039
        %v5054 = vpack.c.b16 %v5044, %v5042
        %v5055 = vpack.c.b16 %v5045, %v5043
        %v5056 = vpack.c.b16 %v5048, %v5046
        %v5057 = vpack.c.b16 %v5049, %v5047
        %v5067 = vsel %vm1733, %v5017, 0
        %5069 = vmatprep.subr.bf16.mxu0 0
        %5070 = vmatpush1.bf16.msra.mxu0 0
        %5071 = vmatprep.subr.bf16.mxu0 0
        %5072 = vmatpush1.bf16.msra.mxu0 0
        %5073 = vmatprep.subr.bf16.mxu0 0
        %5074 = vmatpush1.bf16.msra.mxu0 0
        %5075 = vmatprep.subr.bf16.mxu0 0
        %5076 = vmatpush1.bf16.msra.mxu0 0
        %5077 = vmatprep.subr.bf16.mxu0 %v5057
        %5078 = vmatpush1.bf16.msra.mxu0 %v5056
        %5079 = vmatprep.subr.bf16.mxu0 %v5055
        %5080 = vmatpush1.bf16.msra.mxu0 %v5054
        %5081 = vmatprep.subr.bf16.mxu0 %v5053
        %5082 = vmatpush1.bf16.msra.mxu0 %v5052
        %5083 = vmatprep.subr.bf16.mxu0 %v5051
        %5084 = vmatpush1.bf16.msra.mxu0 %v5050
        %5085 = vmatprep.subr.bf16.mxu0 0
        %5086 = vmatpush2.bf16.msra.mxu0 0
        %5087 = vmatprep.subr.bf16.mxu0 0
        %5088 = vmatpush2.bf16.msra.mxu0 0
        %5089 = vmatprep.subr.bf16.mxu0 0
        %5090 = vmatpush2.bf16.msra.mxu0 0
        %5091 = vmatprep.subr.bf16.mxu0 0
        %5092 = vmatpush2.bf16.msra.mxu0 0
        %5093 = vmatprep.subr.bf16.mxu0 0
        %5094 = vmatpush2.bf16.msra.mxu0 0
        %5095 = vmatprep.subr.bf16.mxu0 0
        %5096 = vmatpush2.bf16.msra.mxu0 0
        %5097 = vmatprep.subr.bf16.mxu0 0
        %5098 = vmatpush2.bf16.msra.mxu0 0
        %5099 = vmatprep.subr.bf16.mxu0 0
        %5100 = vmatpush2.bf16.msra.mxu0 0
        %5101 = vmatprep.mubr.bf16.mxu0 0
        %5102 = vmatmul.mubr.bf16.gmra.mxu0 %v5067
        %v5103 = vpop.f32.mrf.mxu0
        %v5104 = vadd.f32 0.0, %v5103
        %v5105 = vpop.f32.mrf.mxu0
        %v5106 = vadd.f32 0.0, %v5105
        %v5107 = vpop.f32.mrf.mxu0
        %v5108 = vadd.f32 0.0, %v5107
        %v5109 = vpop.f32.mrf.mxu0
        %v5110 = vadd.f32 0.0, %v5109
        %5111 = vdwg.mxu0
        %s5112 = sadd.s32 %s301, 6
        %s5113 = smul.u32 %s5112, 4
        %s5114 = smul.addr %s5113, 4
        %s5115 = scalar_lea.vmem %s266, %s5114 [#allocation3]
        %v5116 = vld [vmem:[%s5115] sm:$0xff]
        %v5117 = vld [vmem:[%s5115 + $0x8] sm:$0xff]
        %v5118 = vmul.f32 %v5104, %v4249
        %v5119 = vmul.f32 %v5106, %v4253
        %v5120 = vmul.f32 %v5108, %v4249
        %v5121 = vmul.f32 %v5110, %v4253
        %v5122 = vadd.f32 %v5118, %v4264
        %v5123 = vadd.f32 %v5119, %v4268
        %v5124 = vadd.f32 %v5120, %v4264
        %v5125 = vadd.f32 %v5121, %v4268
        %v5126 = vunpack.c.l.bf16 %v5116
        %v5127 = vunpack.c.h.bf16 %v5116
        %v5128 = vunpack.c.l.bf16 %v5117
        %v5129 = vunpack.c.h.bf16 %v5117
        %v5130 = vadd.f32 %v5122, %v5126
        %v5131 = vadd.f32 %v5123, %v5127
        %v5132 = vadd.f32 %v5124, %v5128
        %v5133 = vadd.f32 %v5125, %v5129
        %v5134 = vmax.f32 %v5130, 0.0
        %v5135 = vmax.f32 %v5131, 0.0
        %v5136 = vmax.f32 %v5132, 0.0
        %v5137 = vmax.f32 %v5133, 0.0
        %v5138 = vpack.c.bf16 %v5136, %v5134
        %v5139 = vpack.c.bf16 %v5137, %v5135
        %v5142 = vunpack.c.l.b16 %v5138
        %v5143 = vunpack.c.l.b16 %v5139
        %v5144 = vunpack.c.h.b16 %v5138
        %v5145 = vunpack.c.h.b16 %v5139
        %v5146 = vpack.c.b16 %v5143, %v5142
        %v5147 = vpack.c.b16 %v5145, %v5144
        %s5150 = scalar_lea.vmem %s298, 96 [#allocation8]
        %5151 = vst [vmem:[%s5150] sm:$0xff] %v5146
        %5152 = vst [vmem:[%s5150 + $0x8] sm:$0xff] %v5147
        %v5153 = vmul.f32 %v4132, %v4137
        %v5154 = vmul.f32 %v4133, %v4137
        %v5155 = vadd.f32 %v5153, %v4143
        %v5156 = vadd.f32 %v5154, %v4143
        %v5157 = vmax.f32 %v5155, 0.0
        %v5158 = vmax.f32 %v5156, 0.0
        %v5159 = vpack.c.bf16 %v5158, %v5157
        %v5160 = vld [vmem:[%s3] sm:$0xff]
        %v5161 = vld [vmem:[%s3 + $0x8] sm:$0xff]
        %v5162 = vld [vmem:[%s3 + $0x10] sm:$0xff]
        %v5163 = vld [vmem:[%s3 + $0x18] sm:$0xff]
        %v5164 = vld [vmem:[%s3 + $0x20] sm:$0xff]
        %v5165 = vld [vmem:[%s3 + $0x28] sm:$0xff]
        %v5166 = vld [vmem:[%s3 + $0x30] sm:$0xff]
        %v5167 = vld [vmem:[%s3 + $0x38] sm:$0xff]
        %v5176 = vunpack.c.l.b16 %v5160
        %v5177 = vunpack.c.h.b16 %v5160
        %v5178 = vunpack.c.l.b16 %v5161
        %v5179 = vunpack.c.h.b16 %v5161
        %v5180 = vunpack.c.l.b16 %v5162
        %v5181 = vunpack.c.h.b16 %v5162
        %v5182 = vunpack.c.l.b16 %v5163
        %v5183 = vunpack.c.h.b16 %v5163
        %v5184 = vunpack.c.l.b16 %v5164
        %v5185 = vunpack.c.h.b16 %v5164
        %v5186 = vunpack.c.l.b16 %v5165
        %v5187 = vunpack.c.h.b16 %v5165
        %v5188 = vunpack.c.l.b16 %v5166
        %v5189 = vunpack.c.h.b16 %v5166
        %v5190 = vunpack.c.l.b16 %v5167
        %v5191 = vunpack.c.h.b16 %v5167
        %v5192 = vpack.c.b16 %v5178, %v5176
        %v5193 = vpack.c.b16 %v5179, %v5177
        %v5194 = vpack.c.b16 %v5182, %v5180
        %v5195 = vpack.c.b16 %v5183, %v5181
        %v5196 = vpack.c.b16 %v5186, %v5184
        %v5197 = vpack.c.b16 %v5187, %v5185
        %v5198 = vpack.c.b16 %v5190, %v5188
        %v5199 = vpack.c.b16 %v5191, %v5189
        %v5209 = vsel %vm1733, %v5159, 0
        %5211 = vmatprep.subr.bf16.mxu0 0
        %5212 = vmatpush1.bf16.msra.mxu0 0
        %5213 = vmatprep.subr.bf16.mxu0 0
        %5214 = vmatpush1.bf16.msra.mxu0 0
        %5215 = vmatprep.subr.bf16.mxu0 0
        %5216 = vmatpush1.bf16.msra.mxu0 0
        %5217 = vmatprep.subr.bf16.mxu0 0
        %5218 = vmatpush1.bf16.msra.mxu0 0
        %5219 = vmatprep.subr.bf16.mxu0 %v5199
        %5220 = vmatpush1.bf16.msra.mxu0 %v5198
        %5221 = vmatprep.subr.bf16.mxu0 %v5197
        %5222 = vmatpush1.bf16.msra.mxu0 %v5196
        %5223 = vmatprep.subr.bf16.mxu0 %v5195
        %5224 = vmatpush1.bf16.msra.mxu0 %v5194
        %5225 = vmatprep.subr.bf16.mxu0 %v5193
        %5226 = vmatpush1.bf16.msra.mxu0 %v5192
        %5227 = vmatprep.subr.bf16.mxu0 0
        %5228 = vmatpush2.bf16.msra.mxu0 0
        %5229 = vmatprep.subr.bf16.mxu0 0
        %5230 = vmatpush2.bf16.msra.mxu0 0
        %5231 = vmatprep.subr.bf16.mxu0 0
        %5232 = vmatpush2.bf16.msra.mxu0 0
        %5233 = vmatprep.subr.bf16.mxu0 0
        %5234 = vmatpush2.bf16.msra.mxu0 0
        %5235 = vmatprep.subr.bf16.mxu0 0
        %5236 = vmatpush2.bf16.msra.mxu0 0
        %5237 = vmatprep.subr.bf16.mxu0 0
        %5238 = vmatpush2.bf16.msra.mxu0 0
        %5239 = vmatprep.subr.bf16.mxu0 0
        %5240 = vmatpush2.bf16.msra.mxu0 0
        %5241 = vmatprep.subr.bf16.mxu0 0
        %5242 = vmatpush2.bf16.msra.mxu0 0
        %5243 = vmatprep.mubr.bf16.mxu0 0
        %5244 = vmatmul.mubr.bf16.gmra.mxu0 %v5209
        %v5245 = vpop.f32.mrf.mxu0
        %v5246 = vadd.f32 0.0, %v5245
        %v5247 = vpop.f32.mrf.mxu0
        %v5248 = vadd.f32 0.0, %v5247
        %v5249 = vpop.f32.mrf.mxu0
        %v5250 = vadd.f32 0.0, %v5249
        %v5251 = vpop.f32.mrf.mxu0
        %v5252 = vadd.f32 0.0, %v5251
        %5253 = vdwg.mxu0
        %s5254 = sadd.s32 %s301, 7
        %s5255 = smul.u32 %s5254, 4
        %s5256 = smul.addr %s5255, 4
        %s5257 = scalar_lea.vmem %s266, %s5256 [#allocation3]
        %v5258 = vld [vmem:[%s5257] sm:$0xff]
        %v5259 = vld [vmem:[%s5257 + $0x8] sm:$0xff]
        %v5260 = vmul.f32 %v5246, %v4249
        %v5261 = vmul.f32 %v5248, %v4253
        %v5262 = vmul.f32 %v5250, %v4249
        %v5263 = vmul.f32 %v5252, %v4253
        %v5264 = vadd.f32 %v5260, %v4264
        %v5265 = vadd.f32 %v5261, %v4268
        %v5266 = vadd.f32 %v5262, %v4264
        %v5267 = vadd.f32 %v5263, %v4268
        %v5268 = vunpack.c.l.bf16 %v5258
        %v5269 = vunpack.c.h.bf16 %v5258
        %v5270 = vunpack.c.l.bf16 %v5259
        %v5271 = vunpack.c.h.bf16 %v5259
        %v5272 = vadd.f32 %v5264, %v5268
        %v5273 = vadd.f32 %v5265, %v5269
        %v5274 = vadd.f32 %v5266, %v5270
        %v5275 = vadd.f32 %v5267, %v5271
        %v5276 = vmax.f32 %v5272, 0.0
        %v5277 = vmax.f32 %v5273, 0.0
        %v5278 = vmax.f32 %v5274, 0.0
        %v5279 = vmax.f32 %v5275, 0.0
        %v5280 = vpack.c.bf16 %v5278, %v5276
        %v5281 = vpack.c.bf16 %v5279, %v5277
        %v5284 = vunpack.c.l.b16 %v5280
        %v5285 = vunpack.c.l.b16 %v5281
        %v5286 = vunpack.c.h.b16 %v5280
        %v5287 = vunpack.c.h.b16 %v5281
        %v5288 = vpack.c.b16 %v5285, %v5284
        %v5289 = vpack.c.b16 %v5287, %v5286
        %s5292 = scalar_lea.vmem %s298, 112 [#allocation8]
        %5293 = vst [vmem:[%s5292] sm:$0xff] %v5288
        %5294 = vst [vmem:[%s5292 + $0x8] sm:$0xff] %v5289
        %s5295 = sand.u32 %s177, 1
        %s5296 = scalar_lea.sflag [#allocation5], %s5295
        %s5297 = sand.u32 %s177, 1
        %s5298 = smul.addr %s5297, 128
        %s5299 = scalar_lea.vmem [#allocation8], %s5298
        // Predicated region
        $region69: #{tpu_custom_call.1} parent=43 // pred_check
          %p5300 = pneg %p187
        $region70: #{tpu_custom_call.1} parent=43 // pred_check_branch
          %5302 = sbr.rel (%p5300) target = $region72
        $region71: #{tpu_custom_call.1} parent=43 // pred_region
          %s5303 = smul.u32 8, %s29
          %s5305 = ssub.s32 2048, 2048
          %5306 = vsyncadd %s5296, %s5305
          %s5307 = smul.addr %s5303, 4
          %s5308 = smul.addr %s28, 64
          %s5309 = sadd.s32 %s5307, %s5308
          %s5310 = smul.addr %s5309, 64
          %s5311 = scalar_lea.hbm %s6, %s5310
          %s5312 = sshll.u32 %s5299, 4
          %s5313 = int_to_ptr.vmem [resolvable:$true] %s5312
          %5318 = dma.vmem_to_hbm [thread:$0]  %s5313, 2048, %s5311, %s5296, 128, 128, 8
        $region72: #{tpu_custom_call.1} parent=43 // pred_fallthru
          _
      $region44: #{tpu_custom_call.1} parent=5 // pred_fallthru
        _
      %p5319 = scmp.le.s32.totalorder 2, %s19
      // Predicated region
      $region73: #{tpu_custom_call.1} parent=5 // pred_check
        %p5320 = pneg %p5319
      $region74: #{tpu_custom_call.1} parent=5 // pred_check_branch
        %5322 = sbr.rel (%p5320) target = $region76
      $region75: #{tpu_custom_call.1} parent=5 // pred_region
        %s5323 = ssub.s32 %s19, 2
        // Predicated region
        $region77: #{tpu_custom_call.1} parent=75 // pred_check
          %p5324 = pneg %p193
        $region78: #{tpu_custom_call.1} parent=75 // pred_check_branch
          %5326 = sbr.rel (%p5324) target = $region80
        $region79: #{tpu_custom_call.1} parent=75 // pred_region
          %s5327 = sand.u32 %s178, 1
          %s5328 = scalar_lea.sflag [#allocation5], %s5327
          %s5329 = sand.u32 %s178, 1
          %s5330 = smul.addr %s5329, 128
          %s5331 = scalar_lea.vmem [#allocation8], %s5330
          %5332 = dma.done %s5328, 2048
        $region80: #{tpu_custom_call.1} parent=75 // pred_fallthru
          _
      $region76: #{tpu_custom_call.1} parent=5 // pred_fallthru
        _
    $region6: #{tpu_custom_call.1} parent=1 // loop_footer
      %s23 = sadd.s32 1, %s19
    $region7: #{tpu_custom_call.1} parent=1 // loop_footer_branch
      %18 = sbr.rel target = $region3
    $region8: #{tpu_custom_call.1} parent=1 // loop_exit
      _
    %5333 = vsyncpa [#allocation4], 1
    %s5334 = scalar_lea.sflag [#allocation4], 1
    %5335 = vsyncpa %s5334, 1
    %5336 = vsyncpa [#allocation7], 1
    %5337 = vsyncpa [#allocation5], 1
    %s5338 = scalar_lea.sflag [#allocation5], 1
    %5339 = vsyncpa %s5338, 1

</llo_original>
